<compile_context>
chip_gen: v7x
topology: tpu7x:2x2x1
jax: 0.10.0
libtpu: 0.0.40
codegen_flags: <defaults>
</compile_context>

<pallas_src>
import functools

import jax
import jax.numpy as jnp
from jax.experimental import pallas as pl
from jax.experimental.pallas import tpu as pltpu


# ---------------------------------------------------------------------------
# Fused Pallas kernel: both MV2 blocks in a single pallas_call
# ---------------------------------------------------------------------------

def _mv2_block_body(x, w1, b1, wd, b2, w3, b3, *, width, k):
    """One MV2 block on a flattened (rows = H*W, C) slab kept on-chip.

    pw-expand (MXU, bf16 in / f32 acc) + bias + SiLU
    depthwise kxk (stride 1, pad 0) via XLU rolls on the flattened layout:
        out[m] = sum_{ki,kj} x[m + ki*width + kj] * wd[ki*k + kj]
    pw-project (MXU) + bias (linear)

    Rows whose spatial position is within (k-1) of the right/bottom image edge
    hold garbage after the depthwise step; the wrapper crops them at the end.
    """
    rows = x.shape[0]

    # pointwise expansion (BN scale pre-folded into w1)
    h = jnp.dot(x.astype(jnp.bfloat16), w1,
                preferred_element_type=jnp.float32) + b1
    h = h * jax.lax.logistic(h)                       # SiLU (EUP slot)

    # depthwise kxk on the flattened layout via XLU rolls (no overlapping
    # 4-D slices, no re-reads of the activation)
    acc = None
    for ki in range(k):
        for kj in range(k):
            s = ki * width + kj                       # row shift for this tap
            t = ki * k + kj                           # tap index into wd
            src = h if s == 0 else pltpu.roll(h, rows - s, axis=0)
            term = src * wd[t:t + 1, :]
            acc = term if acc is None else acc + term
    acc = acc + b2
    acc = acc * jax.lax.logistic(acc)                 # SiLU

    # pointwise projection (BN scale pre-folded into w3, no activation)
    return jnp.dot(acc.astype(jnp.bfloat16), w3,
                   preferred_element_type=jnp.float32) + b3


def _fused_kernel(x_ref,
                  w1a_ref, b1a_ref, wda_ref, b2a_ref, w3a_ref, b3a_ref,
                  w1b_ref, b1b_ref, wdb_ref, b2b_ref, w3b_ref, b3b_ref,
                  o_ref, *, width, k):
    y = _mv2_block_body(x_ref[...],
                        w1a_ref[...], b1a_ref[...], wda_ref[...],
                        b2a_ref[...], w3a_ref[...], b3a_ref[...],
                        width=width, k=k)
    y = _mv2_block_body(y,
                        w1b_ref[...], b1b_ref[...], wdb_ref[...],
                        b2b_ref[...], w3b_ref[...], b3b_ref[...],
                        width=width, k=k)
    o_ref[...] = y.astype(o_ref.dtype)


def fused_two_mv2_blocks(x_flat, p1, p2, *, batch, width, k):
    """x_flat: (batch*H*W, Cin) flattened NHWC input. Returns (batch*H*W, Cout)
    with the same row layout (garbage in the cropped border rows)."""
    m, cin = x_flat.shape
    rows = m // batch
    cout = p2["w3"].shape[1]

    resident = lambda i: (0, 0)                       # weights stay in VMEM
    in_specs = [pl.BlockSpec((rows, cin), lambda i: (i, 0))]
    args = [x_flat]
    for p in (p1, p2):
        for name in ("w1", "b1", "wd", "b2", "w3", "b3"):
            a = p[name]
            in_specs.append(pl.BlockSpec(a.shape, resident))
            args.append(a)

    kern = functools.partial(_fused_kernel, width=width, k=k)
    return pl.pallas_call(
        kern,
        out_shape=jax.ShapeDtypeStruct((m, cout), jnp.float32),
        grid=(batch,),
        in_specs=in_specs,
        out_specs=pl.BlockSpec((rows, cout), lambda i: (i, 0)),
        compiler_params=pltpu.CompilerParams(
            dimension_semantics=("parallel",)),       # 2 TCs on v7x
    )(*args)


def multi_stream_vit(x_nchw, params1, params2, kernel_size=2):
    """Forward pass of multi_stream_ViT: two stacked MV2 blocks."""
    n, cin, h, w = x_nchw.shape
    cout = params2["w3"].shape[1]
    x = jnp.transpose(x_nchw, (0, 2, 3, 1)).reshape(n * h * w, cin)  # NHWC flat
    y = fused_two_mv2_blocks(x, params1, params2,
                             batch=n, width=w, k=kernel_size)
    y = y.reshape(n, h, w, cout)
    ho = h - 2 * (kernel_size - 1)
    wo = w - 2 * (kernel_size - 1)
    y = y[:, :ho, :wo, :]                              # crop garbage border
    return jnp.transpose(y, (0, 3, 1, 2))              # NHWC -> NCHW


# ---------------------------------------------------------------------------
# Deterministic parameter construction (BN folded at init time)
# ---------------------------------------------------------------------------

def _fold_bn(kg, kb, km, kv, c):
    gamma = 1.0 + 0.1 * jax.random.normal(kg, (c,), jnp.float32)
    beta = 0.1 * jax.random.normal(kb, (c,), jnp.float32)
    mean = 0.1 * jax.random.normal(km, (c,), jnp.float32)
    var = jnp.abs(jax.random.normal(kv, (c,), jnp.float32)) + 0.5
    scale = gamma / jnp.sqrt(var + 1e-5)
    bias = beta - mean * scale
    return scale, bias


def init_mv2_params(key, in_ch, out_ch, expansion, kernel_size):
    hidden = in_ch * expansion
    ks = jax.random.split(key, 15)
    w1 = 0.2 * jax.random.normal(ks[0], (in_ch, hidden), jnp.float32)
    s1, b1 = _fold_bn(ks[1], ks[2], ks[3], ks[4], hidden)
    wd = 0.2 * jax.random.normal(ks[5], (kernel_size, kernel_size, hidden),
                                 jnp.float32)
    s2, b2 = _fold_bn(ks[6], ks[7], ks[8], ks[9], hidden)
    w3 = 0.2 * jax.random.normal(ks[10], (hidden, out_ch), jnp.float32)
    s3, b3 = _fold_bn(ks[11], ks[12], ks[13], ks[14], out_ch)
    # Fold eval-mode BN scale into the conv weights; keep only biases.
    return dict(
        w1=(w1 * s1[None, :]).astype(jnp.bfloat16),
        b1=b1.reshape(1, hidden),
        wd=(wd * s2[None, None, :]).reshape(kernel_size * kernel_size, hidden),
        b2=b2.reshape(1, hidden),
        w3=(w3 * s3[None, :]).astype(jnp.bfloat16),
        b3=b3.reshape(1, out_ch),
    )


# ---------------------------------------------------------------------------
# Pure-JAX reference (same folded parameters) for a sanity check
# ---------------------------------------------------------------------------

def _mv2_block_ref(x_nhwc, p, k):
    w1 = p["w1"].astype(jnp.float32)
    w3 = p["w3"].astype(jnp.float32)
    hid = w1.shape[1]
    y = jnp.einsum("nhwc,cd->nhwd", x_nhwc, w1) + p["b1"].reshape(-1)
    y = y * jax.nn.sigmoid(y)
    wd = p["wd"].reshape(k, k, hid)
    n, h, w, _ = y.shape
    ho, wo = h - k + 1, w - k + 1
    acc = jnp.zeros((n, ho, wo, hid), jnp.float32)
    for ki in range(k):
        for kj in range(k):
            acc = acc + y[:, ki:ki + ho, kj:kj + wo, :] * wd[ki, kj]
    acc = acc + p["b2"].reshape(-1)
    acc = acc * jax.nn.sigmoid(acc)
    return jnp.einsum("nhwc,cd->nhwd", acc, w3) + p["b3"].reshape(-1)


def multi_stream_vit_ref(x_nchw, p1, p2, k=2):
    x = jnp.transpose(x_nchw, (0, 2, 3, 1))
    x = _mv2_block_ref(x, p1, k)
    x = _mv2_block_ref(x, p2, k)
    return jnp.transpose(x, (0, 3, 1, 2))


# ---------------------------------------------------------------------------

if __name__ == "__main__":
    key = jax.random.PRNGKey(0)
    k_in, k_p1, k_p2 = jax.random.split(key, 3)

    # Shapes consistent with the module defaults:
    #   in_ch=4, out_ch=8, kernel_size=2, stride=1, padding=0, expansion=8
    batch, in_ch, out_ch, hw = 2, 4, 8, 16
    expansion, kernel_size = 8, 2

    x = jax.random.normal(k_in, (batch, in_ch, hw, hw), jnp.float32)  # NCHW
    p1 = init_mv2_params(k_p1, in_ch, out_ch, expansion, kernel_size)
    p2 = init_mv2_params(k_p2, out_ch, out_ch, expansion, kernel_size)

    fwd = jax.jit(functools.partial(multi_stream_vit, kernel_size=kernel_size))
    out = jax.block_until_ready(fwd(x, p1, p2))

    # Each block shrinks H,W by (kernel_size - 1): 16 -> 15 -> 14
    hw_out = hw - 2 * (kernel_size - 1)
    assert out.shape == (batch, out_ch, hw_out, hw_out), out.shape
    assert bool(jnp.all(jnp.isfinite(out)))

    # Sanity check against a pure-JAX reference (bf16 MXU inputs -> loose tol)
    ref = multi_stream_vit_ref(x, p1, p2, kernel_size)
    assert bool(jnp.allclose(out, ref, rtol=5e-2, atol=5e-2)), float(
        jnp.max(jnp.abs(out - ref)))

    print("KERNEL_OK")
</pallas_src>

<mosaic_0001>
module attributes {stable_mosaic.version = 11 : i64} {
  func.func @_fused_kernel(%arg0: i32, %arg1: memref<256x4xf32, #tpu.memory_space<vmem>>, %arg2: memref<4x32xbf16, #tpu.memory_space<vmem>>, %arg3: memref<1x32xf32, #tpu.memory_space<vmem>>, %arg4: memref<4x32xf32, #tpu.memory_space<vmem>>, %arg5: memref<1x32xf32, #tpu.memory_space<vmem>>, %arg6: memref<32x8xbf16, #tpu.memory_space<vmem>>, %arg7: memref<1x8xf32, #tpu.memory_space<vmem>>, %arg8: memref<8x64xbf16, #tpu.memory_space<vmem>>, %arg9: memref<1x64xf32, #tpu.memory_space<vmem>>, %arg10: memref<4x64xf32, #tpu.memory_space<vmem>>, %arg11: memref<1x64xf32, #tpu.memory_space<vmem>>, %arg12: memref<64x8xbf16, #tpu.memory_space<vmem>>, %arg13: memref<1x8xf32, #tpu.memory_space<vmem>>, %arg14: memref<256x8xf32, #tpu.memory_space<vmem>>) attributes {dimension_semantics = [#tpu.dimension_semantics<parallel>], iteration_bounds = array<i64: 2>, scalar_prefetch = 0 : i64, scratch_operands = 0 : i64, tpu.core_type = #tpu.core_type<tc>, window_params = [{transform_indices = @transform_0, window_bounds = array<i64: 256, 4>}, {pipeline_mode = #tpu.pipeline_mode<synchronous>, transform_indices = @transform_1, window_bounds = array<i64: 4, 32>}, {pipeline_mode = #tpu.pipeline_mode<synchronous>, transform_indices = @transform_2, window_bounds = array<i64: 1, 32>}, {pipeline_mode = #tpu.pipeline_mode<synchronous>, transform_indices = @transform_3, window_bounds = array<i64: 4, 32>}, {pipeline_mode = #tpu.pipeline_mode<synchronous>, transform_indices = @transform_4, window_bounds = array<i64: 1, 32>}, {pipeline_mode = #tpu.pipeline_mode<synchronous>, transform_indices = @transform_5, window_bounds = array<i64: 32, 8>}, {pipeline_mode = #tpu.pipeline_mode<synchronous>, transform_indices = @transform_6, window_bounds = array<i64: 1, 8>}, {pipeline_mode = #tpu.pipeline_mode<synchronous>, transform_indices = @transform_7, window_bounds = array<i64: 8, 64>}, {pipeline_mode = #tpu.pipeline_mode<synchronous>, transform_indices = @transform_8, window_bounds = array<i64: 1, 64>}, {pipeline_mode = #tpu.pipeline_mode<synchronous>, transform_indices = @transform_9, window_bounds = array<i64: 4, 64>}, {pipeline_mode = #tpu.pipeline_mode<synchronous>, transform_indices = @transform_10, window_bounds = array<i64: 1, 64>}, {pipeline_mode = #tpu.pipeline_mode<synchronous>, transform_indices = @transform_11, window_bounds = array<i64: 64, 8>}, {pipeline_mode = #tpu.pipeline_mode<synchronous>, transform_indices = @transform_12, window_bounds = array<i64: 1, 8>}, {transform_indices = @transform_13, window_bounds = array<i64: 256, 8>}]} {
    %c0 = arith.constant 0 : index
    %c0_0 = arith.constant 0 : index
    %0 = vector.load %arg1[%c0, %c0_0] : memref<256x4xf32, #tpu.memory_space<vmem>>, vector<256x4xf32>
    %c0_1 = arith.constant 0 : index
    %c0_2 = arith.constant 0 : index
    %1 = vector.load %arg2[%c0_1, %c0_2] : memref<4x32xbf16, #tpu.memory_space<vmem>>, vector<4x32xbf16>
    %c0_3 = arith.constant 0 : index
    %c0_4 = arith.constant 0 : index
    %2 = vector.load %arg3[%c0_3, %c0_4] : memref<1x32xf32, #tpu.memory_space<vmem>>, vector<1x32xf32>
    %c0_5 = arith.constant 0 : index
    %c0_6 = arith.constant 0 : index
    %3 = vector.load %arg4[%c0_5, %c0_6] : memref<4x32xf32, #tpu.memory_space<vmem>>, vector<4x32xf32>
    %c0_7 = arith.constant 0 : index
    %c0_8 = arith.constant 0 : index
    %4 = vector.load %arg5[%c0_7, %c0_8] : memref<1x32xf32, #tpu.memory_space<vmem>>, vector<1x32xf32>
    %c0_9 = arith.constant 0 : index
    %c0_10 = arith.constant 0 : index
    %5 = vector.load %arg6[%c0_9, %c0_10] : memref<32x8xbf16, #tpu.memory_space<vmem>>, vector<32x8xbf16>
    %c0_11 = arith.constant 0 : index
    %c0_12 = arith.constant 0 : index
    %6 = vector.load %arg7[%c0_11, %c0_12] : memref<1x8xf32, #tpu.memory_space<vmem>>, vector<1x8xf32>
    %7 = arith.truncf %0 : vector<256x4xf32> to vector<256x4xbf16>
    %cst = arith.constant dense<0.000000e+00> : vector<256x32xf32>
    %8 = tpu.matmul %7, %1, %cst {dimension_numbers = #tpu.dot_dimension_numbers<[1], [0], [0], [1], [0, 0, 1, 1], [], []>} : vector<256x4xbf16>, vector<4x32xbf16>, vector<256x32xf32> -> vector<256x32xf32>
    %9 = vector.broadcast %2 : vector<1x32xf32> to vector<256x32xf32>
    %10 = arith.addf %8, %9 : vector<256x32xf32>
    %11 = arith.negf %10 : vector<256x32xf32>
    %12 = math.exp %11 : vector<256x32xf32>
    %cst_13 = arith.constant 1.000000e+00 : f32
    %13 = vector.broadcast %cst_13 : f32 to vector<256x32xf32>
    %14 = arith.addf %13, %12 : vector<256x32xf32>
    %15 = arith.divf %13, %14 : vector<256x32xf32>
    %16 = arith.mulf %10, %15 : vector<256x32xf32>
    %17 = vector.extract_strided_slice %3 {offsets = [0, 0], sizes = [1, 32], strides = [1, 1]} : vector<4x32xf32> to vector<1x32xf32>
    %18 = vector.broadcast %17 : vector<1x32xf32> to vector<256x32xf32>
    %19 = arith.mulf %16, %18 : vector<256x32xf32>
    %c255_i32 = arith.constant 255 : i32
    %20 = tpu.dynamic_rotate %16 by %c255_i32 dim 0 : vector<256x32xf32>, i32 -> vector<256x32xf32>
    %21 = vector.extract_strided_slice %3 {offsets = [1, 0], sizes = [1, 32], strides = [1, 1]} : vector<4x32xf32> to vector<1x32xf32>
    %22 = vector.broadcast %21 : vector<1x32xf32> to vector<256x32xf32>
    %23 = arith.mulf %20, %22 : vector<256x32xf32>
    %24 = arith.addf %19, %23 : vector<256x32xf32>
    %c240_i32 = arith.constant 240 : i32
    %25 = tpu.dynamic_rotate %16 by %c240_i32 dim 0 : vector<256x32xf32>, i32 -> vector<256x32xf32>
    %26 = vector.extract_strided_slice %3 {offsets = [2, 0], sizes = [1, 32], strides = [1, 1]} : vector<4x32xf32> to vector<1x32xf32>
    %27 = vector.broadcast %26 : vector<1x32xf32> to vector<256x32xf32>
    %28 = arith.mulf %25, %27 : vector<256x32xf32>
    %29 = arith.addf %24, %28 : vector<256x32xf32>
    %c239_i32 = arith.constant 239 : i32
    %30 = tpu.dynamic_rotate %16 by %c239_i32 dim 0 : vector<256x32xf32>, i32 -> vector<256x32xf32>
    %31 = vector.extract_strided_slice %3 {offsets = [3, 0], sizes = [1, 32], strides = [1, 1]} : vector<4x32xf32> to vector<1x32xf32>
    %32 = vector.broadcast %31 : vector<1x32xf32> to vector<256x32xf32>
    %33 = arith.mulf %30, %32 : vector<256x32xf32>
    %34 = arith.addf %29, %33 : vector<256x32xf32>
    %35 = vector.broadcast %4 : vector<1x32xf32> to vector<256x32xf32>
    %36 = arith.addf %34, %35 : vector<256x32xf32>
    %37 = arith.negf %36 : vector<256x32xf32>
    %38 = math.exp %37 : vector<256x32xf32>
    %cst_14 = arith.constant 1.000000e+00 : f32
    %39 = vector.broadcast %cst_14 : f32 to vector<256x32xf32>
    %40 = arith.addf %39, %38 : vector<256x32xf32>
    %41 = arith.divf %39, %40 : vector<256x32xf32>
    %42 = arith.mulf %36, %41 : vector<256x32xf32>
    %43 = arith.truncf %42 : vector<256x32xf32> to vector<256x32xbf16>
    %cst_15 = arith.constant dense<0.000000e+00> : vector<256x8xf32>
    %44 = tpu.matmul %43, %5, %cst_15 {dimension_numbers = #tpu.dot_dimension_numbers<[1], [0], [0], [1], [0, 0, 1, 1], [], []>} : vector<256x32xbf16>, vector<32x8xbf16>, vector<256x8xf32> -> vector<256x8xf32>
    %45 = vector.broadcast %6 : vector<1x8xf32> to vector<256x8xf32>
    %46 = arith.addf %44, %45 : vector<256x8xf32>
    %c0_16 = arith.constant 0 : index
    %c0_17 = arith.constant 0 : index
    %47 = vector.load %arg8[%c0_16, %c0_17] : memref<8x64xbf16, #tpu.memory_space<vmem>>, vector<8x64xbf16>
    %c0_18 = arith.constant 0 : index
    %c0_19 = arith.constant 0 : index
    %48 = vector.load %arg9[%c0_18, %c0_19] : memref<1x64xf32, #tpu.memory_space<vmem>>, vector<1x64xf32>
    %c0_20 = arith.constant 0 : index
    %c0_21 = arith.constant 0 : index
    %49 = vector.load %arg10[%c0_20, %c0_21] : memref<4x64xf32, #tpu.memory_space<vmem>>, vector<4x64xf32>
    %c0_22 = arith.constant 0 : index
    %c0_23 = arith.constant 0 : index
    %50 = vector.load %arg11[%c0_22, %c0_23] : memref<1x64xf32, #tpu.memory_space<vmem>>, vector<1x64xf32>
    %c0_24 = arith.constant 0 : index
    %c0_25 = arith.constant 0 : index
    %51 = vector.load %arg12[%c0_24, %c0_25] : memref<64x8xbf16, #tpu.memory_space<vmem>>, vector<64x8xbf16>
    %c0_26 = arith.constant 0 : index
    %c0_27 = arith.constant 0 : index
    %52 = vector.load %arg13[%c0_26, %c0_27] : memref<1x8xf32, #tpu.memory_space<vmem>>, vector<1x8xf32>
    %53 = arith.truncf %46 : vector<256x8xf32> to vector<256x8xbf16>
    %cst_28 = arith.constant dense<0.000000e+00> : vector<256x64xf32>
    %54 = tpu.matmul %53, %47, %cst_28 {dimension_numbers = #tpu.dot_dimension_numbers<[1], [0], [0], [1], [0, 0, 1, 1], [], []>} : vector<256x8xbf16>, vector<8x64xbf16>, vector<256x64xf32> -> vector<256x64xf32>
    %55 = vector.broadcast %48 : vector<1x64xf32> to vector<256x64xf32>
    %56 = arith.addf %54, %55 : vector<256x64xf32>
    %57 = arith.negf %56 : vector<256x64xf32>
    %58 = math.exp %57 : vector<256x64xf32>
    %cst_29 = arith.constant 1.000000e+00 : f32
    %59 = vector.broadcast %cst_29 : f32 to vector<256x64xf32>
    %60 = arith.addf %59, %58 : vector<256x64xf32>
    %61 = arith.divf %59, %60 : vector<256x64xf32>
    %62 = arith.mulf %56, %61 : vector<256x64xf32>
    %63 = vector.extract_strided_slice %49 {offsets = [0, 0], sizes = [1, 64], strides = [1, 1]} : vector<4x64xf32> to vector<1x64xf32>
    %64 = vector.broadcast %63 : vector<1x64xf32> to vector<256x64xf32>
    %65 = arith.mulf %62, %64 : vector<256x64xf32>
    %c255_i32_30 = arith.constant 255 : i32
    %66 = tpu.dynamic_rotate %62 by %c255_i32_30 dim 0 : vector<256x64xf32>, i32 -> vector<256x64xf32>
    %67 = vector.extract_strided_slice %49 {offsets = [1, 0], sizes = [1, 64], strides = [1, 1]} : vector<4x64xf32> to vector<1x64xf32>
    %68 = vector.broadcast %67 : vector<1x64xf32> to vector<256x64xf32>
    %69 = arith.mulf %66, %68 : vector<256x64xf32>
    %70 = arith.addf %65, %69 : vector<256x64xf32>
    %c240_i32_31 = arith.constant 240 : i32
    %71 = tpu.dynamic_rotate %62 by %c240_i32_31 dim 0 : vector<256x64xf32>, i32 -> vector<256x64xf32>
    %72 = vector.extract_strided_slice %49 {offsets = [2, 0], sizes = [1, 64], strides = [1, 1]} : vector<4x64xf32> to vector<1x64xf32>
    %73 = vector.broadcast %72 : vector<1x64xf32> to vector<256x64xf32>
    %74 = arith.mulf %71, %73 : vector<256x64xf32>
    %75 = arith.addf %70, %74 : vector<256x64xf32>
    %c239_i32_32 = arith.constant 239 : i32
    %76 = tpu.dynamic_rotate %62 by %c239_i32_32 dim 0 : vector<256x64xf32>, i32 -> vector<256x64xf32>
    %77 = vector.extract_strided_slice %49 {offsets = [3, 0], sizes = [1, 64], strides = [1, 1]} : vector<4x64xf32> to vector<1x64xf32>
    %78 = vector.broadcast %77 : vector<1x64xf32> to vector<256x64xf32>
    %79 = arith.mulf %76, %78 : vector<256x64xf32>
    %80 = arith.addf %75, %79 : vector<256x64xf32>
    %81 = vector.broadcast %50 : vector<1x64xf32> to vector<256x64xf32>
    %82 = arith.addf %80, %81 : vector<256x64xf32>
    %83 = arith.negf %82 : vector<256x64xf32>
    %84 = math.exp %83 : vector<256x64xf32>
    %cst_33 = arith.constant 1.000000e+00 : f32
    %85 = vector.broadcast %cst_33 : f32 to vector<256x64xf32>
    %86 = arith.addf %85, %84 : vector<256x64xf32>
    %87 = arith.divf %85, %86 : vector<256x64xf32>
    %88 = arith.mulf %82, %87 : vector<256x64xf32>
    %89 = arith.truncf %88 : vector<256x64xf32> to vector<256x64xbf16>
    %cst_34 = arith.constant dense<0.000000e+00> : vector<256x8xf32>
    %90 = tpu.matmul %89, %51, %cst_34 {dimension_numbers = #tpu.dot_dimension_numbers<[1], [0], [0], [1], [0, 0, 1, 1], [], []>} : vector<256x64xbf16>, vector<64x8xbf16>, vector<256x8xf32> -> vector<256x8xf32>
    %91 = vector.broadcast %52 : vector<1x8xf32> to vector<256x8xf32>
    %92 = arith.addf %90, %91 : vector<256x8xf32>
    %c0_35 = arith.constant 0 : index
    %c0_36 = arith.constant 0 : index
    %93 = vector.load %arg14[%c0_35, %c0_36] : memref<256x8xf32, #tpu.memory_space<vmem>>, vector<256x8xf32>
    tpu.vector_store %arg14[%c0_35, %c0_36], %92 {strides = array<i32>} : memref<256x8xf32, #tpu.memory_space<vmem>>, vector<256x8xf32>,
    return
  }
  func.func @transform_0(%arg0: i32) -> (i32, i32) {
    %c0_i32 = arith.constant 0 : i32
    %c0_i32_0 = arith.constant 0 : i32
    return %arg0, %c0_i32 : i32, i32
  }
  func.func @transform_1(%arg0: i32) -> (i32, i32) {
    %c0_i32 = arith.constant 0 : i32
    %c0_i32_0 = arith.constant 0 : i32
    %c0_i32_1 = arith.constant 0 : i32
    return %c0_i32, %c0_i32_0 : i32, i32
  }
  func.func @transform_2(%arg0: i32) -> (i32, i32) {
    %c0_i32 = arith.constant 0 : i32
    %c0_i32_0 = arith.constant 0 : i32
    %c0_i32_1 = arith.constant 0 : i32
    return %c0_i32, %c0_i32_0 : i32, i32
  }
  func.func @transform_3(%arg0: i32) -> (i32, i32) {
    %c0_i32 = arith.constant 0 : i32
    %c0_i32_0 = arith.constant 0 : i32
    %c0_i32_1 = arith.constant 0 : i32
    return %c0_i32, %c0_i32_0 : i32, i32
  }
  func.func @transform_4(%arg0: i32) -> (i32, i32) {
    %c0_i32 = arith.constant 0 : i32
    %c0_i32_0 = arith.constant 0 : i32
    %c0_i32_1 = arith.constant 0 : i32
    return %c0_i32, %c0_i32_0 : i32, i32
  }
  func.func @transform_5(%arg0: i32) -> (i32, i32) {
    %c0_i32 = arith.constant 0 : i32
    %c0_i32_0 = arith.constant 0 : i32
    %c0_i32_1 = arith.constant 0 : i32
    return %c0_i32, %c0_i32_0 : i32, i32
  }
  func.func @transform_6(%arg0: i32) -> (i32, i32) {
    %c0_i32 = arith.constant 0 : i32
    %c0_i32_0 = arith.constant 0 : i32
    %c0_i32_1 = arith.constant 0 : i32
    return %c0_i32, %c0_i32_0 : i32, i32
  }
  func.func @transform_7(%arg0: i32) -> (i32, i32) {
    %c0_i32 = arith.constant 0 : i32
    %c0_i32_0 = arith.constant 0 : i32
    %c0_i32_1 = arith.constant 0 : i32
    return %c0_i32, %c0_i32_0 : i32, i32
  }
  func.func @transform_8(%arg0: i32) -> (i32, i32) {
    %c0_i32 = arith.constant 0 : i32
    %c0_i32_0 = arith.constant 0 : i32
    %c0_i32_1 = arith.constant 0 : i32
    return %c0_i32, %c0_i32_0 : i32, i32
  }
  func.func @transform_9(%arg0: i32) -> (i32, i32) {
    %c0_i32 = arith.constant 0 : i32
    %c0_i32_0 = arith.constant 0 : i32
    %c0_i32_1 = arith.constant 0 : i32
    return %c0_i32, %c0_i32_0 : i32, i32
  }
  func.func @transform_10(%arg0: i32) -> (i32, i32) {
    %c0_i32 = arith.constant 0 : i32
    %c0_i32_0 = arith.constant 0 : i32
    %c0_i32_1 = arith.constant 0 : i32
    return %c0_i32, %c0_i32_0 : i32, i32
  }
  func.func @transform_11(%arg0: i32) -> (i32, i32) {
    %c0_i32 = arith.constant 0 : i32
    %c0_i32_0 = arith.constant 0 : i32
    %c0_i32_1 = arith.constant 0 : i32
    return %c0_i32, %c0_i32_0 : i32, i32
  }
  func.func @transform_12(%arg0: i32) -> (i32, i32) {
    %c0_i32 = arith.constant 0 : i32
    %c0_i32_0 = arith.constant 0 : i32
    %c0_i32_1 = arith.constant 0 : i32
    return %c0_i32, %c0_i32_0 : i32, i32
  }
  func.func @transform_13(%arg0: i32) -> (i32, i32) {
    %c0_i32 = arith.constant 0 : i32
    %c0_i32_0 = arith.constant 0 : i32
    return %arg0, %c0_i32 : i32, i32
  }
}

</mosaic_0001>

<llo_original>
// kernel: multi_stream_vit.1
$region0: #{multi_stream_vit.1}
  #allocation0 [shape = 'u32[]', space=smem, size = 0x4, offset = 0x4, fixed_abs, tag = 'smem constant byte address 0x4 - core index']
  #allocation1 [shape = 'u32[144,128]{1,0:T(1,128)}', space=vmem, size = 0x12000, scoped, tag = 'internal scratch']
  %s0 = inlined_call_operand.vmem [shape: f32[512,4], index: 0, kind: input, shape index: {}]
  %s1 = inlined_call_operand.vmem [shape: bf16[4,32], index: 1, kind: input, shape index: {}]
  %s2 = inlined_call_operand.vmem [shape: f32[1,32], index: 2, kind: input, shape index: {}]
  %s3 = inlined_call_operand.vmem [shape: f32[4,32], index: 3, kind: input, shape index: {}]
  %s4 = inlined_call_operand.vmem [shape: f32[1,32], index: 4, kind: input, shape index: {}]
  %s5 = inlined_call_operand.vmem [shape: bf16[32,8], index: 5, kind: input, shape index: {}]
  %s6 = inlined_call_operand.vmem [shape: f32[1,8], index: 6, kind: input, shape index: {}]
  %s7 = inlined_call_operand.vmem [shape: bf16[8,64], index: 7, kind: input, shape index: {}]
  %s8 = inlined_call_operand.vmem [shape: f32[1,64], index: 8, kind: input, shape index: {}]
  %s9 = inlined_call_operand.vmem [shape: f32[4,64], index: 9, kind: input, shape index: {}]
  %s10 = inlined_call_operand.vmem [shape: f32[1,64], index: 10, kind: input, shape index: {}]
  %s11 = inlined_call_operand.vmem [shape: bf16[64,8], index: 11, kind: input, shape index: {}]
  %s12 = inlined_call_operand.vmem [shape: f32[1,8], index: 12, kind: input, shape index: {}]
  %s13 = inlined_call_operand.vmem [shape: f32[512,8], index: 13, kind: output, shape index: {}]
  %s14 = sld [smem:[#allocation0]]
  $region85: #{multi_stream_vit.1} parent=0
    _
  %s16 = ssub.s32 1, %s14
  %s17 = scalar_select 0, %s16, %s14
  loop: start=0, step=1, limit=4
  $region2: #{multi_stream_vit.1} parent=0 // loop_pre_header
    _
  $region3: #{multi_stream_vit.1} parent=0 // loop_header
    %s19 = sphi 0, %s23
    %p20 = scmp.ge.s32.totalorder %s19, 4
    %s29 = sphi 0, %s31
    %s32 = sphi 0, %s29
    %s33 = sphi 0, %s32
    %s49 = sphi 0, %s33
    %s53 = sphi 0, %s53
    %s55 = sphi 0, %s53
    %s56 = sphi 0, %s55
    %s70 = sphi 0, %s56
    %s74 = sphi 0, %s74
    %s76 = sphi 0, %s74
    %s77 = sphi 0, %s76
    %s91 = sphi 0, %s77
    %s95 = sphi 0, %s95
    %s97 = sphi 0, %s95
    %s98 = sphi 0, %s97
    %s112 = sphi 0, %s98
    %s116 = sphi 0, %s116
    %s118 = sphi 0, %s116
    %s119 = sphi 0, %s118
    %s133 = sphi 0, %s119
    %s137 = sphi 0, %s137
    %s139 = sphi 0, %s137
    %s140 = sphi 0, %s139
    %s154 = sphi 0, %s140
    %s158 = sphi 0, %s158
    %s160 = sphi 0, %s158
    %s161 = sphi 0, %s160
    %s175 = sphi 0, %s161
    %s179 = sphi 0, %s179
    %s181 = sphi 0, %s179
    %s182 = sphi 0, %s181
    %s196 = sphi 0, %s182
    %s200 = sphi 0, %s200
    %s202 = sphi 0, %s200
    %s203 = sphi 0, %s202
    %s217 = sphi 0, %s203
    %s221 = sphi 0, %s221
    %s223 = sphi 0, %s221
    %s224 = sphi 0, %s223
    %s238 = sphi 0, %s224
    %s242 = sphi 0, %s242
    %s244 = sphi 0, %s242
    %s245 = sphi 0, %s244
    %s259 = sphi 0, %s245
    %s263 = sphi 0, %s263
    %s265 = sphi 0, %s263
    %s266 = sphi 0, %s265
    %s280 = sphi 0, %s266
    %s284 = sphi 0, %s284
    %s286 = sphi 0, %s284
    %s287 = sphi 0, %s286
    %s301 = sphi 0, %s287
    %s307 = sphi 0, %s309
    %s310 = sphi 0, %s307
    %s311 = sphi 0, %s310
    %s327 = sphi 0, %s311
  $region4: #{multi_stream_vit.1} parent=0 // loop_header_branch
    %22 = sbr.rel (%p20) target = $region8
  $region5: #{multi_stream_vit.1} parent=0 // loop_body
    %s24 = ssub.s32 %s19, 1
    %s25 = ssub.s32 %s19, 2
    %s26 = sadd.s32 %s19, 1
    %s27 = ssub.s32 %s19, %s26
    %p28 = scmp.eq.s32.totalorder %s27, 0
    %s30 = sadd.s32 %s29, 1
    %s31 = scalar_select %p28, %s29, %s30
    %p34 = pneg %p28
    %p35 = scmp.eq.s32.totalorder %s19, 1
    %p36 = por %p34, %p35
    %p37 = scmp.ne.s32.totalorder %s29, %s32
    %p38 = scmp.eq.s32.totalorder %s19, 0
    %p39 = por %p37, %p38
    %p40 = scmp.ne.s32.totalorder %s29, %s32
    %p41 = scmp.eq.s32.totalorder %s24, 1
    %p42 = por %p40, %p41
    %p43 = scmp.ne.s32.totalorder %s32, %s33
    %p44 = scmp.eq.s32.totalorder %s24, 0
    %p45 = por %p43, %p44
    %p46 = scmp.ne.s32.totalorder %s32, %s33
    %p47 = scmp.eq.s32.totalorder %s25, 1
    %p48 = por %p46, %p47
    %p50 = scmp.ne.s32.totalorder %s33, %s49
    %p51 = scmp.eq.s32.totalorder %s25, 0
    %p52 = por %p50, %p51
    %s54 = sadd.s32 %s53, 1
    %p57 = scmp.eq.s32.totalorder %s19, 1
    %p58 = scmp.ne.s32.totalorder %s53, %s55
    %p59 = scmp.eq.s32.totalorder %s19, 0
    %p60 = por %p58, %p59
    %p61 = scmp.ne.s32.totalorder %s53, %s55
    %p62 = scmp.eq.s32.totalorder %s24, 1
    %p63 = por %p61, %p62
    %p64 = scmp.ne.s32.totalorder %s55, %s56
    %p65 = scmp.eq.s32.totalorder %s24, 0
    %p66 = por %p64, %p65
    %p67 = scmp.ne.s32.totalorder %s55, %s56
    %p68 = scmp.eq.s32.totalorder %s25, 1
    %p69 = por %p67, %p68
    %p71 = scmp.ne.s32.totalorder %s56, %s70
    %p72 = scmp.eq.s32.totalorder %s25, 0
    %p73 = por %p71, %p72
    %s75 = sadd.s32 %s74, 1
    %p78 = scmp.eq.s32.totalorder %s19, 1
    %p79 = scmp.ne.s32.totalorder %s74, %s76
    %p80 = scmp.eq.s32.totalorder %s19, 0
    %p81 = por %p79, %p80
    %p82 = scmp.ne.s32.totalorder %s74, %s76
    %p83 = scmp.eq.s32.totalorder %s24, 1
    %p84 = por %p82, %p83
    %p85 = scmp.ne.s32.totalorder %s76, %s77
    %p86 = scmp.eq.s32.totalorder %s24, 0
    %p87 = por %p85, %p86
    %p88 = scmp.ne.s32.totalorder %s76, %s77
    %p89 = scmp.eq.s32.totalorder %s25, 1
    %p90 = por %p88, %p89
    %p92 = scmp.ne.s32.totalorder %s77, %s91
    %p93 = scmp.eq.s32.totalorder %s25, 0
    %p94 = por %p92, %p93
    %s96 = sadd.s32 %s95, 1
    %p99 = scmp.eq.s32.totalorder %s19, 1
    %p100 = scmp.ne.s32.totalorder %s95, %s97
    %p101 = scmp.eq.s32.totalorder %s19, 0
    %p102 = por %p100, %p101
    %p103 = scmp.ne.s32.totalorder %s95, %s97
    %p104 = scmp.eq.s32.totalorder %s24, 1
    %p105 = por %p103, %p104
    %p106 = scmp.ne.s32.totalorder %s97, %s98
    %p107 = scmp.eq.s32.totalorder %s24, 0
    %p108 = por %p106, %p107
    %p109 = scmp.ne.s32.totalorder %s97, %s98
    %p110 = scmp.eq.s32.totalorder %s25, 1
    %p111 = por %p109, %p110
    %p113 = scmp.ne.s32.totalorder %s98, %s112
    %p114 = scmp.eq.s32.totalorder %s25, 0
    %p115 = por %p113, %p114
    %s117 = sadd.s32 %s116, 1
    %p120 = scmp.eq.s32.totalorder %s19, 1
    %p121 = scmp.ne.s32.totalorder %s116, %s118
    %p122 = scmp.eq.s32.totalorder %s19, 0
    %p123 = por %p121, %p122
    %p124 = scmp.ne.s32.totalorder %s116, %s118
    %p125 = scmp.eq.s32.totalorder %s24, 1
    %p126 = por %p124, %p125
    %p127 = scmp.ne.s32.totalorder %s118, %s119
    %p128 = scmp.eq.s32.totalorder %s24, 0
    %p129 = por %p127, %p128
    %p130 = scmp.ne.s32.totalorder %s118, %s119
    %p131 = scmp.eq.s32.totalorder %s25, 1
    %p132 = por %p130, %p131
    %p134 = scmp.ne.s32.totalorder %s119, %s133
    %p135 = scmp.eq.s32.totalorder %s25, 0
    %p136 = por %p134, %p135
    %s138 = sadd.s32 %s137, 1
    %p141 = scmp.eq.s32.totalorder %s19, 1
    %p142 = scmp.ne.s32.totalorder %s137, %s139
    %p143 = scmp.eq.s32.totalorder %s19, 0
    %p144 = por %p142, %p143
    %p145 = scmp.ne.s32.totalorder %s137, %s139
    %p146 = scmp.eq.s32.totalorder %s24, 1
    %p147 = por %p145, %p146
    %p148 = scmp.ne.s32.totalorder %s139, %s140
    %p149 = scmp.eq.s32.totalorder %s24, 0
    %p150 = por %p148, %p149
    %p151 = scmp.ne.s32.totalorder %s139, %s140
    %p152 = scmp.eq.s32.totalorder %s25, 1
    %p153 = por %p151, %p152
    %p155 = scmp.ne.s32.totalorder %s140, %s154
    %p156 = scmp.eq.s32.totalorder %s25, 0
    %p157 = por %p155, %p156
    %s159 = sadd.s32 %s158, 1
    %p162 = scmp.eq.s32.totalorder %s19, 1
    %p163 = scmp.ne.s32.totalorder %s158, %s160
    %p164 = scmp.eq.s32.totalorder %s19, 0
    %p165 = por %p163, %p164
    %p166 = scmp.ne.s32.totalorder %s158, %s160
    %p167 = scmp.eq.s32.totalorder %s24, 1
    %p168 = por %p166, %p167
    %p169 = scmp.ne.s32.totalorder %s160, %s161
    %p170 = scmp.eq.s32.totalorder %s24, 0
    %p171 = por %p169, %p170
    %p172 = scmp.ne.s32.totalorder %s160, %s161
    %p173 = scmp.eq.s32.totalorder %s25, 1
    %p174 = por %p172, %p173
    %p176 = scmp.ne.s32.totalorder %s161, %s175
    %p177 = scmp.eq.s32.totalorder %s25, 0
    %p178 = por %p176, %p177
    %s180 = sadd.s32 %s179, 1
    %p183 = scmp.eq.s32.totalorder %s19, 1
    %p184 = scmp.ne.s32.totalorder %s179, %s181
    %p185 = scmp.eq.s32.totalorder %s19, 0
    %p186 = por %p184, %p185
    %p187 = scmp.ne.s32.totalorder %s179, %s181
    %p188 = scmp.eq.s32.totalorder %s24, 1
    %p189 = por %p187, %p188
    %p190 = scmp.ne.s32.totalorder %s181, %s182
    %p191 = scmp.eq.s32.totalorder %s24, 0
    %p192 = por %p190, %p191
    %p193 = scmp.ne.s32.totalorder %s181, %s182
    %p194 = scmp.eq.s32.totalorder %s25, 1
    %p195 = por %p193, %p194
    %p197 = scmp.ne.s32.totalorder %s182, %s196
    %p198 = scmp.eq.s32.totalorder %s25, 0
    %p199 = por %p197, %p198
    %s201 = sadd.s32 %s200, 1
    %p204 = scmp.eq.s32.totalorder %s19, 1
    %p205 = scmp.ne.s32.totalorder %s200, %s202
    %p206 = scmp.eq.s32.totalorder %s19, 0
    %p207 = por %p205, %p206
    %p208 = scmp.ne.s32.totalorder %s200, %s202
    %p209 = scmp.eq.s32.totalorder %s24, 1
    %p210 = por %p208, %p209
    %p211 = scmp.ne.s32.totalorder %s202, %s203
    %p212 = scmp.eq.s32.totalorder %s24, 0
    %p213 = por %p211, %p212
    %p214 = scmp.ne.s32.totalorder %s202, %s203
    %p215 = scmp.eq.s32.totalorder %s25, 1
    %p216 = por %p214, %p215
    %p218 = scmp.ne.s32.totalorder %s203, %s217
    %p219 = scmp.eq.s32.totalorder %s25, 0
    %p220 = por %p218, %p219
    %s222 = sadd.s32 %s221, 1
    %p225 = scmp.eq.s32.totalorder %s19, 1
    %p226 = scmp.ne.s32.totalorder %s221, %s223
    %p227 = scmp.eq.s32.totalorder %s19, 0
    %p228 = por %p226, %p227
    %p229 = scmp.ne.s32.totalorder %s221, %s223
    %p230 = scmp.eq.s32.totalorder %s24, 1
    %p231 = por %p229, %p230
    %p232 = scmp.ne.s32.totalorder %s223, %s224
    %p233 = scmp.eq.s32.totalorder %s24, 0
    %p234 = por %p232, %p233
    %p235 = scmp.ne.s32.totalorder %s223, %s224
    %p236 = scmp.eq.s32.totalorder %s25, 1
    %p237 = por %p235, %p236
    %p239 = scmp.ne.s32.totalorder %s224, %s238
    %p240 = scmp.eq.s32.totalorder %s25, 0
    %p241 = por %p239, %p240
    %s243 = sadd.s32 %s242, 1
    %p246 = scmp.eq.s32.totalorder %s19, 1
    %p247 = scmp.ne.s32.totalorder %s242, %s244
    %p248 = scmp.eq.s32.totalorder %s19, 0
    %p249 = por %p247, %p248
    %p250 = scmp.ne.s32.totalorder %s242, %s244
    %p251 = scmp.eq.s32.totalorder %s24, 1
    %p252 = por %p250, %p251
    %p253 = scmp.ne.s32.totalorder %s244, %s245
    %p254 = scmp.eq.s32.totalorder %s24, 0
    %p255 = por %p253, %p254
    %p256 = scmp.ne.s32.totalorder %s244, %s245
    %p257 = scmp.eq.s32.totalorder %s25, 1
    %p258 = por %p256, %p257
    %p260 = scmp.ne.s32.totalorder %s245, %s259
    %p261 = scmp.eq.s32.totalorder %s25, 0
    %p262 = por %p260, %p261
    %s264 = sadd.s32 %s263, 1
    %p267 = scmp.eq.s32.totalorder %s19, 1
    %p268 = scmp.ne.s32.totalorder %s263, %s265
    %p269 = scmp.eq.s32.totalorder %s19, 0
    %p270 = por %p268, %p269
    %p271 = scmp.ne.s32.totalorder %s263, %s265
    %p272 = scmp.eq.s32.totalorder %s24, 1
    %p273 = por %p271, %p272
    %p274 = scmp.ne.s32.totalorder %s265, %s266
    %p275 = scmp.eq.s32.totalorder %s24, 0
    %p276 = por %p274, %p275
    %p277 = scmp.ne.s32.totalorder %s265, %s266
    %p278 = scmp.eq.s32.totalorder %s25, 1
    %p279 = por %p277, %p278
    %p281 = scmp.ne.s32.totalorder %s266, %s280
    %p282 = scmp.eq.s32.totalorder %s25, 0
    %p283 = por %p281, %p282
    %s285 = sadd.s32 %s284, 1
    %p288 = scmp.eq.s32.totalorder %s19, 1
    %p289 = scmp.ne.s32.totalorder %s284, %s286
    %p290 = scmp.eq.s32.totalorder %s19, 0
    %p291 = por %p289, %p290
    %p292 = scmp.ne.s32.totalorder %s284, %s286
    %p293 = scmp.eq.s32.totalorder %s24, 1
    %p294 = por %p292, %p293
    %p295 = scmp.ne.s32.totalorder %s286, %s287
    %p296 = scmp.eq.s32.totalorder %s24, 0
    %p297 = por %p295, %p296
    %p298 = scmp.ne.s32.totalorder %s286, %s287
    %p299 = scmp.eq.s32.totalorder %s25, 1
    %p300 = por %p298, %p299
    %p302 = scmp.ne.s32.totalorder %s287, %s301
    %p303 = scmp.eq.s32.totalorder %s25, 0
    %p304 = por %p302, %p303
    %s305 = ssub.s32 %s19, %s26
    %p306 = scmp.eq.s32.totalorder %s305, 0
    %s308 = sadd.s32 %s307, 1
    %s309 = scalar_select %p306, %s307, %s308
    %p312 = pneg %p306
    %p313 = scmp.eq.s32.totalorder %s19, 1
    %p314 = por %p312, %p313
    %p315 = scmp.ne.s32.totalorder %s307, %s310
    %p316 = scmp.eq.s32.totalorder %s19, 0
    %p317 = por %p315, %p316
    %p318 = scmp.ne.s32.totalorder %s307, %s310
    %p319 = scmp.eq.s32.totalorder %s24, 1
    %p320 = por %p318, %p319
    %p321 = scmp.ne.s32.totalorder %s310, %s311
    %p322 = scmp.eq.s32.totalorder %s24, 0
    %p323 = por %p321, %p322
    %p324 = scmp.ne.s32.totalorder %s310, %s311
    %p325 = scmp.eq.s32.totalorder %s25, 1
    %p326 = por %p324, %p325
    %p328 = scmp.ne.s32.totalorder %s311, %s327
    %p329 = scmp.eq.s32.totalorder %s25, 0
    %p330 = por %p328, %p329
    %p331 = scmp.le.s32.totalorder 1, %s19
    %p332 = scmp.lt.s32.totalorder %s19, 3
    %p333 = pnand %p331, %p332
    %p334 = pneg %p333
    // Predicated region
    $region9: #{multi_stream_vit.1} parent=5 // pred_check
      _
    $region10: #{multi_stream_vit.1} parent=5 // pred_check_branch
      %336 = sbr.rel (%p333) target = $region12
    $region11: #{multi_stream_vit.1} parent=5 // pred_region
      %s337 = ssub.s32 %s19, 1
      // Predicated region
      $region13: #{multi_stream_vit.1} parent=11 // pred_check
        %p338 = pneg %p66
      $region14: #{multi_stream_vit.1} parent=11 // pred_check_branch
        %340 = sbr.rel (%p338) target = $region16
      $region15: #{multi_stream_vit.1} parent=11 // pred_region
        _
      $region16: #{multi_stream_vit.1} parent=11 // pred_fallthru
        _
      // Predicated region
      $region17: #{multi_stream_vit.1} parent=11 // pred_check
        %p341 = pneg %p87
      $region18: #{multi_stream_vit.1} parent=11 // pred_check_branch
        %343 = sbr.rel (%p341) target = $region20
      $region19: #{multi_stream_vit.1} parent=11 // pred_region
        _
      $region20: #{multi_stream_vit.1} parent=11 // pred_fallthru
        _
      // Predicated region
      $region21: #{multi_stream_vit.1} parent=11 // pred_check
        %p344 = pneg %p108
      $region22: #{multi_stream_vit.1} parent=11 // pred_check_branch
        %346 = sbr.rel (%p344) target = $region24
      $region23: #{multi_stream_vit.1} parent=11 // pred_region
        _
      $region24: #{multi_stream_vit.1} parent=11 // pred_fallthru
        _
      // Predicated region
      $region25: #{multi_stream_vit.1} parent=11 // pred_check
        %p347 = pneg %p129
      $region26: #{multi_stream_vit.1} parent=11 // pred_check_branch
        %349 = sbr.rel (%p347) target = $region28
      $region27: #{multi_stream_vit.1} parent=11 // pred_region
        _
      $region28: #{multi_stream_vit.1} parent=11 // pred_fallthru
        _
      // Predicated region
      $region29: #{multi_stream_vit.1} parent=11 // pred_check
        %p350 = pneg %p150
      $region30: #{multi_stream_vit.1} parent=11 // pred_check_branch
        %352 = sbr.rel (%p350) target = $region32
      $region31: #{multi_stream_vit.1} parent=11 // pred_region
        _
      $region32: #{multi_stream_vit.1} parent=11 // pred_fallthru
        _
      // Predicated region
      $region33: #{multi_stream_vit.1} parent=11 // pred_check
        %p353 = pneg %p171
      $region34: #{multi_stream_vit.1} parent=11 // pred_check_branch
        %355 = sbr.rel (%p353) target = $region36
      $region35: #{multi_stream_vit.1} parent=11 // pred_region
        _
      $region36: #{multi_stream_vit.1} parent=11 // pred_fallthru
        _
      // Predicated region
      $region37: #{multi_stream_vit.1} parent=11 // pred_check
        %p356 = pneg %p192
      $region38: #{multi_stream_vit.1} parent=11 // pred_check_branch
        %358 = sbr.rel (%p356) target = $region40
      $region39: #{multi_stream_vit.1} parent=11 // pred_region
        _
      $region40: #{multi_stream_vit.1} parent=11 // pred_fallthru
        _
      // Predicated region
      $region41: #{multi_stream_vit.1} parent=11 // pred_check
        %p359 = pneg %p213
      $region42: #{multi_stream_vit.1} parent=11 // pred_check_branch
        %361 = sbr.rel (%p359) target = $region44
      $region43: #{multi_stream_vit.1} parent=11 // pred_region
        _
      $region44: #{multi_stream_vit.1} parent=11 // pred_fallthru
        _
      // Predicated region
      $region45: #{multi_stream_vit.1} parent=11 // pred_check
        %p362 = pneg %p234
      $region46: #{multi_stream_vit.1} parent=11 // pred_check_branch
        %364 = sbr.rel (%p362) target = $region48
      $region47: #{multi_stream_vit.1} parent=11 // pred_region
        _
      $region48: #{multi_stream_vit.1} parent=11 // pred_fallthru
        _
      // Predicated region
      $region49: #{multi_stream_vit.1} parent=11 // pred_check
        %p365 = pneg %p255
      $region50: #{multi_stream_vit.1} parent=11 // pred_check_branch
        %367 = sbr.rel (%p365) target = $region52
      $region51: #{multi_stream_vit.1} parent=11 // pred_region
        _
      $region52: #{multi_stream_vit.1} parent=11 // pred_fallthru
        _
      // Predicated region
      $region53: #{multi_stream_vit.1} parent=11 // pred_check
        %p368 = pneg %p276
      $region54: #{multi_stream_vit.1} parent=11 // pred_check_branch
        %370 = sbr.rel (%p368) target = $region56
      $region55: #{multi_stream_vit.1} parent=11 // pred_region
        _
      $region56: #{multi_stream_vit.1} parent=11 // pred_fallthru
        _
      // Predicated region
      $region57: #{multi_stream_vit.1} parent=11 // pred_check
        %p371 = pneg %p297
      $region58: #{multi_stream_vit.1} parent=11 // pred_check_branch
        %373 = sbr.rel (%p371) target = $region60
      $region59: #{multi_stream_vit.1} parent=11 // pred_region
        _
      $region60: #{multi_stream_vit.1} parent=11 // pred_fallthru
        _
    $region12: #{multi_stream_vit.1} parent=5 // pred_fallthru
      _
    %p374 = scmp.lt.s32.totalorder %s19, 2
    // Predicated region
    $region61: #{multi_stream_vit.1} parent=5 // pred_check
      %p375 = pneg %p374
    $region62: #{multi_stream_vit.1} parent=5 // pred_check_branch
      %377 = sbr.rel (%p375) target = $region64
    $region63: #{multi_stream_vit.1} parent=5 // pred_region
      // Predicated region
      $region65: #{multi_stream_vit.1} parent=63 // pred_check
        %p378 = pneg %p39
      $region66: #{multi_stream_vit.1} parent=63 // pred_check_branch
        %380 = sbr.rel (%p378) target = $region68
      $region67: #{multi_stream_vit.1} parent=63 // pred_region
        %s381 = smul.u32 32, %s19
        %p382 = scmp.lt.s32.totalorder %s381, 63
        %s383 = scalar_select %p382, %s381, 63
        %s384 = smul.addr %s383, 8
        %s385 = scalar_lea.vmem %s0, %s384
        %s386 = smul.u32 32, %s19
      $region68: #{multi_stream_vit.1} parent=63 // pred_fallthru
        _
    $region64: #{multi_stream_vit.1} parent=5 // pred_fallthru
      _
    %p387 = scmp.le.s32.totalorder 1, %s19
    %p388 = scmp.lt.s32.totalorder %s19, 3
    %p389 = pnand %p387, %p388
    %p390 = pneg %p389
    // Predicated region
    $region69: #{multi_stream_vit.1} parent=5 // pred_check
      _
    $region70: #{multi_stream_vit.1} parent=5 // pred_check_branch
      %392 = sbr.rel (%p389) target = $region72
    $region71: #{multi_stream_vit.1} parent=5 // pred_region
      %s393 = ssub.s32 %s19, 1
      %s394 = smul.u32 32, %s24
      %p395 = scmp.lt.s32.totalorder %s394, 63
      %s396 = scalar_select %p395, %s394, 63
      %s397 = smul.addr %s396, 8
      %s398 = scalar_lea.vmem %s0, %s397
      %p399 = pneg %p45
      %p400 = pneg %p42
      %p401 = pneg %p66
      %p402 = pneg %p63
      %p403 = pneg %p87
      %p404 = pneg %p84
      %p405 = pneg %p108
      %p406 = pneg %p105
      %p407 = pneg %p129
      %p408 = pneg %p126
      %p409 = pneg %p150
      %p410 = pneg %p147
      %p411 = pneg %p171
      %p412 = pneg %p168
      %p413 = pneg %p192
      %p414 = pneg %p189
      %p415 = pneg %p213
      %p416 = pneg %p210
      %p417 = pneg %p234
      %p418 = pneg %p231
      %p419 = pneg %p255
      %p420 = pneg %p252
      %p421 = pneg %p276
      %p422 = pneg %p273
      %p423 = pneg %p297
      %p424 = pneg %p294
      %p425 = pneg %p323
      %p426 = pneg %p320
      %s427 = smul.u32 32, %s24
      %p428 = scmp.lt.s32.totalorder %s427, 63
      %s429 = scalar_select %p428, %s427, 63
      %s430 = smul.addr %s429, 8
      %s431 = scalar_lea.vmem %s13, %s430
      %s432 = smul.u32 32, %s24
      %p433 = scmp.lt.s32.totalorder %s432, 63
      %s434 = scalar_select %p433, %s432, 63
      %s435 = smul.addr %s434, 8
      %s436 = scalar_lea.vmem %s0, %s435
      %s437 = smul.u32 32, %s24
      %s438 = smul.u32 32, %s24
      %p439 = scmp.lt.s32.totalorder %s438, 63
      %s440 = scalar_select %p439, %s438, 63
      %s441 = smul.addr %s440, 8
      %s442 = scalar_lea.vmem %s13, %s441
      %s443 = smul.u32 32, %s24
      %v445 = vld [vmem:[%s436] sm:$0xff]
      %v446 = vld [vmem:[%s436 + $0x8] sm:$0xff]
      %v447 = vld [vmem:[%s436 + $0x10] sm:$0xff]
      %v448 = vld [vmem:[%s436 + $0x18] sm:$0xff]
      %v449 = vld [vmem:[%s436 + $0x20] sm:$0xff]
      %v450 = vld [vmem:[%s436 + $0x28] sm:$0xff]
      %v451 = vld [vmem:[%s436 + $0x30] sm:$0xff]
      %v452 = vld [vmem:[%s436 + $0x38] sm:$0xff]
      %v453 = vld [vmem:[%s436 + $0x40] sm:$0xff]
      %v454 = vld [vmem:[%s436 + $0x48] sm:$0xff]
      %v455 = vld [vmem:[%s436 + $0x50] sm:$0xff]
      %v456 = vld [vmem:[%s436 + $0x58] sm:$0xff]
      %v457 = vld [vmem:[%s436 + $0x60] sm:$0xff]
      %v458 = vld [vmem:[%s436 + $0x68] sm:$0xff]
      %v459 = vld [vmem:[%s436 + $0x70] sm:$0xff]
      %v460 = vld [vmem:[%s436 + $0x78] sm:$0xff]
      %v461 = vld [vmem:[%s436 + $0x80] sm:$0xff]
      %v462 = vld [vmem:[%s436 + $0x88] sm:$0xff]
      %v463 = vld [vmem:[%s436 + $0x90] sm:$0xff]
      %v464 = vld [vmem:[%s436 + $0x98] sm:$0xff]
      %v465 = vld [vmem:[%s436 + $0xa0] sm:$0xff]
      %v466 = vld [vmem:[%s436 + $0xa8] sm:$0xff]
      %v467 = vld [vmem:[%s436 + $0xb0] sm:$0xff]
      %v468 = vld [vmem:[%s436 + $0xb8] sm:$0xff]
      %v469 = vld [vmem:[%s436 + $0xc0] sm:$0xff]
      %v470 = vld [vmem:[%s436 + $0xc8] sm:$0xff]
      %v471 = vld [vmem:[%s436 + $0xd0] sm:$0xff]
      %v472 = vld [vmem:[%s436 + $0xd8] sm:$0xff]
      %v473 = vld [vmem:[%s436 + $0xe0] sm:$0xff]
      %v474 = vld [vmem:[%s436 + $0xe8] sm:$0xff]
      %v475 = vld [vmem:[%s436 + $0xf0] sm:$0xff]
      %v476 = vld [vmem:[%s436 + $0xf8] sm:$0xff]
      %v477 = vld [vmem:[%s1] sm:$0x3]
      %v478 = vld [vmem:[%s2] sm:$0x1]
      %v479 = vld [vmem:[%s3] sm:$0xf]
      %v480 = vld [vmem:[%s4] sm:$0x1]
      %v481 = vld [vmem:[%s5] sm:$0xf]
      %v482 = vld [vmem:[%s5 + $0x4] sm:$0xf]
      %v483 = vld [vmem:[%s5 + $0x8] sm:$0xf]
      %v484 = vld [vmem:[%s5 + $0xc] sm:$0xf]
      %v485 = vld [vmem:[%s6] sm:$0x1]
      %v486 = vpack.c.bf16 %v446, %v445
      %v487 = vpack.c.bf16 %v448, %v447
      %v488 = vpack.c.bf16 %v450, %v449
      %v489 = vpack.c.bf16 %v452, %v451
      %v490 = vpack.c.bf16 %v454, %v453
      %v491 = vpack.c.bf16 %v456, %v455
      %v492 = vpack.c.bf16 %v458, %v457
      %v493 = vpack.c.bf16 %v460, %v459
      %v494 = vpack.c.bf16 %v462, %v461
      %v495 = vpack.c.bf16 %v464, %v463
      %v496 = vpack.c.bf16 %v466, %v465
      %v497 = vpack.c.bf16 %v468, %v467
      %v498 = vpack.c.bf16 %v470, %v469
      %v499 = vpack.c.bf16 %v472, %v471
      %v500 = vpack.c.bf16 %v474, %v473
      %v501 = vpack.c.bf16 %v476, %v475
      %v503 = vlaneseq
      %v504 = vshrl.u32 %v503, 7
      %v505 = vsub.s32 0, %v504
      %v506 = vrot.slane %v478, %v505
      %vm508 = vcmask 31744
      %v510 = vsel %vm508, %v486, 0
      %v513 = vsel %vm508, %v487, 0
      %v516 = vsel %vm508, %v488, 0
      %v519 = vsel %vm508, %v489, 0
      %v522 = vsel %vm508, %v490, 0
      %v525 = vsel %vm508, %v491, 0
      %v528 = vsel %vm508, %v492, 0
      %v531 = vsel %vm508, %v493, 0
      %v534 = vsel %vm508, %v494, 0
      %v537 = vsel %vm508, %v495, 0
      %v540 = vsel %vm508, %v496, 0
      %v543 = vsel %vm508, %v497, 0
      %v546 = vsel %vm508, %v498, 0
      %v549 = vsel %vm508, %v499, 0
      %v552 = vsel %vm508, %v500, 0
      %v555 = vsel %vm508, %v501, 0
      %vm557 = vcmask 1041408
      %v559 = vsel %vm557, %v477, 0
      %561 = vmatprep.subr.bf16.mxu0 0
      %562 = vmatpush1.bf16.msra.mxu0 %v559
      %563 = vmatprep.subr.bf16.mxu0 0
      %564 = vmatpush1.bf16.msra.mxu0 0
      %565 = vmatprep.subr.bf16.mxu0 0
      %566 = vmatpush1.bf16.msra.mxu0 0
      %567 = vmatprep.subr.bf16.mxu0 0
      %568 = vmatpush1.bf16.msra.mxu0 0
      %569 = vmatprep.subr.bf16.mxu0 0
      %570 = vmatpush1.bf16.msra.mxu0 0
      %571 = vmatprep.subr.bf16.mxu0 0
      %572 = vmatpush1.bf16.msra.mxu0 0
      %573 = vmatprep.subr.bf16.mxu0 0
      %574 = vmatpush1.bf16.msra.mxu0 0
      %575 = vmatprep.subr.bf16.mxu0 0
      %576 = vmatpush1.bf16.msra.mxu0 0
      %577 = vmatprep.subr.bf16.mxu0 0
      %578 = vmatpush1.bf16.msra.mxu0 0
      %579 = vmatprep.subr.bf16.mxu0 0
      %580 = vmatpush1.bf16.msra.mxu0 0
      %581 = vmatprep.subr.bf16.mxu0 0
      %582 = vmatpush1.bf16.msra.mxu0 0
      %583 = vmatprep.subr.bf16.mxu0 0
      %584 = vmatpush1.bf16.msra.mxu0 0
      %585 = vmatprep.subr.bf16.mxu0 0
      %586 = vmatpush1.bf16.msra.mxu0 0
      %587 = vmatprep.subr.bf16.mxu0 0
      %588 = vmatpush1.bf16.msra.mxu0 0
      %589 = vmatprep.subr.bf16.mxu0 0
      %590 = vmatpush1.bf16.msra.mxu0 0
      %591 = vmatprep.subr.bf16.mxu0 0
      %592 = vmatpush1.bf16.msra.mxu0 0
      %593 = vmatprep.mubr.bf16.mxu0 0
      %594 = vmatmul.mubr.bf16.gmra.mrb[0].mxu0 %v510
      %v595 = vpop.f32.mrb[0].mxu0
      %v596 = vadd.f32 %v506, %v595
      %v597 = vpop.f32.mrb[0].mxu0
      %v598 = vpop.f32.mrb[0].mxu0
      %v599 = vadd.f32 %v506, %v598
      %v600 = vpop.f32.mrb[0].mxu0
      %601 = vmatprep.mubr.bf16.mxu0 0
      %602 = vmatmul.mubr.bf16.gmra.mrb[0].mxu0 %v513
      %v603 = vpop.f32.mrb[0].mxu0
      %v604 = vadd.f32 %v506, %v603
      %v605 = vpop.f32.mrb[0].mxu0
      %v606 = vpop.f32.mrb[0].mxu0
      %v607 = vadd.f32 %v506, %v606
      %v608 = vpop.f32.mrb[0].mxu0
      %609 = vmatprep.mubr.bf16.mxu0 0
      %610 = vmatmul.mubr.bf16.gmra.mrb[0].mxu0 %v516
      %v611 = vpop.f32.mrb[0].mxu0
      %v612 = vadd.f32 %v506, %v611
      %v613 = vpop.f32.mrb[0].mxu0
      %v614 = vpop.f32.mrb[0].mxu0
      %v615 = vadd.f32 %v506, %v614
      %v616 = vpop.f32.mrb[0].mxu0
      %617 = vmatprep.mubr.bf16.mxu0 0
      %618 = vmatmul.mubr.bf16.gmra.mrb[0].mxu0 %v519
      %v619 = vpop.f32.mrb[0].mxu0
      %v620 = vadd.f32 %v506, %v619
      %v621 = vpop.f32.mrb[0].mxu0
      %v622 = vpop.f32.mrb[0].mxu0
      %v623 = vadd.f32 %v506, %v622
      %v624 = vpop.f32.mrb[0].mxu0
      %625 = vmatprep.mubr.bf16.mxu0 0
      %626 = vmatmul.mubr.bf16.gmra.mrb[0].mxu0 %v522
      %v627 = vpop.f32.mrb[0].mxu0
      %v628 = vadd.f32 %v506, %v627
      %v629 = vpop.f32.mrb[0].mxu0
      %v630 = vpop.f32.mrb[0].mxu0
      %v631 = vadd.f32 %v506, %v630
      %v632 = vpop.f32.mrb[0].mxu0
      %633 = vmatprep.mubr.bf16.mxu0 0
      %634 = vmatmul.mubr.bf16.gmra.mrb[0].mxu0 %v525
      %v635 = vpop.f32.mrb[0].mxu0
      %v636 = vadd.f32 %v506, %v635
      %v637 = vpop.f32.mrb[0].mxu0
      %v638 = vpop.f32.mrb[0].mxu0
      %v639 = vadd.f32 %v506, %v638
      %v640 = vpop.f32.mrb[0].mxu0
      %641 = vmatprep.mubr.bf16.mxu0 0
      %642 = vmatmul.mubr.bf16.gmra.mrb[0].mxu0 %v528
      %v643 = vpop.f32.mrb[0].mxu0
      %v644 = vadd.f32 %v506, %v643
      %v645 = vpop.f32.mrb[0].mxu0
      %v646 = vpop.f32.mrb[0].mxu0
      %v647 = vadd.f32 %v506, %v646
      %v648 = vpop.f32.mrb[0].mxu0
      %649 = vmatprep.mubr.bf16.mxu0 0
      %650 = vmatmul.mubr.bf16.gmra.mrb[0].mxu0 %v531
      %v651 = vpop.f32.mrb[0].mxu0
      %v652 = vadd.f32 %v506, %v651
      %v653 = vpop.f32.mrb[0].mxu0
      %v654 = vpop.f32.mrb[0].mxu0
      %v655 = vadd.f32 %v506, %v654
      %v656 = vpop.f32.mrb[0].mxu0
      %657 = vmatprep.mubr.bf16.mxu0 0
      %658 = vmatmul.mubr.bf16.gmra.mrb[0].mxu0 %v534
      %v659 = vpop.f32.mrb[0].mxu0
      %v660 = vadd.f32 %v506, %v659
      %v661 = vpop.f32.mrb[0].mxu0
      %v662 = vpop.f32.mrb[0].mxu0
      %v663 = vadd.f32 %v506, %v662
      %v664 = vpop.f32.mrb[0].mxu0
      %665 = vmatprep.mubr.bf16.mxu0 0
      %666 = vmatmul.mubr.bf16.gmra.mrb[0].mxu0 %v537
      %v667 = vpop.f32.mrb[0].mxu0
      %v668 = vadd.f32 %v506, %v667
      %v669 = vpop.f32.mrb[0].mxu0
      %v670 = vpop.f32.mrb[0].mxu0
      %v671 = vadd.f32 %v506, %v670
      %v672 = vpop.f32.mrb[0].mxu0
      %673 = vmatprep.mubr.bf16.mxu0 0
      %674 = vmatmul.mubr.bf16.gmra.mrb[0].mxu0 %v540
      %v675 = vpop.f32.mrb[0].mxu0
      %v676 = vadd.f32 %v506, %v675
      %v677 = vpop.f32.mrb[0].mxu0
      %v678 = vpop.f32.mrb[0].mxu0
      %v679 = vadd.f32 %v506, %v678
      %v680 = vpop.f32.mrb[0].mxu0
      %681 = vmatprep.mubr.bf16.mxu0 0
      %682 = vmatmul.mubr.bf16.gmra.mrb[0].mxu0 %v543
      %v683 = vpop.f32.mrb[0].mxu0
      %v684 = vadd.f32 %v506, %v683
      %v685 = vpop.f32.mrb[0].mxu0
      %v686 = vpop.f32.mrb[0].mxu0
      %v687 = vadd.f32 %v506, %v686
      %v688 = vpop.f32.mrb[0].mxu0
      %689 = vmatprep.mubr.bf16.mxu0 0
      %690 = vmatmul.mubr.bf16.gmra.mrb[0].mxu0 %v546
      %v691 = vpop.f32.mrb[0].mxu0
      %v692 = vadd.f32 %v506, %v691
      %v693 = vpop.f32.mrb[0].mxu0
      %v694 = vpop.f32.mrb[0].mxu0
      %v695 = vadd.f32 %v506, %v694
      %v696 = vpop.f32.mrb[0].mxu0
      %697 = vmatprep.mubr.bf16.mxu0 0
      %698 = vmatmul.mubr.bf16.gmra.mrb[0].mxu0 %v549
      %v699 = vpop.f32.mrb[0].mxu0
      %v700 = vadd.f32 %v506, %v699
      %v701 = vpop.f32.mrb[0].mxu0
      %v702 = vpop.f32.mrb[0].mxu0
      %v703 = vadd.f32 %v506, %v702
      %v704 = vpop.f32.mrb[0].mxu0
      %705 = vmatprep.mubr.bf16.mxu0 0
      %706 = vmatmul.mubr.bf16.gmra.mrb[0].mxu0 %v552
      %v707 = vpop.f32.mrb[0].mxu0
      %v708 = vadd.f32 %v506, %v707
      %v709 = vpop.f32.mrb[0].mxu0
      %v710 = vpop.f32.mrb[0].mxu0
      %v711 = vadd.f32 %v506, %v710
      %v712 = vpop.f32.mrb[0].mxu0
      %713 = vmatprep.mubr.bf16.mxu0 0
      %714 = vmatmul.mubr.bf16.gmra.mrb[0].mxu0 %v555
      %v715 = vpop.f32.mrb[0].mxu0
      %v716 = vadd.f32 %v506, %v715
      %v717 = vpop.f32.mrb[0].mxu0
      %v718 = vpop.f32.mrb[0].mxu0
      %v719 = vadd.f32 %v506, %v718
      %v720 = vpop.f32.mrb[0].mxu0
      %721 = vdwg.mxu0
      %v722 = vxor.u32 %v596, 2147483648
      %v723 = vxor.u32 %v599, 2147483648
      %v724 = vxor.u32 %v604, 2147483648
      %v725 = vxor.u32 %v607, 2147483648
      %v726 = vxor.u32 %v612, 2147483648
      %v727 = vxor.u32 %v615, 2147483648
      %v728 = vxor.u32 %v620, 2147483648
      %v729 = vxor.u32 %v623, 2147483648
      %v730 = vxor.u32 %v628, 2147483648
      %v731 = vxor.u32 %v631, 2147483648
      %v732 = vxor.u32 %v636, 2147483648
      %v733 = vxor.u32 %v639, 2147483648
      %v734 = vxor.u32 %v644, 2147483648
      %v735 = vxor.u32 %v647, 2147483648
      %v736 = vxor.u32 %v652, 2147483648
      %v737 = vxor.u32 %v655, 2147483648
      %v738 = vxor.u32 %v660, 2147483648
      %v739 = vxor.u32 %v663, 2147483648
      %v740 = vxor.u32 %v668, 2147483648
      %v741 = vxor.u32 %v671, 2147483648
      %v742 = vxor.u32 %v676, 2147483648
      %v743 = vxor.u32 %v679, 2147483648
      %v744 = vxor.u32 %v684, 2147483648
      %v745 = vxor.u32 %v687, 2147483648
      %v746 = vxor.u32 %v692, 2147483648
      %v747 = vxor.u32 %v695, 2147483648
      %v748 = vxor.u32 %v700, 2147483648
      %v749 = vxor.u32 %v703, 2147483648
      %v750 = vxor.u32 %v708, 2147483648
      %v751 = vxor.u32 %v711, 2147483648
      %v752 = vxor.u32 %v716, 2147483648
      %v753 = vxor.u32 %v719, 2147483648
      %v754 = vmul.f32 %v722, 1.442695
      %v755 = vpow.pop %v754
      %v756 = vmul.f32 %v723, 1.442695
      %v757 = vpow.pop %v756
      %v758 = vmul.f32 %v724, 1.442695
      %v759 = vpow.pop %v758
      %v760 = vmul.f32 %v725, 1.442695
      %v761 = vpow.pop %v760
      %v762 = vmul.f32 %v726, 1.442695
      %v763 = vpow.pop %v762
      %v764 = vmul.f32 %v727, 1.442695
      %v765 = vpow.pop %v764
      %v766 = vmul.f32 %v728, 1.442695
      %v767 = vpow.pop %v766
      %v768 = vmul.f32 %v729, 1.442695
      %v769 = vpow.pop %v768
      %v770 = vmul.f32 %v730, 1.442695
      %v771 = vpow.pop %v770
      %v772 = vmul.f32 %v731, 1.442695
      %v773 = vpow.pop %v772
      %v774 = vmul.f32 %v732, 1.442695
      %v775 = vpow.pop %v774
      %v776 = vmul.f32 %v733, 1.442695
      %v777 = vpow.pop %v776
      %v778 = vmul.f32 %v734, 1.442695
      %v779 = vpow.pop %v778
      %v780 = vmul.f32 %v735, 1.442695
      %v781 = vpow.pop %v780
      %v782 = vmul.f32 %v736, 1.442695
      %v783 = vpow.pop %v782
      %v784 = vmul.f32 %v737, 1.442695
      %v785 = vpow.pop %v784
      %v786 = vmul.f32 %v738, 1.442695
      %v787 = vpow.pop %v786
      %v788 = vmul.f32 %v739, 1.442695
      %v789 = vpow.pop %v788
      %v790 = vmul.f32 %v740, 1.442695
      %v791 = vpow.pop %v790
      %v792 = vmul.f32 %v741, 1.442695
      %v793 = vpow.pop %v792
      %v794 = vmul.f32 %v742, 1.442695
      %v795 = vpow.pop %v794
      %v796 = vmul.f32 %v743, 1.442695
      %v797 = vpow.pop %v796
      %v798 = vmul.f32 %v744, 1.442695
      %v799 = vpow.pop %v798
      %v800 = vmul.f32 %v745, 1.442695
      %v801 = vpow.pop %v800
      %v802 = vmul.f32 %v746, 1.442695
      %v803 = vpow.pop %v802
      %v804 = vmul.f32 %v747, 1.442695
      %v805 = vpow.pop %v804
      %v806 = vmul.f32 %v748, 1.442695
      %v807 = vpow.pop %v806
      %v808 = vmul.f32 %v749, 1.442695
      %v809 = vpow.pop %v808
      %v810 = vmul.f32 %v750, 1.442695
      %v811 = vpow.pop %v810
      %v812 = vmul.f32 %v751, 1.442695
      %v813 = vpow.pop %v812
      %v814 = vmul.f32 %v752, 1.442695
      %v815 = vpow.pop %v814
      %v816 = vmul.f32 %v753, 1.442695
      %v817 = vpow.pop %v816
      %v818 = vadd.f32 %v755, 1.0
      %v819 = vadd.f32 %v757, 1.0
      %v820 = vadd.f32 %v759, 1.0
      %v821 = vadd.f32 %v761, 1.0
      %v822 = vadd.f32 %v763, 1.0
      %v823 = vadd.f32 %v765, 1.0
      %v824 = vadd.f32 %v767, 1.0
      %v825 = vadd.f32 %v769, 1.0
      %v826 = vadd.f32 %v771, 1.0
      %v827 = vadd.f32 %v773, 1.0
      %v828 = vadd.f32 %v775, 1.0
      %v829 = vadd.f32 %v777, 1.0
      %v830 = vadd.f32 %v779, 1.0
      %v831 = vadd.f32 %v781, 1.0
      %v832 = vadd.f32 %v783, 1.0
      %v833 = vadd.f32 %v785, 1.0
      %v834 = vadd.f32 %v787, 1.0
      %v835 = vadd.f32 %v789, 1.0
      %v836 = vadd.f32 %v791, 1.0
      %v837 = vadd.f32 %v793, 1.0
      %v838 = vadd.f32 %v795, 1.0
      %v839 = vadd.f32 %v797, 1.0
      %v840 = vadd.f32 %v799, 1.0
      %v841 = vadd.f32 %v801, 1.0
      %v842 = vadd.f32 %v803, 1.0
      %v843 = vadd.f32 %v805, 1.0
      %v844 = vadd.f32 %v807, 1.0
      %v845 = vadd.f32 %v809, 1.0
      %v846 = vadd.f32 %v811, 1.0
      %v847 = vadd.f32 %v813, 1.0
      %v848 = vadd.f32 %v815, 1.0
      %v849 = vadd.f32 %v817, 1.0
      %v850 = vrcp.pop %v818
      %v851 = vmul.f32 1.0, %v850
      %v852 = vrcp.pop %v819
      %v853 = vmul.f32 1.0, %v852
      %v854 = vrcp.pop %v820
      %v855 = vmul.f32 1.0, %v854
      %v856 = vrcp.pop %v821
      %v857 = vmul.f32 1.0, %v856
      %v858 = vrcp.pop %v822
      %v859 = vmul.f32 1.0, %v858
      %v860 = vrcp.pop %v823
      %v861 = vmul.f32 1.0, %v860
      %v862 = vrcp.pop %v824
      %v863 = vmul.f32 1.0, %v862
      %v864 = vrcp.pop %v825
      %v865 = vmul.f32 1.0, %v864
      %v866 = vrcp.pop %v826
      %v867 = vmul.f32 1.0, %v866
      %v868 = vrcp.pop %v827
      %v869 = vmul.f32 1.0, %v868
      %v870 = vrcp.pop %v828
      %v871 = vmul.f32 1.0, %v870
      %v872 = vrcp.pop %v829
      %v873 = vmul.f32 1.0, %v872
      %v874 = vrcp.pop %v830
      %v875 = vmul.f32 1.0, %v874
      %v876 = vrcp.pop %v831
      %v877 = vmul.f32 1.0, %v876
      %v878 = vrcp.pop %v832
      %v879 = vmul.f32 1.0, %v878
      %v880 = vrcp.pop %v833
      %v881 = vmul.f32 1.0, %v880
      %v882 = vrcp.pop %v834
      %v883 = vmul.f32 1.0, %v882
      %v884 = vrcp.pop %v835
      %v885 = vmul.f32 1.0, %v884
      %v886 = vrcp.pop %v836
      %v887 = vmul.f32 1.0, %v886
      %v888 = vrcp.pop %v837
      %v889 = vmul.f32 1.0, %v888
      %v890 = vrcp.pop %v838
      %v891 = vmul.f32 1.0, %v890
      %v892 = vrcp.pop %v839
      %v893 = vmul.f32 1.0, %v892
      %v894 = vrcp.pop %v840
      %v895 = vmul.f32 1.0, %v894
      %v896 = vrcp.pop %v841
      %v897 = vmul.f32 1.0, %v896
      %v898 = vrcp.pop %v842
      %v899 = vmul.f32 1.0, %v898
      %v900 = vrcp.pop %v843
      %v901 = vmul.f32 1.0, %v900
      %v902 = vrcp.pop %v844
      %v903 = vmul.f32 1.0, %v902
      %v904 = vrcp.pop %v845
      %v905 = vmul.f32 1.0, %v904
      %v906 = vrcp.pop %v846
      %v907 = vmul.f32 1.0, %v906
      %v908 = vrcp.pop %v847
      %v909 = vmul.f32 1.0, %v908
      %v910 = vrcp.pop %v848
      %v911 = vmul.f32 1.0, %v910
      %v912 = vrcp.pop %v849
      %v913 = vmul.f32 1.0, %v912
      %v914 = vmul.f32 %v596, %v851
      %v915 = vmul.f32 %v599, %v853
      %v916 = vmul.f32 %v604, %v855
      %v917 = vmul.f32 %v607, %v857
      %v918 = vmul.f32 %v612, %v859
      %v919 = vmul.f32 %v615, %v861
      %v920 = vmul.f32 %v620, %v863
      %v921 = vmul.f32 %v623, %v865
      %v922 = vmul.f32 %v628, %v867
      %v923 = vmul.f32 %v631, %v869
      %v924 = vmul.f32 %v636, %v871
      %v925 = vmul.f32 %v639, %v873
      %v926 = vmul.f32 %v644, %v875
      %v927 = vmul.f32 %v647, %v877
      %v928 = vmul.f32 %v652, %v879
      %v929 = vmul.f32 %v655, %v881
      %v930 = vmul.f32 %v660, %v883
      %v931 = vmul.f32 %v663, %v885
      %v932 = vmul.f32 %v668, %v887
      %v933 = vmul.f32 %v671, %v889
      %v934 = vmul.f32 %v676, %v891
      %v935 = vmul.f32 %v679, %v893
      %v936 = vmul.f32 %v684, %v895
      %v937 = vmul.f32 %v687, %v897
      %v938 = vmul.f32 %v692, %v899
      %v939 = vmul.f32 %v695, %v901
      %v940 = vmul.f32 %v700, %v903
      %v941 = vmul.f32 %v703, %v905
      %v942 = vmul.f32 %v708, %v907
      %v943 = vmul.f32 %v711, %v909
      %v944 = vmul.f32 %v716, %v911
      %v945 = vmul.f32 %v719, %v913
      %v946 = vlaneseq
      %v947 = vshrl.u32 %v946, 7
      %v948 = vsub.s32 0, %v947
      %v949 = vrot.slane %v479, %v948
      %v950 = vmul.f32 %v914, %v949
      %v951 = vmul.f32 %v915, %v949
      %v952 = vmul.f32 %v916, %v949
      %v953 = vmul.f32 %v917, %v949
      %v954 = vmul.f32 %v918, %v949
      %v955 = vmul.f32 %v919, %v949
      %v956 = vmul.f32 %v920, %v949
      %v957 = vmul.f32 %v921, %v949
      %v958 = vmul.f32 %v922, %v949
      %v959 = vmul.f32 %v923, %v949
      %v960 = vmul.f32 %v924, %v949
      %v961 = vmul.f32 %v925, %v949
      %v962 = vmul.f32 %v926, %v949
      %v963 = vmul.f32 %v927, %v949
      %v964 = vmul.f32 %v928, %v949
      %v965 = vmul.f32 %v929, %v949
      %v966 = vmul.f32 %v930, %v949
      %v967 = vmul.f32 %v931, %v949
      %v968 = vmul.f32 %v932, %v949
      %v969 = vmul.f32 %v933, %v949
      %v970 = vmul.f32 %v934, %v949
      %v971 = vmul.f32 %v935, %v949
      %v972 = vmul.f32 %v936, %v949
      %v973 = vmul.f32 %v937, %v949
      %v974 = vmul.f32 %v938, %v949
      %v975 = vmul.f32 %v939, %v949
      %v976 = vmul.f32 %v940, %v949
      %v977 = vmul.f32 %v941, %v949
      %v978 = vmul.f32 %v942, %v949
      %v979 = vmul.f32 %v943, %v949
      %v980 = vmul.f32 %v944, %v949
      %v981 = vmul.f32 %v945, %v949
      %v982 = vrot.slane %v914, 1
      %v983 = vrot.slane %v915, 1
      %v984 = vrot.slane %v916, 1
      %v985 = vrot.slane %v917, 1
      %v986 = vrot.slane %v918, 1
      %v987 = vrot.slane %v919, 1
      %v988 = vrot.slane %v920, 1
      %v989 = vrot.slane %v921, 1
      %v990 = vrot.slane %v922, 1
      %v991 = vrot.slane %v923, 1
      %v992 = vrot.slane %v924, 1
      %v993 = vrot.slane %v925, 1
      %v994 = vrot.slane %v926, 1
      %v995 = vrot.slane %v927, 1
      %v996 = vrot.slane %v928, 1
      %v997 = vrot.slane %v929, 1
      %v998 = vrot.slane %v930, 1
      %v999 = vrot.slane %v931, 1
      %v1000 = vrot.slane %v932, 1
      %v1001 = vrot.slane %v933, 1
      %v1002 = vrot.slane %v934, 1
      %v1003 = vrot.slane %v935, 1
      %v1004 = vrot.slane %v936, 1
      %v1005 = vrot.slane %v937, 1
      %v1006 = vrot.slane %v938, 1
      %v1007 = vrot.slane %v939, 1
      %v1008 = vrot.slane %v940, 1
      %v1009 = vrot.slane %v941, 1
      %v1010 = vrot.slane %v942, 1
      %v1011 = vrot.slane %v943, 1
      %v1012 = vrot.slane %v944, 1
      %v1013 = vrot.slane %v945, 1
      %v1014 = vlaneseq
      %v1015 = vshrl.u32 %v1014, 7
      %vm1016 = vcmp.lt.s32.totalorder %v1015, 7
      %v1017 = vsel %vm1016, %v1012, %v1013
      %v1018 = vsel %vm1016, %v1011, %v1012
      %v1019 = vsel %vm1016, %v1010, %v1011
      %v1020 = vsel %vm1016, %v1009, %v1010
      %v1021 = vsel %vm1016, %v1008, %v1009
      %v1022 = vsel %vm1016, %v1007, %v1008
      %v1023 = vsel %vm1016, %v1006, %v1007
      %v1024 = vsel %vm1016, %v1005, %v1006
      %v1025 = vsel %vm1016, %v1004, %v1005
      %v1026 = vsel %vm1016, %v1003, %v1004
      %v1027 = vsel %vm1016, %v1002, %v1003
      %v1028 = vsel %vm1016, %v1001, %v1002
      %v1029 = vsel %vm1016, %v1000, %v1001
      %v1030 = vsel %vm1016, %v999, %v1000
      %v1031 = vsel %vm1016, %v998, %v999
      %v1032 = vsel %vm1016, %v997, %v998
      %v1033 = vsel %vm1016, %v996, %v997
      %v1034 = vsel %vm1016, %v995, %v996
      %v1035 = vsel %vm1016, %v994, %v995
      %v1036 = vsel %vm1016, %v993, %v994
      %v1037 = vsel %vm1016, %v992, %v993
      %v1038 = vsel %vm1016, %v991, %v992
      %v1039 = vsel %vm1016, %v990, %v991
      %v1040 = vsel %vm1016, %v989, %v990
      %v1041 = vsel %vm1016, %v988, %v989
      %v1042 = vsel %vm1016, %v987, %v988
      %v1043 = vsel %vm1016, %v986, %v987
      %v1044 = vsel %vm1016, %v985, %v986
      %v1045 = vsel %vm1016, %v984, %v985
      %v1046 = vsel %vm1016, %v983, %v984
      %v1047 = vsel %vm1016, %v982, %v983
      %v1048 = vsel %vm1016, %v1013, %v982
      %v1049 = vlaneseq
      %v1050 = vshrl.u32 %v1049, 7
      %v1051 = vsub.s32 1, %v1050
      %v1052 = vrot.slane %v479, %v1051
      %v1053 = vmul.f32 %v1047, %v1052
      %v1054 = vmul.f32 %v1046, %v1052
      %v1055 = vmul.f32 %v1045, %v1052
      %v1056 = vmul.f32 %v1044, %v1052
      %v1057 = vmul.f32 %v1043, %v1052
      %v1058 = vmul.f32 %v1042, %v1052
      %v1059 = vmul.f32 %v1041, %v1052
      %v1060 = vmul.f32 %v1040, %v1052
      %v1061 = vmul.f32 %v1039, %v1052
      %v1062 = vmul.f32 %v1038, %v1052
      %v1063 = vmul.f32 %v1037, %v1052
      %v1064 = vmul.f32 %v1036, %v1052
      %v1065 = vmul.f32 %v1035, %v1052
      %v1066 = vmul.f32 %v1034, %v1052
      %v1067 = vmul.f32 %v1033, %v1052
      %v1068 = vmul.f32 %v1032, %v1052
      %v1069 = vmul.f32 %v1031, %v1052
      %v1070 = vmul.f32 %v1030, %v1052
      %v1071 = vmul.f32 %v1029, %v1052
      %v1072 = vmul.f32 %v1028, %v1052
      %v1073 = vmul.f32 %v1027, %v1052
      %v1074 = vmul.f32 %v1026, %v1052
      %v1075 = vmul.f32 %v1025, %v1052
      %v1076 = vmul.f32 %v1024, %v1052
      %v1077 = vmul.f32 %v1023, %v1052
      %v1078 = vmul.f32 %v1022, %v1052
      %v1079 = vmul.f32 %v1021, %v1052
      %v1080 = vmul.f32 %v1020, %v1052
      %v1081 = vmul.f32 %v1019, %v1052
      %v1082 = vmul.f32 %v1018, %v1052
      %v1083 = vmul.f32 %v1017, %v1052
      %v1084 = vmul.f32 %v1048, %v1052
      %v1085 = vadd.f32 %v950, %v1053
      %v1086 = vadd.f32 %v951, %v1054
      %v1087 = vadd.f32 %v952, %v1055
      %v1088 = vadd.f32 %v953, %v1056
      %v1089 = vadd.f32 %v954, %v1057
      %v1090 = vadd.f32 %v955, %v1058
      %v1091 = vadd.f32 %v956, %v1059
      %v1092 = vadd.f32 %v957, %v1060
      %v1093 = vadd.f32 %v958, %v1061
      %v1094 = vadd.f32 %v959, %v1062
      %v1095 = vadd.f32 %v960, %v1063
      %v1096 = vadd.f32 %v961, %v1064
      %v1097 = vadd.f32 %v962, %v1065
      %v1098 = vadd.f32 %v963, %v1066
      %v1099 = vadd.f32 %v964, %v1067
      %v1100 = vadd.f32 %v965, %v1068
      %v1101 = vadd.f32 %v966, %v1069
      %v1102 = vadd.f32 %v967, %v1070
      %v1103 = vadd.f32 %v968, %v1071
      %v1104 = vadd.f32 %v969, %v1072
      %v1105 = vadd.f32 %v970, %v1073
      %v1106 = vadd.f32 %v971, %v1074
      %v1107 = vadd.f32 %v972, %v1075
      %v1108 = vadd.f32 %v973, %v1076
      %v1109 = vadd.f32 %v974, %v1077
      %v1110 = vadd.f32 %v975, %v1078
      %v1111 = vadd.f32 %v976, %v1079
      %v1112 = vadd.f32 %v977, %v1080
      %v1113 = vadd.f32 %v978, %v1081
      %v1114 = vadd.f32 %v979, %v1082
      %v1115 = vadd.f32 %v980, %v1083
      %v1116 = vadd.f32 %v981, %v1084
      %v1117 = vlaneseq
      %v1118 = vshrl.u32 %v1117, 7
      %v1119 = vsub.s32 2, %v1118
      %v1120 = vrot.slane %v479, %v1119
      %v1121 = vmul.f32 %v916, %v1120
      %v1122 = vmul.f32 %v917, %v1120
      %v1123 = vmul.f32 %v918, %v1120
      %v1124 = vmul.f32 %v919, %v1120
      %v1125 = vmul.f32 %v920, %v1120
      %v1126 = vmul.f32 %v921, %v1120
      %v1127 = vmul.f32 %v922, %v1120
      %v1128 = vmul.f32 %v923, %v1120
      %v1129 = vmul.f32 %v924, %v1120
      %v1130 = vmul.f32 %v925, %v1120
      %v1131 = vmul.f32 %v926, %v1120
      %v1132 = vmul.f32 %v927, %v1120
      %v1133 = vmul.f32 %v928, %v1120
      %v1134 = vmul.f32 %v929, %v1120
      %v1135 = vmul.f32 %v930, %v1120
      %v1136 = vmul.f32 %v931, %v1120
      %v1137 = vmul.f32 %v932, %v1120
      %v1138 = vmul.f32 %v933, %v1120
      %v1139 = vmul.f32 %v934, %v1120
      %v1140 = vmul.f32 %v935, %v1120
      %v1141 = vmul.f32 %v936, %v1120
      %v1142 = vmul.f32 %v937, %v1120
      %v1143 = vmul.f32 %v938, %v1120
      %v1144 = vmul.f32 %v939, %v1120
      %v1145 = vmul.f32 %v940, %v1120
      %v1146 = vmul.f32 %v941, %v1120
      %v1147 = vmul.f32 %v942, %v1120
      %v1148 = vmul.f32 %v943, %v1120
      %v1149 = vmul.f32 %v944, %v1120
      %v1150 = vmul.f32 %v945, %v1120
      %v1151 = vmul.f32 %v914, %v1120
      %v1152 = vmul.f32 %v915, %v1120
      %v1153 = vadd.f32 %v1085, %v1121
      %v1154 = vadd.f32 %v1086, %v1122
      %v1155 = vadd.f32 %v1087, %v1123
      %v1156 = vadd.f32 %v1088, %v1124
      %v1157 = vadd.f32 %v1089, %v1125
      %v1158 = vadd.f32 %v1090, %v1126
      %v1159 = vadd.f32 %v1091, %v1127
      %v1160 = vadd.f32 %v1092, %v1128
      %v1161 = vadd.f32 %v1093, %v1129
      %v1162 = vadd.f32 %v1094, %v1130
      %v1163 = vadd.f32 %v1095, %v1131
      %v1164 = vadd.f32 %v1096, %v1132
      %v1165 = vadd.f32 %v1097, %v1133
      %v1166 = vadd.f32 %v1098, %v1134
      %v1167 = vadd.f32 %v1099, %v1135
      %v1168 = vadd.f32 %v1100, %v1136
      %v1169 = vadd.f32 %v1101, %v1137
      %v1170 = vadd.f32 %v1102, %v1138
      %v1171 = vadd.f32 %v1103, %v1139
      %v1172 = vadd.f32 %v1104, %v1140
      %v1173 = vadd.f32 %v1105, %v1141
      %v1174 = vadd.f32 %v1106, %v1142
      %v1175 = vadd.f32 %v1107, %v1143
      %v1176 = vadd.f32 %v1108, %v1144
      %v1177 = vadd.f32 %v1109, %v1145
      %v1178 = vadd.f32 %v1110, %v1146
      %v1179 = vadd.f32 %v1111, %v1147
      %v1180 = vadd.f32 %v1112, %v1148
      %v1181 = vadd.f32 %v1113, %v1149
      %v1182 = vadd.f32 %v1114, %v1150
      %v1183 = vadd.f32 %v1115, %v1151
      %v1184 = vadd.f32 %v1116, %v1152
      %v1185 = vlaneseq
      %v1186 = vshrl.u32 %v1185, 7
      %v1187 = vsub.s32 3, %v1186
      %v1188 = vrot.slane %v479, %v1187
      %v1189 = vmul.f32 %v1045, %v1188
      %v1190 = vmul.f32 %v1044, %v1188
      %v1191 = vmul.f32 %v1043, %v1188
      %v1192 = vmul.f32 %v1042, %v1188
      %v1193 = vmul.f32 %v1041, %v1188
      %v1194 = vmul.f32 %v1040, %v1188
      %v1195 = vmul.f32 %v1039, %v1188
      %v1196 = vmul.f32 %v1038, %v1188
      %v1197 = vmul.f32 %v1037, %v1188
      %v1198 = vmul.f32 %v1036, %v1188
      %v1199 = vmul.f32 %v1035, %v1188
      %v1200 = vmul.f32 %v1034, %v1188
      %v1201 = vmul.f32 %v1033, %v1188
      %v1202 = vmul.f32 %v1032, %v1188
      %v1203 = vmul.f32 %v1031, %v1188
      %v1204 = vmul.f32 %v1030, %v1188
      %v1205 = vmul.f32 %v1029, %v1188
      %v1206 = vmul.f32 %v1028, %v1188
      %v1207 = vmul.f32 %v1027, %v1188
      %v1208 = vmul.f32 %v1026, %v1188
      %v1209 = vmul.f32 %v1025, %v1188
      %v1210 = vmul.f32 %v1024, %v1188
      %v1211 = vmul.f32 %v1023, %v1188
      %v1212 = vmul.f32 %v1022, %v1188
      %v1213 = vmul.f32 %v1021, %v1188
      %v1214 = vmul.f32 %v1020, %v1188
      %v1215 = vmul.f32 %v1019, %v1188
      %v1216 = vmul.f32 %v1018, %v1188
      %v1217 = vmul.f32 %v1017, %v1188
      %v1218 = vmul.f32 %v1048, %v1188
      %v1219 = vmul.f32 %v1047, %v1188
      %v1220 = vmul.f32 %v1046, %v1188
      %v1221 = vadd.f32 %v1153, %v1189
      %v1222 = vadd.f32 %v1154, %v1190
      %v1223 = vadd.f32 %v1155, %v1191
      %v1224 = vadd.f32 %v1156, %v1192
      %v1225 = vadd.f32 %v1157, %v1193
      %v1226 = vadd.f32 %v1158, %v1194
      %v1227 = vadd.f32 %v1159, %v1195
      %v1228 = vadd.f32 %v1160, %v1196
      %v1229 = vadd.f32 %v1161, %v1197
      %v1230 = vadd.f32 %v1162, %v1198
      %v1231 = vadd.f32 %v1163, %v1199
      %v1232 = vadd.f32 %v1164, %v1200
      %v1233 = vadd.f32 %v1165, %v1201
      %v1234 = vadd.f32 %v1166, %v1202
      %v1235 = vadd.f32 %v1167, %v1203
      %v1236 = vadd.f32 %v1168, %v1204
      %v1237 = vadd.f32 %v1169, %v1205
      %v1238 = vadd.f32 %v1170, %v1206
      %v1239 = vadd.f32 %v1171, %v1207
      %v1240 = vadd.f32 %v1172, %v1208
      %v1241 = vadd.f32 %v1173, %v1209
      %v1242 = vadd.f32 %v1174, %v1210
      %v1243 = vadd.f32 %v1175, %v1211
      %v1244 = vadd.f32 %v1176, %v1212
      %v1245 = vadd.f32 %v1177, %v1213
      %v1246 = vadd.f32 %v1178, %v1214
      %v1247 = vadd.f32 %v1179, %v1215
      %v1248 = vadd.f32 %v1180, %v1216
      %v1249 = vadd.f32 %v1181, %v1217
      %v1250 = vadd.f32 %v1182, %v1218
      %v1251 = vadd.f32 %v1183, %v1219
      %v1252 = vadd.f32 %v1184, %v1220
      %v1254 = vlaneseq
      %v1255 = vshrl.u32 %v1254, 7
      %v1256 = vsub.s32 0, %v1255
      %v1257 = vrot.slane %v480, %v1256
      %v1259 = vadd.f32 %v1221, %v1257
      %v1260 = vadd.f32 %v1222, %v1257
      %v1261 = vadd.f32 %v1223, %v1257
      %v1262 = vadd.f32 %v1224, %v1257
      %v1263 = vadd.f32 %v1225, %v1257
      %v1264 = vadd.f32 %v1226, %v1257
      %v1265 = vadd.f32 %v1227, %v1257
      %v1266 = vadd.f32 %v1228, %v1257
      %v1267 = vadd.f32 %v1229, %v1257
      %v1268 = vadd.f32 %v1230, %v1257
      %v1269 = vadd.f32 %v1231, %v1257
      %v1270 = vadd.f32 %v1232, %v1257
      %v1271 = vadd.f32 %v1233, %v1257
      %v1272 = vadd.f32 %v1234, %v1257
      %v1273 = vadd.f32 %v1235, %v1257
      %v1274 = vadd.f32 %v1236, %v1257
      %v1275 = vadd.f32 %v1237, %v1257
      %v1276 = vadd.f32 %v1238, %v1257
      %v1277 = vadd.f32 %v1239, %v1257
      %v1278 = vadd.f32 %v1240, %v1257
      %v1279 = vadd.f32 %v1241, %v1257
      %v1280 = vadd.f32 %v1242, %v1257
      %v1281 = vadd.f32 %v1243, %v1257
      %v1282 = vadd.f32 %v1244, %v1257
      %v1283 = vadd.f32 %v1245, %v1257
      %v1284 = vadd.f32 %v1246, %v1257
      %v1285 = vadd.f32 %v1247, %v1257
      %v1286 = vadd.f32 %v1248, %v1257
      %v1287 = vadd.f32 %v1249, %v1257
      %v1288 = vadd.f32 %v1250, %v1257
      %v1289 = vadd.f32 %v1251, %v1257
      %v1290 = vadd.f32 %v1252, %v1257
      %v1291 = vxor.u32 %v1259, 2147483648
      %v1292 = vxor.u32 %v1260, 2147483648
      %v1293 = vxor.u32 %v1261, 2147483648
      %v1294 = vxor.u32 %v1262, 2147483648
      %v1295 = vxor.u32 %v1263, 2147483648
      %v1296 = vxor.u32 %v1264, 2147483648
      %v1297 = vxor.u32 %v1265, 2147483648
      %v1298 = vxor.u32 %v1266, 2147483648
      %v1299 = vxor.u32 %v1267, 2147483648
      %v1300 = vxor.u32 %v1268, 2147483648
      %v1301 = vxor.u32 %v1269, 2147483648
      %v1302 = vxor.u32 %v1270, 2147483648
      %v1303 = vxor.u32 %v1271, 2147483648
      %v1304 = vxor.u32 %v1272, 2147483648
      %v1305 = vxor.u32 %v1273, 2147483648
      %v1306 = vxor.u32 %v1274, 2147483648
      %v1307 = vxor.u32 %v1275, 2147483648
      %v1308 = vxor.u32 %v1276, 2147483648
      %v1309 = vxor.u32 %v1277, 2147483648
      %v1310 = vxor.u32 %v1278, 2147483648
      %v1311 = vxor.u32 %v1279, 2147483648
      %v1312 = vxor.u32 %v1280, 2147483648
      %v1313 = vxor.u32 %v1281, 2147483648
      %v1314 = vxor.u32 %v1282, 2147483648
      %v1315 = vxor.u32 %v1283, 2147483648
      %v1316 = vxor.u32 %v1284, 2147483648
      %v1317 = vxor.u32 %v1285, 2147483648
      %v1318 = vxor.u32 %v1286, 2147483648
      %v1319 = vxor.u32 %v1287, 2147483648
      %v1320 = vxor.u32 %v1288, 2147483648
      %v1321 = vxor.u32 %v1289, 2147483648
      %v1322 = vxor.u32 %v1290, 2147483648
      %v1323 = vmul.f32 %v1291, 1.442695
      %v1324 = vpow.pop %v1323
      %v1325 = vmul.f32 %v1292, 1.442695
      %v1326 = vpow.pop %v1325
      %v1327 = vmul.f32 %v1293, 1.442695
      %v1328 = vpow.pop %v1327
      %v1329 = vmul.f32 %v1294, 1.442695
      %v1330 = vpow.pop %v1329
      %v1331 = vmul.f32 %v1295, 1.442695
      %v1332 = vpow.pop %v1331
      %v1333 = vmul.f32 %v1296, 1.442695
      %v1334 = vpow.pop %v1333
      %v1335 = vmul.f32 %v1297, 1.442695
      %v1336 = vpow.pop %v1335
      %v1337 = vmul.f32 %v1298, 1.442695
      %v1338 = vpow.pop %v1337
      %v1339 = vmul.f32 %v1299, 1.442695
      %v1340 = vpow.pop %v1339
      %v1341 = vmul.f32 %v1300, 1.442695
      %v1342 = vpow.pop %v1341
      %v1343 = vmul.f32 %v1301, 1.442695
      %v1344 = vpow.pop %v1343
      %v1345 = vmul.f32 %v1302, 1.442695
      %v1346 = vpow.pop %v1345
      %v1347 = vmul.f32 %v1303, 1.442695
      %v1348 = vpow.pop %v1347
      %v1349 = vmul.f32 %v1304, 1.442695
      %v1350 = vpow.pop %v1349
      %v1351 = vmul.f32 %v1305, 1.442695
      %v1352 = vpow.pop %v1351
      %v1353 = vmul.f32 %v1306, 1.442695
      %v1354 = vpow.pop %v1353
      %v1355 = vmul.f32 %v1307, 1.442695
      %v1356 = vpow.pop %v1355
      %v1357 = vmul.f32 %v1308, 1.442695
      %v1358 = vpow.pop %v1357
      %v1359 = vmul.f32 %v1309, 1.442695
      %v1360 = vpow.pop %v1359
      %v1361 = vmul.f32 %v1310, 1.442695
      %v1362 = vpow.pop %v1361
      %v1363 = vmul.f32 %v1311, 1.442695
      %v1364 = vpow.pop %v1363
      %v1365 = vmul.f32 %v1312, 1.442695
      %v1366 = vpow.pop %v1365
      %v1367 = vmul.f32 %v1313, 1.442695
      %v1368 = vpow.pop %v1367
      %v1369 = vmul.f32 %v1314, 1.442695
      %v1370 = vpow.pop %v1369
      %v1371 = vmul.f32 %v1315, 1.442695
      %v1372 = vpow.pop %v1371
      %v1373 = vmul.f32 %v1316, 1.442695
      %v1374 = vpow.pop %v1373
      %v1375 = vmul.f32 %v1317, 1.442695
      %v1376 = vpow.pop %v1375
      %v1377 = vmul.f32 %v1318, 1.442695
      %v1378 = vpow.pop %v1377
      %v1379 = vmul.f32 %v1319, 1.442695
      %v1380 = vpow.pop %v1379
      %v1381 = vmul.f32 %v1320, 1.442695
      %v1382 = vpow.pop %v1381
      %v1383 = vmul.f32 %v1321, 1.442695
      %v1384 = vpow.pop %v1383
      %v1385 = vmul.f32 %v1322, 1.442695
      %v1386 = vpow.pop %v1385
      %v1387 = vadd.f32 %v1324, 1.0
      %v1388 = vadd.f32 %v1326, 1.0
      %v1389 = vadd.f32 %v1328, 1.0
      %v1390 = vadd.f32 %v1330, 1.0
      %v1391 = vadd.f32 %v1332, 1.0
      %v1392 = vadd.f32 %v1334, 1.0
      %v1393 = vadd.f32 %v1336, 1.0
      %v1394 = vadd.f32 %v1338, 1.0
      %v1395 = vadd.f32 %v1340, 1.0
      %v1396 = vadd.f32 %v1342, 1.0
      %v1397 = vadd.f32 %v1344, 1.0
      %v1398 = vadd.f32 %v1346, 1.0
      %v1399 = vadd.f32 %v1348, 1.0
      %v1400 = vadd.f32 %v1350, 1.0
      %v1401 = vadd.f32 %v1352, 1.0
      %v1402 = vadd.f32 %v1354, 1.0
      %v1403 = vadd.f32 %v1356, 1.0
      %v1404 = vadd.f32 %v1358, 1.0
      %v1405 = vadd.f32 %v1360, 1.0
      %v1406 = vadd.f32 %v1362, 1.0
      %v1407 = vadd.f32 %v1364, 1.0
      %v1408 = vadd.f32 %v1366, 1.0
      %v1409 = vadd.f32 %v1368, 1.0
      %v1410 = vadd.f32 %v1370, 1.0
      %v1411 = vadd.f32 %v1372, 1.0
      %v1412 = vadd.f32 %v1374, 1.0
      %v1413 = vadd.f32 %v1376, 1.0
      %v1414 = vadd.f32 %v1378, 1.0
      %v1415 = vadd.f32 %v1380, 1.0
      %v1416 = vadd.f32 %v1382, 1.0
      %v1417 = vadd.f32 %v1384, 1.0
      %v1418 = vadd.f32 %v1386, 1.0
      %v1419 = vrcp.pop %v1387
      %v1420 = vmul.f32 1.0, %v1419
      %v1421 = vrcp.pop %v1388
      %v1422 = vmul.f32 1.0, %v1421
      %v1423 = vrcp.pop %v1389
      %v1424 = vmul.f32 1.0, %v1423
      %v1425 = vrcp.pop %v1390
      %v1426 = vmul.f32 1.0, %v1425
      %v1427 = vrcp.pop %v1391
      %v1428 = vmul.f32 1.0, %v1427
      %v1429 = vrcp.pop %v1392
      %v1430 = vmul.f32 1.0, %v1429
      %v1431 = vrcp.pop %v1393
      %v1432 = vmul.f32 1.0, %v1431
      %v1433 = vrcp.pop %v1394
      %v1434 = vmul.f32 1.0, %v1433
      %v1435 = vrcp.pop %v1395
      %v1436 = vmul.f32 1.0, %v1435
      %v1437 = vrcp.pop %v1396
      %v1438 = vmul.f32 1.0, %v1437
      %v1439 = vrcp.pop %v1397
      %v1440 = vmul.f32 1.0, %v1439
      %v1441 = vrcp.pop %v1398
      %v1442 = vmul.f32 1.0, %v1441
      %v1443 = vrcp.pop %v1399
      %v1444 = vmul.f32 1.0, %v1443
      %v1445 = vrcp.pop %v1400
      %v1446 = vmul.f32 1.0, %v1445
      %v1447 = vrcp.pop %v1401
      %v1448 = vmul.f32 1.0, %v1447
      %v1449 = vrcp.pop %v1402
      %v1450 = vmul.f32 1.0, %v1449
      %v1451 = vrcp.pop %v1403
      %v1452 = vmul.f32 1.0, %v1451
      %v1453 = vrcp.pop %v1404
      %v1454 = vmul.f32 1.0, %v1453
      %v1455 = vrcp.pop %v1405
      %v1456 = vmul.f32 1.0, %v1455
      %v1457 = vrcp.pop %v1406
      %v1458 = vmul.f32 1.0, %v1457
      %v1459 = vrcp.pop %v1407
      %v1460 = vmul.f32 1.0, %v1459
      %v1461 = vrcp.pop %v1408
      %v1462 = vmul.f32 1.0, %v1461
      %v1463 = vrcp.pop %v1409
      %v1464 = vmul.f32 1.0, %v1463
      %v1465 = vrcp.pop %v1410
      %v1466 = vmul.f32 1.0, %v1465
      %v1467 = vrcp.pop %v1411
      %v1468 = vmul.f32 1.0, %v1467
      %v1469 = vrcp.pop %v1412
      %v1470 = vmul.f32 1.0, %v1469
      %v1471 = vrcp.pop %v1413
      %v1472 = vmul.f32 1.0, %v1471
      %v1473 = vrcp.pop %v1414
      %v1474 = vmul.f32 1.0, %v1473
      %v1475 = vrcp.pop %v1415
      %v1476 = vmul.f32 1.0, %v1475
      %v1477 = vrcp.pop %v1416
      %v1478 = vmul.f32 1.0, %v1477
      %v1479 = vrcp.pop %v1417
      %v1480 = vmul.f32 1.0, %v1479
      %v1481 = vrcp.pop %v1418
      %v1482 = vmul.f32 1.0, %v1481
      %v1483 = vmul.f32 %v1259, %v1420
      %v1484 = vmul.f32 %v1260, %v1422
      %v1485 = vmul.f32 %v1261, %v1424
      %v1486 = vmul.f32 %v1262, %v1426
      %v1487 = vmul.f32 %v1263, %v1428
      %v1488 = vmul.f32 %v1264, %v1430
      %v1489 = vmul.f32 %v1265, %v1432
      %v1490 = vmul.f32 %v1266, %v1434
      %v1491 = vmul.f32 %v1267, %v1436
      %v1492 = vmul.f32 %v1268, %v1438
      %v1493 = vmul.f32 %v1269, %v1440
      %v1494 = vmul.f32 %v1270, %v1442
      %v1495 = vmul.f32 %v1271, %v1444
      %v1496 = vmul.f32 %v1272, %v1446
      %v1497 = vmul.f32 %v1273, %v1448
      %v1498 = vmul.f32 %v1274, %v1450
      %v1499 = vmul.f32 %v1275, %v1452
      %v1500 = vmul.f32 %v1276, %v1454
      %v1501 = vmul.f32 %v1277, %v1456
      %v1502 = vmul.f32 %v1278, %v1458
      %v1503 = vmul.f32 %v1279, %v1460
      %v1504 = vmul.f32 %v1280, %v1462
      %v1505 = vmul.f32 %v1281, %v1464
      %v1506 = vmul.f32 %v1282, %v1466
      %v1507 = vmul.f32 %v1283, %v1468
      %v1508 = vmul.f32 %v1284, %v1470
      %v1509 = vmul.f32 %v1285, %v1472
      %v1510 = vmul.f32 %v1286, %v1474
      %v1511 = vmul.f32 %v1287, %v1476
      %v1512 = vmul.f32 %v1288, %v1478
      %v1513 = vmul.f32 %v1289, %v1480
      %v1514 = vmul.f32 %v1290, %v1482
      %v1515 = vpack.c.bf16 %v1484, %v1483
      %v1516 = vpack.c.bf16 %v1486, %v1485
      %v1517 = vpack.c.bf16 %v1488, %v1487
      %v1518 = vpack.c.bf16 %v1490, %v1489
      %v1519 = vpack.c.bf16 %v1492, %v1491
      %v1520 = vpack.c.bf16 %v1494, %v1493
      %v1521 = vpack.c.bf16 %v1496, %v1495
      %v1522 = vpack.c.bf16 %v1498, %v1497
      %v1523 = vpack.c.bf16 %v1500, %v1499
      %v1524 = vpack.c.bf16 %v1502, %v1501
      %v1525 = vpack.c.bf16 %v1504, %v1503
      %v1526 = vpack.c.bf16 %v1506, %v1505
      %v1527 = vpack.c.bf16 %v1508, %v1507
      %v1528 = vpack.c.bf16 %v1510, %v1509
      %v1529 = vpack.c.bf16 %v1512, %v1511
      %v1530 = vpack.c.bf16 %v1514, %v1513
      %v1532 = vlaneseq
      %v1533 = vshrl.u32 %v1532, 7
      %v1534 = vsub.s32 0, %v1533
      %v1535 = vrot.slane %v485, %v1534
      %v1541 = vunpack.c.l.b16 %v481
      %v1542 = vunpack.c.l.b16 %v482
      %v1543 = vunpack.c.l.b16 %v483
      %v1544 = vunpack.c.l.b16 %v484
      %v1545 = vpack.c.b16 %v1542, %v1541
      %v1546 = vpack.c.b16 %v1544, %v1543
      %vm1549 = vcmask 261120
      %v1551 = vsel %vm1549, %v1515, 0
      %v1554 = vsel %vm1549, %v1516, 0
      %v1557 = vsel %vm1549, %v1517, 0
      %v1560 = vsel %vm1549, %v1518, 0
      %v1563 = vsel %vm1549, %v1519, 0
      %v1566 = vsel %vm1549, %v1520, 0
      %v1569 = vsel %vm1549, %v1521, 0
      %v1572 = vsel %vm1549, %v1522, 0
      %v1575 = vsel %vm1549, %v1523, 0
      %v1578 = vsel %vm1549, %v1524, 0
      %v1581 = vsel %vm1549, %v1525, 0
      %v1584 = vsel %vm1549, %v1526, 0
      %v1587 = vsel %vm1549, %v1527, 0
      %v1590 = vsel %vm1549, %v1528, 0
      %v1593 = vsel %vm1549, %v1529, 0
      %v1596 = vsel %vm1549, %v1530, 0
      %1598 = vmatprep.subr.bf16.mxu0 0
      %1599 = vmatpush1.bf16.msra.mxu0 %v1545
      %1600 = vmatprep.subr.bf16.mxu0 0
      %1601 = vmatpush1.bf16.msra.mxu0 %v1546
      %1602 = vmatprep.subr.bf16.mxu0 0
      %1603 = vmatpush1.bf16.msra.mxu0 0
      %1604 = vmatprep.subr.bf16.mxu0 0
      %1605 = vmatpush1.bf16.msra.mxu0 0
      %1606 = vmatprep.subr.bf16.mxu0 0
      %1607 = vmatpush1.bf16.msra.mxu0 0
      %1608 = vmatprep.subr.bf16.mxu0 0
      %1609 = vmatpush1.bf16.msra.mxu0 0
      %1610 = vmatprep.subr.bf16.mxu0 0
      %1611 = vmatpush1.bf16.msra.mxu0 0
      %1612 = vmatprep.subr.bf16.mxu0 0
      %1613 = vmatpush1.bf16.msra.mxu0 0
      %1614 = vmatprep.subr.bf16.mxu0 0
      %1615 = vmatpush1.bf16.msra.mxu0 0
      %1616 = vmatprep.subr.bf16.mxu0 0
      %1617 = vmatpush1.bf16.msra.mxu0 0
      %1618 = vmatprep.subr.bf16.mxu0 0
      %1619 = vmatpush1.bf16.msra.mxu0 0
      %1620 = vmatprep.subr.bf16.mxu0 0
      %1621 = vmatpush1.bf16.msra.mxu0 0
      %1622 = vmatprep.subr.bf16.mxu0 0
      %1623 = vmatpush1.bf16.msra.mxu0 0
      %1624 = vmatprep.subr.bf16.mxu0 0
      %1625 = vmatpush1.bf16.msra.mxu0 0
      %1626 = vmatprep.subr.bf16.mxu0 0
      %1627 = vmatpush1.bf16.msra.mxu0 0
      %1628 = vmatprep.subr.bf16.mxu0 0
      %1629 = vmatpush1.bf16.msra.mxu0 0
      %1630 = vmatprep.mubr.bf16.mxu0 0
      %1631 = vmatmul.mubr.bf16.gmra.mrb[0].mxu0 %v1551
      %v1632 = vpop.f32.mrb[0].mxu0
      %v1633 = vadd.f32 %v1535, %v1632
      %v1634 = vpop.f32.mrb[0].mxu0
      %v1635 = vpop.f32.mrb[0].mxu0
      %v1636 = vadd.f32 %v1535, %v1635
      %v1637 = vpop.f32.mrb[0].mxu0
      %1638 = vmatprep.mubr.bf16.mxu0 0
      %1639 = vmatmul.mubr.bf16.gmra.mrb[0].mxu0 %v1554
      %v1640 = vpop.f32.mrb[0].mxu0
      %v1641 = vadd.f32 %v1535, %v1640
      %v1642 = vpop.f32.mrb[0].mxu0
      %v1643 = vpop.f32.mrb[0].mxu0
      %v1644 = vadd.f32 %v1535, %v1643
      %v1645 = vpop.f32.mrb[0].mxu0
      %1646 = vmatprep.mubr.bf16.mxu0 0
      %1647 = vmatmul.mubr.bf16.gmra.mrb[0].mxu0 %v1557
      %v1648 = vpop.f32.mrb[0].mxu0
      %v1649 = vadd.f32 %v1535, %v1648
      %v1650 = vpop.f32.mrb[0].mxu0
      %v1651 = vpop.f32.mrb[0].mxu0
      %v1652 = vadd.f32 %v1535, %v1651
      %v1653 = vpop.f32.mrb[0].mxu0
      %1654 = vmatprep.mubr.bf16.mxu0 0
      %1655 = vmatmul.mubr.bf16.gmra.mrb[0].mxu0 %v1560
      %v1656 = vpop.f32.mrb[0].mxu0
      %v1657 = vadd.f32 %v1535, %v1656
      %v1658 = vpop.f32.mrb[0].mxu0
      %v1659 = vpop.f32.mrb[0].mxu0
      %v1660 = vadd.f32 %v1535, %v1659
      %v1661 = vpop.f32.mrb[0].mxu0
      %1662 = vmatprep.mubr.bf16.mxu0 0
      %1663 = vmatmul.mubr.bf16.gmra.mrb[0].mxu0 %v1563
      %v1664 = vpop.f32.mrb[0].mxu0
      %v1665 = vadd.f32 %v1535, %v1664
      %v1666 = vpop.f32.mrb[0].mxu0
      %v1667 = vpop.f32.mrb[0].mxu0
      %v1668 = vadd.f32 %v1535, %v1667
      %v1669 = vpop.f32.mrb[0].mxu0
      %1670 = vmatprep.mubr.bf16.mxu0 0
      %1671 = vmatmul.mubr.bf16.gmra.mrb[0].mxu0 %v1566
      %v1672 = vpop.f32.mrb[0].mxu0
      %v1673 = vadd.f32 %v1535, %v1672
      %v1674 = vpop.f32.mrb[0].mxu0
      %v1675 = vpop.f32.mrb[0].mxu0
      %v1676 = vadd.f32 %v1535, %v1675
      %v1677 = vpop.f32.mrb[0].mxu0
      %1678 = vmatprep.mubr.bf16.mxu0 0
      %1679 = vmatmul.mubr.bf16.gmra.mrb[0].mxu0 %v1569
      %v1680 = vpop.f32.mrb[0].mxu0
      %v1681 = vadd.f32 %v1535, %v1680
      %v1682 = vpop.f32.mrb[0].mxu0
      %v1683 = vpop.f32.mrb[0].mxu0
      %v1684 = vadd.f32 %v1535, %v1683
      %v1685 = vpop.f32.mrb[0].mxu0
      %1686 = vmatprep.mubr.bf16.mxu0 0
      %1687 = vmatmul.mubr.bf16.gmra.mrb[0].mxu0 %v1572
      %v1688 = vpop.f32.mrb[0].mxu0
      %v1689 = vadd.f32 %v1535, %v1688
      %v1690 = vpop.f32.mrb[0].mxu0
      %v1691 = vpop.f32.mrb[0].mxu0
      %v1692 = vadd.f32 %v1535, %v1691
      %v1693 = vpop.f32.mrb[0].mxu0
      %1694 = vmatprep.mubr.bf16.mxu0 0
      %1695 = vmatmul.mubr.bf16.gmra.mrb[0].mxu0 %v1575
      %v1696 = vpop.f32.mrb[0].mxu0
      %v1697 = vadd.f32 %v1535, %v1696
      %v1698 = vpop.f32.mrb[0].mxu0
      %v1699 = vpop.f32.mrb[0].mxu0
      %v1700 = vadd.f32 %v1535, %v1699
      %v1701 = vpop.f32.mrb[0].mxu0
      %1702 = vmatprep.mubr.bf16.mxu0 0
      %1703 = vmatmul.mubr.bf16.gmra.mrb[0].mxu0 %v1578
      %v1704 = vpop.f32.mrb[0].mxu0
      %v1705 = vadd.f32 %v1535, %v1704
      %v1706 = vpop.f32.mrb[0].mxu0
      %v1707 = vpop.f32.mrb[0].mxu0
      %v1708 = vadd.f32 %v1535, %v1707
      %v1709 = vpop.f32.mrb[0].mxu0
      %1710 = vmatprep.mubr.bf16.mxu0 0
      %1711 = vmatmul.mubr.bf16.gmra.mrb[0].mxu0 %v1581
      %v1712 = vpop.f32.mrb[0].mxu0
      %v1713 = vadd.f32 %v1535, %v1712
      %v1714 = vpop.f32.mrb[0].mxu0
      %v1715 = vpop.f32.mrb[0].mxu0
      %v1716 = vadd.f32 %v1535, %v1715
      %v1717 = vpop.f32.mrb[0].mxu0
      %1718 = vmatprep.mubr.bf16.mxu0 0
      %1719 = vmatmul.mubr.bf16.gmra.mrb[0].mxu0 %v1584
      %v1720 = vpop.f32.mrb[0].mxu0
      %v1721 = vadd.f32 %v1535, %v1720
      %v1722 = vpop.f32.mrb[0].mxu0
      %v1723 = vpop.f32.mrb[0].mxu0
      %v1724 = vadd.f32 %v1535, %v1723
      %v1725 = vpop.f32.mrb[0].mxu0
      %1726 = vmatprep.mubr.bf16.mxu0 0
      %1727 = vmatmul.mubr.bf16.gmra.mrb[0].mxu0 %v1587
      %v1728 = vpop.f32.mrb[0].mxu0
      %v1729 = vadd.f32 %v1535, %v1728
      %v1730 = vpop.f32.mrb[0].mxu0
      %v1731 = vpop.f32.mrb[0].mxu0
      %v1732 = vadd.f32 %v1535, %v1731
      %v1733 = vpop.f32.mrb[0].mxu0
      %1734 = vmatprep.mubr.bf16.mxu0 0
      %1735 = vmatmul.mubr.bf16.gmra.mrb[0].mxu0 %v1590
      %v1736 = vpop.f32.mrb[0].mxu0
      %v1737 = vadd.f32 %v1535, %v1736
      %v1738 = vpop.f32.mrb[0].mxu0
      %v1739 = vpop.f32.mrb[0].mxu0
      %v1740 = vadd.f32 %v1535, %v1739
      %v1741 = vpop.f32.mrb[0].mxu0
      %1742 = vmatprep.mubr.bf16.mxu0 0
      %1743 = vmatmul.mubr.bf16.gmra.mrb[0].mxu0 %v1593
      %v1744 = vpop.f32.mrb[0].mxu0
      %v1745 = vadd.f32 %v1535, %v1744
      %v1746 = vpop.f32.mrb[0].mxu0
      %v1747 = vpop.f32.mrb[0].mxu0
      %v1748 = vadd.f32 %v1535, %v1747
      %v1749 = vpop.f32.mrb[0].mxu0
      %1750 = vmatprep.mubr.bf16.mxu0 0
      %1751 = vmatmul.mubr.bf16.gmra.mrb[0].mxu0 %v1596
      %v1752 = vpop.f32.mrb[0].mxu0
      %v1753 = vadd.f32 %v1535, %v1752
      %v1754 = vpop.f32.mrb[0].mxu0
      %v1755 = vpop.f32.mrb[0].mxu0
      %v1756 = vadd.f32 %v1535, %v1755
      %v1757 = vpop.f32.mrb[0].mxu0
      %1758 = vdwg.mxu0
      %v1759 = vld [vmem:[%s7] sm:$0xf]
      %v1760 = vld [vmem:[%s8] sm:$0x1]
      %v1761 = vld [vmem:[%s9] sm:$0xf]
      %v1762 = vld [vmem:[%s10] sm:$0x1]
      %v1763 = vld [vmem:[%s11] sm:$0xf]
      %v1764 = vld [vmem:[%s11 + $0x4] sm:$0xf]
      %v1765 = vld [vmem:[%s11 + $0x8] sm:$0xf]
      %v1766 = vld [vmem:[%s11 + $0xc] sm:$0xf]
      %v1767 = vld [vmem:[%s11 + $0x10] sm:$0xf]
      %v1768 = vld [vmem:[%s11 + $0x14] sm:$0xf]
      %v1769 = vld [vmem:[%s11 + $0x18] sm:$0xf]
      %v1770 = vld [vmem:[%s11 + $0x1c] sm:$0xf]
      %v1771 = vld [vmem:[%s12] sm:$0x1]
      %v1772 = vpack.c.bf16 %v1636, %v1633
      %v1773 = vpack.c.bf16 %v1644, %v1641
      %v1774 = vpack.c.bf16 %v1652, %v1649
      %v1775 = vpack.c.bf16 %v1660, %v1657
      %v1776 = vpack.c.bf16 %v1668, %v1665
      %v1777 = vpack.c.bf16 %v1676, %v1673
      %v1778 = vpack.c.bf16 %v1684, %v1681
      %v1779 = vpack.c.bf16 %v1692, %v1689
      %v1780 = vpack.c.bf16 %v1700, %v1697
      %v1781 = vpack.c.bf16 %v1708, %v1705
      %v1782 = vpack.c.bf16 %v1716, %v1713
      %v1783 = vpack.c.bf16 %v1724, %v1721
      %v1784 = vpack.c.bf16 %v1732, %v1729
      %v1785 = vpack.c.bf16 %v1740, %v1737
      %v1786 = vpack.c.bf16 %v1748, %v1745
      %v1787 = vpack.c.bf16 %v1756, %v1753
      %v1789 = vlaneseq
      %v1790 = vshrl.u32 %v1789, 7
      %v1791 = vsub.s32 0, %v1790
      %v1792 = vrot.slane %v1760, %v1791
      %vm1794 = vcmask 64512
      %v1796 = vsel %vm1794, %v1772, 0
      %v1799 = vsel %vm1794, %v1773, 0
      %v1802 = vsel %vm1794, %v1774, 0
      %v1805 = vsel %vm1794, %v1775, 0
      %v1808 = vsel %vm1794, %v1776, 0
      %v1811 = vsel %vm1794, %v1777, 0
      %v1814 = vsel %vm1794, %v1778, 0
      %v1817 = vsel %vm1794, %v1779, 0
      %v1820 = vsel %vm1794, %v1780, 0
      %v1823 = vsel %vm1794, %v1781, 0
      %v1826 = vsel %vm1794, %v1782, 0
      %v1829 = vsel %vm1794, %v1783, 0
      %v1832 = vsel %vm1794, %v1784, 0
      %v1835 = vsel %vm1794, %v1785, 0
      %v1838 = vsel %vm1794, %v1786, 0
      %v1841 = vsel %vm1794, %v1787, 0
      %vm1843 = vcmask 1043456
      %v1845 = vsel %vm1843, %v1759, 0
      %1847 = vmatprep.subr.bf16.mxu0 0
      %1848 = vmatpush1.bf16.msra.mxu0 %v1845
      %1849 = vmatprep.subr.bf16.mxu0 0
      %1850 = vmatpush1.bf16.msra.mxu0 0
      %1851 = vmatprep.subr.bf16.mxu0 0
      %1852 = vmatpush1.bf16.msra.mxu0 0
      %1853 = vmatprep.subr.bf16.mxu0 0
      %1854 = vmatpush1.bf16.msra.mxu0 0
      %1855 = vmatprep.subr.bf16.mxu0 0
      %1856 = vmatpush1.bf16.msra.mxu0 0
      %1857 = vmatprep.subr.bf16.mxu0 0
      %1858 = vmatpush1.bf16.msra.mxu0 0
      %1859 = vmatprep.subr.bf16.mxu0 0
      %1860 = vmatpush1.bf16.msra.mxu0 0
      %1861 = vmatprep.subr.bf16.mxu0 0
      %1862 = vmatpush1.bf16.msra.mxu0 0
      %1863 = vmatprep.subr.bf16.mxu0 0
      %1864 = vmatpush1.bf16.msra.mxu0 0
      %1865 = vmatprep.subr.bf16.mxu0 0
      %1866 = vmatpush1.bf16.msra.mxu0 0
      %1867 = vmatprep.subr.bf16.mxu0 0
      %1868 = vmatpush1.bf16.msra.mxu0 0
      %1869 = vmatprep.subr.bf16.mxu0 0
      %1870 = vmatpush1.bf16.msra.mxu0 0
      %1871 = vmatprep.subr.bf16.mxu0 0
      %1872 = vmatpush1.bf16.msra.mxu0 0
      %1873 = vmatprep.subr.bf16.mxu0 0
      %1874 = vmatpush1.bf16.msra.mxu0 0
      %1875 = vmatprep.subr.bf16.mxu0 0
      %1876 = vmatpush1.bf16.msra.mxu0 0
      %1877 = vmatprep.subr.bf16.mxu0 0
      %1878 = vmatpush1.bf16.msra.mxu0 0
      %1879 = vmatprep.mubr.bf16.mxu0 0
      %1880 = vmatmul.mubr.bf16.gmra.mrb[0].mxu0 %v1796
      %v1881 = vpop.f32.mrb[0].mxu0
      %v1882 = vadd.f32 %v1792, %v1881
      %v1883 = vpop.f32.mrb[0].mxu0
      %v1884 = vpop.f32.mrb[0].mxu0
      %v1885 = vadd.f32 %v1792, %v1884
      %v1886 = vpop.f32.mrb[0].mxu0
      %1887 = vmatprep.mubr.bf16.mxu0 0
      %1888 = vmatmul.mubr.bf16.gmra.mrb[0].mxu0 %v1799
      %v1889 = vpop.f32.mrb[0].mxu0
      %v1890 = vadd.f32 %v1792, %v1889
      %v1891 = vpop.f32.mrb[0].mxu0
      %v1892 = vpop.f32.mrb[0].mxu0
      %v1893 = vadd.f32 %v1792, %v1892
      %v1894 = vpop.f32.mrb[0].mxu0
      %1895 = vmatprep.mubr.bf16.mxu0 0
      %1896 = vmatmul.mubr.bf16.gmra.mrb[0].mxu0 %v1802
      %v1897 = vpop.f32.mrb[0].mxu0
      %v1898 = vadd.f32 %v1792, %v1897
      %v1899 = vpop.f32.mrb[0].mxu0
      %v1900 = vpop.f32.mrb[0].mxu0
      %v1901 = vadd.f32 %v1792, %v1900
      %v1902 = vpop.f32.mrb[0].mxu0
      %1903 = vmatprep.mubr.bf16.mxu0 0
      %1904 = vmatmul.mubr.bf16.gmra.mrb[0].mxu0 %v1805
      %v1905 = vpop.f32.mrb[0].mxu0
      %v1906 = vadd.f32 %v1792, %v1905
      %v1907 = vpop.f32.mrb[0].mxu0
      %v1908 = vpop.f32.mrb[0].mxu0
      %v1909 = vadd.f32 %v1792, %v1908
      %v1910 = vpop.f32.mrb[0].mxu0
      %1911 = vmatprep.mubr.bf16.mxu0 0
      %1912 = vmatmul.mubr.bf16.gmra.mrb[0].mxu0 %v1808
      %v1913 = vpop.f32.mrb[0].mxu0
      %v1914 = vadd.f32 %v1792, %v1913
      %v1915 = vpop.f32.mrb[0].mxu0
      %v1916 = vpop.f32.mrb[0].mxu0
      %v1917 = vadd.f32 %v1792, %v1916
      %v1918 = vpop.f32.mrb[0].mxu0
      %1919 = vmatprep.mubr.bf16.mxu0 0
      %1920 = vmatmul.mubr.bf16.gmra.mrb[0].mxu0 %v1811
      %v1921 = vpop.f32.mrb[0].mxu0
      %v1922 = vadd.f32 %v1792, %v1921
      %v1923 = vpop.f32.mrb[0].mxu0
      %v1924 = vpop.f32.mrb[0].mxu0
      %v1925 = vadd.f32 %v1792, %v1924
      %v1926 = vpop.f32.mrb[0].mxu0
      %1927 = vmatprep.mubr.bf16.mxu0 0
      %1928 = vmatmul.mubr.bf16.gmra.mrb[0].mxu0 %v1814
      %v1929 = vpop.f32.mrb[0].mxu0
      %v1930 = vadd.f32 %v1792, %v1929
      %v1931 = vpop.f32.mrb[0].mxu0
      %v1932 = vpop.f32.mrb[0].mxu0
      %v1933 = vadd.f32 %v1792, %v1932
      %v1934 = vpop.f32.mrb[0].mxu0
      %1935 = vmatprep.mubr.bf16.mxu0 0
      %1936 = vmatmul.mubr.bf16.gmra.mrb[0].mxu0 %v1817
      %v1937 = vpop.f32.mrb[0].mxu0
      %v1938 = vadd.f32 %v1792, %v1937
      %v1939 = vpop.f32.mrb[0].mxu0
      %v1940 = vpop.f32.mrb[0].mxu0
      %v1941 = vadd.f32 %v1792, %v1940
      %v1942 = vpop.f32.mrb[0].mxu0
      %1943 = vmatprep.mubr.bf16.mxu0 0
      %1944 = vmatmul.mubr.bf16.gmra.mrb[0].mxu0 %v1820
      %v1945 = vpop.f32.mrb[0].mxu0
      %v1946 = vadd.f32 %v1792, %v1945
      %v1947 = vpop.f32.mrb[0].mxu0
      %v1948 = vpop.f32.mrb[0].mxu0
      %v1949 = vadd.f32 %v1792, %v1948
      %v1950 = vpop.f32.mrb[0].mxu0
      %1951 = vmatprep.mubr.bf16.mxu0 0
      %1952 = vmatmul.mubr.bf16.gmra.mrb[0].mxu0 %v1823
      %v1953 = vpop.f32.mrb[0].mxu0
      %v1954 = vadd.f32 %v1792, %v1953
      %v1955 = vpop.f32.mrb[0].mxu0
      %v1956 = vpop.f32.mrb[0].mxu0
      %v1957 = vadd.f32 %v1792, %v1956
      %v1958 = vpop.f32.mrb[0].mxu0
      %1959 = vmatprep.mubr.bf16.mxu0 0
      %1960 = vmatmul.mubr.bf16.gmra.mrb[0].mxu0 %v1826
      %v1961 = vpop.f32.mrb[0].mxu0
      %v1962 = vadd.f32 %v1792, %v1961
      %v1963 = vpop.f32.mrb[0].mxu0
      %v1964 = vpop.f32.mrb[0].mxu0
      %v1965 = vadd.f32 %v1792, %v1964
      %v1966 = vpop.f32.mrb[0].mxu0
      %1967 = vmatprep.mubr.bf16.mxu0 0
      %1968 = vmatmul.mubr.bf16.gmra.mrb[0].mxu0 %v1829
      %v1969 = vpop.f32.mrb[0].mxu0
      %v1970 = vadd.f32 %v1792, %v1969
      %v1971 = vpop.f32.mrb[0].mxu0
      %v1972 = vpop.f32.mrb[0].mxu0
      %v1973 = vadd.f32 %v1792, %v1972
      %v1974 = vpop.f32.mrb[0].mxu0
      %1975 = vmatprep.mubr.bf16.mxu0 0
      %1976 = vmatmul.mubr.bf16.gmra.mrb[0].mxu0 %v1832
      %v1977 = vpop.f32.mrb[0].mxu0
      %v1978 = vadd.f32 %v1792, %v1977
      %v1979 = vpop.f32.mrb[0].mxu0
      %v1980 = vpop.f32.mrb[0].mxu0
      %v1981 = vadd.f32 %v1792, %v1980
      %v1982 = vpop.f32.mrb[0].mxu0
      %1983 = vmatprep.mubr.bf16.mxu0 0
      %1984 = vmatmul.mubr.bf16.gmra.mrb[0].mxu0 %v1835
      %v1985 = vpop.f32.mrb[0].mxu0
      %v1986 = vadd.f32 %v1792, %v1985
      %v1987 = vpop.f32.mrb[0].mxu0
      %v1988 = vpop.f32.mrb[0].mxu0
      %v1989 = vadd.f32 %v1792, %v1988
      %v1990 = vpop.f32.mrb[0].mxu0
      %1991 = vmatprep.mubr.bf16.mxu0 0
      %1992 = vmatmul.mubr.bf16.gmra.mrb[0].mxu0 %v1838
      %v1993 = vpop.f32.mrb[0].mxu0
      %v1994 = vadd.f32 %v1792, %v1993
      %v1995 = vpop.f32.mrb[0].mxu0
      %v1996 = vpop.f32.mrb[0].mxu0
      %v1997 = vadd.f32 %v1792, %v1996
      %v1998 = vpop.f32.mrb[0].mxu0
      %1999 = vmatprep.mubr.bf16.mxu0 0
      %2000 = vmatmul.mubr.bf16.gmra.mrb[0].mxu0 %v1841
      %v2001 = vpop.f32.mrb[0].mxu0
      %v2002 = vadd.f32 %v1792, %v2001
      %v2003 = vpop.f32.mrb[0].mxu0
      %v2004 = vpop.f32.mrb[0].mxu0
      %v2005 = vadd.f32 %v1792, %v2004
      %v2006 = vpop.f32.mrb[0].mxu0
      %2007 = vdwg.mxu0
      %v2008 = vxor.u32 %v1882, 2147483648
      %v2009 = vxor.u32 %v1885, 2147483648
      %v2010 = vxor.u32 %v1890, 2147483648
      %v2011 = vxor.u32 %v1893, 2147483648
      %v2012 = vxor.u32 %v1898, 2147483648
      %v2013 = vxor.u32 %v1901, 2147483648
      %v2014 = vxor.u32 %v1906, 2147483648
      %v2015 = vxor.u32 %v1909, 2147483648
      %v2016 = vxor.u32 %v1914, 2147483648
      %v2017 = vxor.u32 %v1917, 2147483648
      %v2018 = vxor.u32 %v1922, 2147483648
      %v2019 = vxor.u32 %v1925, 2147483648
      %v2020 = vxor.u32 %v1930, 2147483648
      %v2021 = vxor.u32 %v1933, 2147483648
      %v2022 = vxor.u32 %v1938, 2147483648
      %v2023 = vxor.u32 %v1941, 2147483648
      %v2024 = vxor.u32 %v1946, 2147483648
      %v2025 = vxor.u32 %v1949, 2147483648
      %v2026 = vxor.u32 %v1954, 2147483648
      %v2027 = vxor.u32 %v1957, 2147483648
      %v2028 = vxor.u32 %v1962, 2147483648
      %v2029 = vxor.u32 %v1965, 2147483648
      %v2030 = vxor.u32 %v1970, 2147483648
      %v2031 = vxor.u32 %v1973, 2147483648
      %v2032 = vxor.u32 %v1978, 2147483648
      %v2033 = vxor.u32 %v1981, 2147483648
      %v2034 = vxor.u32 %v1986, 2147483648
      %v2035 = vxor.u32 %v1989, 2147483648
      %v2036 = vxor.u32 %v1994, 2147483648
      %v2037 = vxor.u32 %v1997, 2147483648
      %v2038 = vxor.u32 %v2002, 2147483648
      %v2039 = vxor.u32 %v2005, 2147483648
      %v2040 = vmul.f32 %v2008, 1.442695
      %v2041 = vpow.pop %v2040
      %v2042 = vmul.f32 %v2009, 1.442695
      %v2043 = vpow.pop %v2042
      %v2044 = vmul.f32 %v2010, 1.442695
      %v2045 = vpow.pop %v2044
      %v2046 = vmul.f32 %v2011, 1.442695
      %v2047 = vpow.pop %v2046
      %v2048 = vmul.f32 %v2012, 1.442695
      %v2049 = vpow.pop %v2048
      %v2050 = vmul.f32 %v2013, 1.442695
      %v2051 = vpow.pop %v2050
      %v2052 = vmul.f32 %v2014, 1.442695
      %v2053 = vpow.pop %v2052
      %v2054 = vmul.f32 %v2015, 1.442695
      %v2055 = vpow.pop %v2054
      %v2056 = vmul.f32 %v2016, 1.442695
      %v2057 = vpow.pop %v2056
      %v2058 = vmul.f32 %v2017, 1.442695
      %v2059 = vpow.pop %v2058
      %v2060 = vmul.f32 %v2018, 1.442695
      %v2061 = vpow.pop %v2060
      %v2062 = vmul.f32 %v2019, 1.442695
      %v2063 = vpow.pop %v2062
      %v2064 = vmul.f32 %v2020, 1.442695
      %v2065 = vpow.pop %v2064
      %v2066 = vmul.f32 %v2021, 1.442695
      %v2067 = vpow.pop %v2066
      %v2068 = vmul.f32 %v2022, 1.442695
      %v2069 = vpow.pop %v2068
      %v2070 = vmul.f32 %v2023, 1.442695
      %v2071 = vpow.pop %v2070
      %v2072 = vmul.f32 %v2024, 1.442695
      %v2073 = vpow.pop %v2072
      %v2074 = vmul.f32 %v2025, 1.442695
      %v2075 = vpow.pop %v2074
      %v2076 = vmul.f32 %v2026, 1.442695
      %v2077 = vpow.pop %v2076
      %v2078 = vmul.f32 %v2027, 1.442695
      %v2079 = vpow.pop %v2078
      %v2080 = vmul.f32 %v2028, 1.442695
      %v2081 = vpow.pop %v2080
      %v2082 = vmul.f32 %v2029, 1.442695
      %v2083 = vpow.pop %v2082
      %v2084 = vmul.f32 %v2030, 1.442695
      %v2085 = vpow.pop %v2084
      %v2086 = vmul.f32 %v2031, 1.442695
      %v2087 = vpow.pop %v2086
      %v2088 = vmul.f32 %v2032, 1.442695
      %v2089 = vpow.pop %v2088
      %v2090 = vmul.f32 %v2033, 1.442695
      %v2091 = vpow.pop %v2090
      %v2092 = vmul.f32 %v2034, 1.442695
      %v2093 = vpow.pop %v2092
      %v2094 = vmul.f32 %v2035, 1.442695
      %v2095 = vpow.pop %v2094
      %v2096 = vmul.f32 %v2036, 1.442695
      %v2097 = vpow.pop %v2096
      %v2098 = vmul.f32 %v2037, 1.442695
      %v2099 = vpow.pop %v2098
      %v2100 = vmul.f32 %v2038, 1.442695
      %v2101 = vpow.pop %v2100
      %v2102 = vmul.f32 %v2039, 1.442695
      %v2103 = vpow.pop %v2102
      %v2104 = vadd.f32 %v2041, 1.0
      %v2105 = vadd.f32 %v2043, 1.0
      %v2106 = vadd.f32 %v2045, 1.0
      %v2107 = vadd.f32 %v2047, 1.0
      %v2108 = vadd.f32 %v2049, 1.0
      %v2109 = vadd.f32 %v2051, 1.0
      %v2110 = vadd.f32 %v2053, 1.0
      %v2111 = vadd.f32 %v2055, 1.0
      %v2112 = vadd.f32 %v2057, 1.0
      %v2113 = vadd.f32 %v2059, 1.0
      %v2114 = vadd.f32 %v2061, 1.0
      %v2115 = vadd.f32 %v2063, 1.0
      %v2116 = vadd.f32 %v2065, 1.0
      %v2117 = vadd.f32 %v2067, 1.0
      %v2118 = vadd.f32 %v2069, 1.0
      %v2119 = vadd.f32 %v2071, 1.0
      %v2120 = vadd.f32 %v2073, 1.0
      %v2121 = vadd.f32 %v2075, 1.0
      %v2122 = vadd.f32 %v2077, 1.0
      %v2123 = vadd.f32 %v2079, 1.0
      %v2124 = vadd.f32 %v2081, 1.0
      %v2125 = vadd.f32 %v2083, 1.0
      %v2126 = vadd.f32 %v2085, 1.0
      %v2127 = vadd.f32 %v2087, 1.0
      %v2128 = vadd.f32 %v2089, 1.0
      %v2129 = vadd.f32 %v2091, 1.0
      %v2130 = vadd.f32 %v2093, 1.0
      %v2131 = vadd.f32 %v2095, 1.0
      %v2132 = vadd.f32 %v2097, 1.0
      %v2133 = vadd.f32 %v2099, 1.0
      %v2134 = vadd.f32 %v2101, 1.0
      %v2135 = vadd.f32 %v2103, 1.0
      %v2136 = vrcp.pop %v2104
      %v2137 = vmul.f32 1.0, %v2136
      %v2138 = vrcp.pop %v2105
      %v2139 = vmul.f32 1.0, %v2138
      %v2140 = vrcp.pop %v2106
      %v2141 = vmul.f32 1.0, %v2140
      %v2142 = vrcp.pop %v2107
      %v2143 = vmul.f32 1.0, %v2142
      %v2144 = vrcp.pop %v2108
      %v2145 = vmul.f32 1.0, %v2144
      %v2146 = vrcp.pop %v2109
      %v2147 = vmul.f32 1.0, %v2146
      %v2148 = vrcp.pop %v2110
      %v2149 = vmul.f32 1.0, %v2148
      %v2150 = vrcp.pop %v2111
      %v2151 = vmul.f32 1.0, %v2150
      %v2152 = vrcp.pop %v2112
      %v2153 = vmul.f32 1.0, %v2152
      %v2154 = vrcp.pop %v2113
      %v2155 = vmul.f32 1.0, %v2154
      %v2156 = vrcp.pop %v2114
      %v2157 = vmul.f32 1.0, %v2156
      %v2158 = vrcp.pop %v2115
      %v2159 = vmul.f32 1.0, %v2158
      %v2160 = vrcp.pop %v2116
      %v2161 = vmul.f32 1.0, %v2160
      %v2162 = vrcp.pop %v2117
      %v2163 = vmul.f32 1.0, %v2162
      %v2164 = vrcp.pop %v2118
      %v2165 = vmul.f32 1.0, %v2164
      %v2166 = vrcp.pop %v2119
      %v2167 = vmul.f32 1.0, %v2166
      %v2168 = vrcp.pop %v2120
      %v2169 = vmul.f32 1.0, %v2168
      %v2170 = vrcp.pop %v2121
      %v2171 = vmul.f32 1.0, %v2170
      %v2172 = vrcp.pop %v2122
      %v2173 = vmul.f32 1.0, %v2172
      %v2174 = vrcp.pop %v2123
      %v2175 = vmul.f32 1.0, %v2174
      %v2176 = vrcp.pop %v2124
      %v2177 = vmul.f32 1.0, %v2176
      %v2178 = vrcp.pop %v2125
      %v2179 = vmul.f32 1.0, %v2178
      %v2180 = vrcp.pop %v2126
      %v2181 = vmul.f32 1.0, %v2180
      %v2182 = vrcp.pop %v2127
      %v2183 = vmul.f32 1.0, %v2182
      %v2184 = vrcp.pop %v2128
      %v2185 = vmul.f32 1.0, %v2184
      %v2186 = vrcp.pop %v2129
      %v2187 = vmul.f32 1.0, %v2186
      %v2188 = vrcp.pop %v2130
      %v2189 = vmul.f32 1.0, %v2188
      %v2190 = vrcp.pop %v2131
      %v2191 = vmul.f32 1.0, %v2190
      %v2192 = vrcp.pop %v2132
      %v2193 = vmul.f32 1.0, %v2192
      %v2194 = vrcp.pop %v2133
      %v2195 = vmul.f32 1.0, %v2194
      %v2196 = vrcp.pop %v2134
      %v2197 = vmul.f32 1.0, %v2196
      %v2198 = vrcp.pop %v2135
      %v2199 = vmul.f32 1.0, %v2198
      %v2200 = vmul.f32 %v1882, %v2137
      %v2201 = vmul.f32 %v1885, %v2139
      %v2202 = vmul.f32 %v1890, %v2141
      %v2203 = vmul.f32 %v1893, %v2143
      %v2204 = vmul.f32 %v1898, %v2145
      %v2205 = vmul.f32 %v1901, %v2147
      %v2206 = vmul.f32 %v1906, %v2149
      %v2207 = vmul.f32 %v1909, %v2151
      %v2208 = vmul.f32 %v1914, %v2153
      %v2209 = vmul.f32 %v1917, %v2155
      %v2210 = vmul.f32 %v1922, %v2157
      %v2211 = vmul.f32 %v1925, %v2159
      %v2212 = vmul.f32 %v1930, %v2161
      %v2213 = vmul.f32 %v1933, %v2163
      %v2214 = vmul.f32 %v1938, %v2165
      %v2215 = vmul.f32 %v1941, %v2167
      %v2216 = vmul.f32 %v1946, %v2169
      %v2217 = vmul.f32 %v1949, %v2171
      %v2218 = vmul.f32 %v1954, %v2173
      %v2219 = vmul.f32 %v1957, %v2175
      %v2220 = vmul.f32 %v1962, %v2177
      %v2221 = vmul.f32 %v1965, %v2179
      %v2222 = vmul.f32 %v1970, %v2181
      %v2223 = vmul.f32 %v1973, %v2183
      %v2224 = vmul.f32 %v1978, %v2185
      %v2225 = vmul.f32 %v1981, %v2187
      %v2226 = vmul.f32 %v1986, %v2189
      %v2227 = vmul.f32 %v1989, %v2191
      %v2228 = vmul.f32 %v1994, %v2193
      %v2229 = vmul.f32 %v1997, %v2195
      %v2230 = vmul.f32 %v2002, %v2197
      %v2231 = vmul.f32 %v2005, %v2199
      %v2232 = vlaneseq
      %v2233 = vshrl.u32 %v2232, 7
      %v2234 = vsub.s32 0, %v2233
      %v2235 = vrot.slane %v1761, %v2234
      %v2236 = vmul.f32 %v2200, %v2235
      %v2237 = vmul.f32 %v2201, %v2235
      %v2238 = vmul.f32 %v2202, %v2235
      %v2239 = vmul.f32 %v2203, %v2235
      %v2240 = vmul.f32 %v2204, %v2235
      %v2241 = vmul.f32 %v2205, %v2235
      %v2242 = vmul.f32 %v2206, %v2235
      %v2243 = vmul.f32 %v2207, %v2235
      %v2244 = vmul.f32 %v2208, %v2235
      %v2245 = vmul.f32 %v2209, %v2235
      %v2246 = vmul.f32 %v2210, %v2235
      %v2247 = vmul.f32 %v2211, %v2235
      %v2248 = vmul.f32 %v2212, %v2235
      %v2249 = vmul.f32 %v2213, %v2235
      %v2250 = vmul.f32 %v2214, %v2235
      %v2251 = vmul.f32 %v2215, %v2235
      %v2252 = vmul.f32 %v2216, %v2235
      %v2253 = vmul.f32 %v2217, %v2235
      %v2254 = vmul.f32 %v2218, %v2235
      %v2255 = vmul.f32 %v2219, %v2235
      %v2256 = vmul.f32 %v2220, %v2235
      %v2257 = vmul.f32 %v2221, %v2235
      %v2258 = vmul.f32 %v2222, %v2235
      %v2259 = vmul.f32 %v2223, %v2235
      %v2260 = vmul.f32 %v2224, %v2235
      %v2261 = vmul.f32 %v2225, %v2235
      %v2262 = vmul.f32 %v2226, %v2235
      %v2263 = vmul.f32 %v2227, %v2235
      %v2264 = vmul.f32 %v2228, %v2235
      %v2265 = vmul.f32 %v2229, %v2235
      %v2266 = vmul.f32 %v2230, %v2235
      %v2267 = vmul.f32 %v2231, %v2235
      %v2268 = vrot.slane %v2200, 1
      %v2269 = vrot.slane %v2201, 1
      %v2270 = vrot.slane %v2202, 1
      %v2271 = vrot.slane %v2203, 1
      %v2272 = vrot.slane %v2204, 1
      %v2273 = vrot.slane %v2205, 1
      %v2274 = vrot.slane %v2206, 1
      %v2275 = vrot.slane %v2207, 1
      %v2276 = vrot.slane %v2208, 1
      %v2277 = vrot.slane %v2209, 1
      %v2278 = vrot.slane %v2210, 1
      %v2279 = vrot.slane %v2211, 1
      %v2280 = vrot.slane %v2212, 1
      %v2281 = vrot.slane %v2213, 1
      %v2282 = vrot.slane %v2214, 1
      %v2283 = vrot.slane %v2215, 1
      %v2284 = vrot.slane %v2216, 1
      %v2285 = vrot.slane %v2217, 1
      %v2286 = vrot.slane %v2218, 1
      %v2287 = vrot.slane %v2219, 1
      %v2288 = vrot.slane %v2220, 1
      %v2289 = vrot.slane %v2221, 1
      %v2290 = vrot.slane %v2222, 1
      %v2291 = vrot.slane %v2223, 1
      %v2292 = vrot.slane %v2224, 1
      %v2293 = vrot.slane %v2225, 1
      %v2294 = vrot.slane %v2226, 1
      %v2295 = vrot.slane %v2227, 1
      %v2296 = vrot.slane %v2228, 1
      %v2297 = vrot.slane %v2229, 1
      %v2298 = vrot.slane %v2230, 1
      %v2299 = vrot.slane %v2231, 1
      %v2300 = vsel %vm1016, %v2298, %v2299
      %v2301 = vsel %vm1016, %v2297, %v2298
      %v2302 = vsel %vm1016, %v2296, %v2297
      %v2303 = vsel %vm1016, %v2295, %v2296
      %v2304 = vsel %vm1016, %v2294, %v2295
      %v2305 = vsel %vm1016, %v2293, %v2294
      %v2306 = vsel %vm1016, %v2292, %v2293
      %v2307 = vsel %vm1016, %v2291, %v2292
      %v2308 = vsel %vm1016, %v2290, %v2291
      %v2309 = vsel %vm1016, %v2289, %v2290
      %v2310 = vsel %vm1016, %v2288, %v2289
      %v2311 = vsel %vm1016, %v2287, %v2288
      %v2312 = vsel %vm1016, %v2286, %v2287
      %v2313 = vsel %vm1016, %v2285, %v2286
      %v2314 = vsel %vm1016, %v2284, %v2285
      %v2315 = vsel %vm1016, %v2283, %v2284
      %v2316 = vsel %vm1016, %v2282, %v2283
      %v2317 = vsel %vm1016, %v2281, %v2282
      %v2318 = vsel %vm1016, %v2280, %v2281
      %v2319 = vsel %vm1016, %v2279, %v2280
      %v2320 = vsel %vm1016, %v2278, %v2279
      %v2321 = vsel %vm1016, %v2277, %v2278
      %v2322 = vsel %vm1016, %v2276, %v2277
      %v2323 = vsel %vm1016, %v2275, %v2276
      %v2324 = vsel %vm1016, %v2274, %v2275
      %v2325 = vsel %vm1016, %v2273, %v2274
      %v2326 = vsel %vm1016, %v2272, %v2273
      %v2327 = vsel %vm1016, %v2271, %v2272
      %v2328 = vsel %vm1016, %v2270, %v2271
      %v2329 = vsel %vm1016, %v2269, %v2270
      %v2330 = vsel %vm1016, %v2268, %v2269
      %v2331 = vsel %vm1016, %v2299, %v2268
      %v2332 = vlaneseq
      %v2333 = vshrl.u32 %v2332, 7
      %v2334 = vsub.s32 1, %v2333
      %v2335 = vrot.slane %v1761, %v2334
      %v2336 = vmul.f32 %v2330, %v2335
      %v2337 = vmul.f32 %v2329, %v2335
      %v2338 = vmul.f32 %v2328, %v2335
      %v2339 = vmul.f32 %v2327, %v2335
      %v2340 = vmul.f32 %v2326, %v2335
      %v2341 = vmul.f32 %v2325, %v2335
      %v2342 = vmul.f32 %v2324, %v2335
      %v2343 = vmul.f32 %v2323, %v2335
      %v2344 = vmul.f32 %v2322, %v2335
      %v2345 = vmul.f32 %v2321, %v2335
      %v2346 = vmul.f32 %v2320, %v2335
      %v2347 = vmul.f32 %v2319, %v2335
      %v2348 = vmul.f32 %v2318, %v2335
      %v2349 = vmul.f32 %v2317, %v2335
      %v2350 = vmul.f32 %v2316, %v2335
      %v2351 = vmul.f32 %v2315, %v2335
      %v2352 = vmul.f32 %v2314, %v2335
      %v2353 = vmul.f32 %v2313, %v2335
      %v2354 = vmul.f32 %v2312, %v2335
      %v2355 = vmul.f32 %v2311, %v2335
      %v2356 = vmul.f32 %v2310, %v2335
      %v2357 = vmul.f32 %v2309, %v2335
      %v2358 = vmul.f32 %v2308, %v2335
      %v2359 = vmul.f32 %v2307, %v2335
      %v2360 = vmul.f32 %v2306, %v2335
      %v2361 = vmul.f32 %v2305, %v2335
      %v2362 = vmul.f32 %v2304, %v2335
      %v2363 = vmul.f32 %v2303, %v2335
      %v2364 = vmul.f32 %v2302, %v2335
      %v2365 = vmul.f32 %v2301, %v2335
      %v2366 = vmul.f32 %v2300, %v2335
      %v2367 = vmul.f32 %v2331, %v2335
      %v2368 = vadd.f32 %v2236, %v2336
      %v2369 = vadd.f32 %v2237, %v2337
      %v2370 = vadd.f32 %v2238, %v2338
      %v2371 = vadd.f32 %v2239, %v2339
      %v2372 = vadd.f32 %v2240, %v2340
      %v2373 = vadd.f32 %v2241, %v2341
      %v2374 = vadd.f32 %v2242, %v2342
      %v2375 = vadd.f32 %v2243, %v2343
      %v2376 = vadd.f32 %v2244, %v2344
      %v2377 = vadd.f32 %v2245, %v2345
      %v2378 = vadd.f32 %v2246, %v2346
      %v2379 = vadd.f32 %v2247, %v2347
      %v2380 = vadd.f32 %v2248, %v2348
      %v2381 = vadd.f32 %v2249, %v2349
      %v2382 = vadd.f32 %v2250, %v2350
      %v2383 = vadd.f32 %v2251, %v2351
      %v2384 = vadd.f32 %v2252, %v2352
      %v2385 = vadd.f32 %v2253, %v2353
      %v2386 = vadd.f32 %v2254, %v2354
      %v2387 = vadd.f32 %v2255, %v2355
      %v2388 = vadd.f32 %v2256, %v2356
      %v2389 = vadd.f32 %v2257, %v2357
      %v2390 = vadd.f32 %v2258, %v2358
      %v2391 = vadd.f32 %v2259, %v2359
      %v2392 = vadd.f32 %v2260, %v2360
      %v2393 = vadd.f32 %v2261, %v2361
      %v2394 = vadd.f32 %v2262, %v2362
      %v2395 = vadd.f32 %v2263, %v2363
      %v2396 = vadd.f32 %v2264, %v2364
      %v2397 = vadd.f32 %v2265, %v2365
      %v2398 = vadd.f32 %v2266, %v2366
      %v2399 = vadd.f32 %v2267, %v2367
      %v2400 = vlaneseq
      %v2401 = vshrl.u32 %v2400, 7
      %v2402 = vsub.s32 2, %v2401
      %v2403 = vrot.slane %v1761, %v2402
      %v2404 = vmul.f32 %v2202, %v2403
      %v2405 = vmul.f32 %v2203, %v2403
      %v2406 = vmul.f32 %v2204, %v2403
      %v2407 = vmul.f32 %v2205, %v2403
      %v2408 = vmul.f32 %v2206, %v2403
      %v2409 = vmul.f32 %v2207, %v2403
      %v2410 = vmul.f32 %v2208, %v2403
      %v2411 = vmul.f32 %v2209, %v2403
      %v2412 = vmul.f32 %v2210, %v2403
      %v2413 = vmul.f32 %v2211, %v2403
      %v2414 = vmul.f32 %v2212, %v2403
      %v2415 = vmul.f32 %v2213, %v2403
      %v2416 = vmul.f32 %v2214, %v2403
      %v2417 = vmul.f32 %v2215, %v2403
      %v2418 = vmul.f32 %v2216, %v2403
      %v2419 = vmul.f32 %v2217, %v2403
      %v2420 = vmul.f32 %v2218, %v2403
      %v2421 = vmul.f32 %v2219, %v2403
      %v2422 = vmul.f32 %v2220, %v2403
      %v2423 = vmul.f32 %v2221, %v2403
      %v2424 = vmul.f32 %v2222, %v2403
      %v2425 = vmul.f32 %v2223, %v2403
      %v2426 = vmul.f32 %v2224, %v2403
      %v2427 = vmul.f32 %v2225, %v2403
      %v2428 = vmul.f32 %v2226, %v2403
      %v2429 = vmul.f32 %v2227, %v2403
      %v2430 = vmul.f32 %v2228, %v2403
      %v2431 = vmul.f32 %v2229, %v2403
      %v2432 = vmul.f32 %v2230, %v2403
      %v2433 = vmul.f32 %v2231, %v2403
      %v2434 = vmul.f32 %v2200, %v2403
      %v2435 = vmul.f32 %v2201, %v2403
      %v2436 = vadd.f32 %v2368, %v2404
      %v2437 = vadd.f32 %v2369, %v2405
      %v2438 = vadd.f32 %v2370, %v2406
      %v2439 = vadd.f32 %v2371, %v2407
      %v2440 = vadd.f32 %v2372, %v2408
      %v2441 = vadd.f32 %v2373, %v2409
      %v2442 = vadd.f32 %v2374, %v2410
      %v2443 = vadd.f32 %v2375, %v2411
      %v2444 = vadd.f32 %v2376, %v2412
      %v2445 = vadd.f32 %v2377, %v2413
      %v2446 = vadd.f32 %v2378, %v2414
      %v2447 = vadd.f32 %v2379, %v2415
      %v2448 = vadd.f32 %v2380, %v2416
      %v2449 = vadd.f32 %v2381, %v2417
      %v2450 = vadd.f32 %v2382, %v2418
      %v2451 = vadd.f32 %v2383, %v2419
      %v2452 = vadd.f32 %v2384, %v2420
      %v2453 = vadd.f32 %v2385, %v2421
      %v2454 = vadd.f32 %v2386, %v2422
      %v2455 = vadd.f32 %v2387, %v2423
      %v2456 = vadd.f32 %v2388, %v2424
      %v2457 = vadd.f32 %v2389, %v2425
      %v2458 = vadd.f32 %v2390, %v2426
      %v2459 = vadd.f32 %v2391, %v2427
      %v2460 = vadd.f32 %v2392, %v2428
      %v2461 = vadd.f32 %v2393, %v2429
      %v2462 = vadd.f32 %v2394, %v2430
      %v2463 = vadd.f32 %v2395, %v2431
      %v2464 = vadd.f32 %v2396, %v2432
      %v2465 = vadd.f32 %v2397, %v2433
      %v2466 = vadd.f32 %v2398, %v2434
      %v2467 = vadd.f32 %v2399, %v2435
      %v2468 = vlaneseq
      %v2469 = vshrl.u32 %v2468, 7
      %v2470 = vsub.s32 3, %v2469
      %v2471 = vrot.slane %v1761, %v2470
      %v2472 = vmul.f32 %v2328, %v2471
      %v2473 = vmul.f32 %v2327, %v2471
      %v2474 = vmul.f32 %v2326, %v2471
      %v2475 = vmul.f32 %v2325, %v2471
      %v2476 = vmul.f32 %v2324, %v2471
      %v2477 = vmul.f32 %v2323, %v2471
      %v2478 = vmul.f32 %v2322, %v2471
      %v2479 = vmul.f32 %v2321, %v2471
      %v2480 = vmul.f32 %v2320, %v2471
      %v2481 = vmul.f32 %v2319, %v2471
      %v2482 = vmul.f32 %v2318, %v2471
      %v2483 = vmul.f32 %v2317, %v2471
      %v2484 = vmul.f32 %v2316, %v2471
      %v2485 = vmul.f32 %v2315, %v2471
      %v2486 = vmul.f32 %v2314, %v2471
      %v2487 = vmul.f32 %v2313, %v2471
      %v2488 = vmul.f32 %v2312, %v2471
      %v2489 = vmul.f32 %v2311, %v2471
      %v2490 = vmul.f32 %v2310, %v2471
      %v2491 = vmul.f32 %v2309, %v2471
      %v2492 = vmul.f32 %v2308, %v2471
      %v2493 = vmul.f32 %v2307, %v2471
      %v2494 = vmul.f32 %v2306, %v2471
      %v2495 = vmul.f32 %v2305, %v2471
      %v2496 = vmul.f32 %v2304, %v2471
      %v2497 = vmul.f32 %v2303, %v2471
      %v2498 = vmul.f32 %v2302, %v2471
      %v2499 = vmul.f32 %v2301, %v2471
      %v2500 = vmul.f32 %v2300, %v2471
      %v2501 = vmul.f32 %v2331, %v2471
      %v2502 = vmul.f32 %v2330, %v2471
      %v2503 = vmul.f32 %v2329, %v2471
      %v2504 = vadd.f32 %v2436, %v2472
      %v2505 = vadd.f32 %v2437, %v2473
      %v2506 = vadd.f32 %v2438, %v2474
      %v2507 = vadd.f32 %v2439, %v2475
      %v2508 = vadd.f32 %v2440, %v2476
      %v2509 = vadd.f32 %v2441, %v2477
      %v2510 = vadd.f32 %v2442, %v2478
      %v2511 = vadd.f32 %v2443, %v2479
      %v2512 = vadd.f32 %v2444, %v2480
      %v2513 = vadd.f32 %v2445, %v2481
      %v2514 = vadd.f32 %v2446, %v2482
      %v2515 = vadd.f32 %v2447, %v2483
      %v2516 = vadd.f32 %v2448, %v2484
      %v2517 = vadd.f32 %v2449, %v2485
      %v2518 = vadd.f32 %v2450, %v2486
      %v2519 = vadd.f32 %v2451, %v2487
      %v2520 = vadd.f32 %v2452, %v2488
      %v2521 = vadd.f32 %v2453, %v2489
      %v2522 = vadd.f32 %v2454, %v2490
      %v2523 = vadd.f32 %v2455, %v2491
      %v2524 = vadd.f32 %v2456, %v2492
      %v2525 = vadd.f32 %v2457, %v2493
      %v2526 = vadd.f32 %v2458, %v2494
      %v2527 = vadd.f32 %v2459, %v2495
      %v2528 = vadd.f32 %v2460, %v2496
      %v2529 = vadd.f32 %v2461, %v2497
      %v2530 = vadd.f32 %v2462, %v2498
      %v2531 = vadd.f32 %v2463, %v2499
      %v2532 = vadd.f32 %v2464, %v2500
      %v2533 = vadd.f32 %v2465, %v2501
      %v2534 = vadd.f32 %v2466, %v2502
      %v2535 = vadd.f32 %v2467, %v2503
      %v2537 = vlaneseq
      %v2538 = vshrl.u32 %v2537, 7
      %v2539 = vsub.s32 0, %v2538
      %v2540 = vrot.slane %v1762, %v2539
      %v2542 = vadd.f32 %v2504, %v2540
      %v2543 = vadd.f32 %v2505, %v2540
      %v2544 = vadd.f32 %v2506, %v2540
      %v2545 = vadd.f32 %v2507, %v2540
      %v2546 = vadd.f32 %v2508, %v2540
      %v2547 = vadd.f32 %v2509, %v2540
      %v2548 = vadd.f32 %v2510, %v2540
      %v2549 = vadd.f32 %v2511, %v2540
      %v2550 = vadd.f32 %v2512, %v2540
      %v2551 = vadd.f32 %v2513, %v2540
      %v2552 = vadd.f32 %v2514, %v2540
      %v2553 = vadd.f32 %v2515, %v2540
      %v2554 = vadd.f32 %v2516, %v2540
      %v2555 = vadd.f32 %v2517, %v2540
      %v2556 = vadd.f32 %v2518, %v2540
      %v2557 = vadd.f32 %v2519, %v2540
      %v2558 = vadd.f32 %v2520, %v2540
      %v2559 = vadd.f32 %v2521, %v2540
      %v2560 = vadd.f32 %v2522, %v2540
      %v2561 = vadd.f32 %v2523, %v2540
      %v2562 = vadd.f32 %v2524, %v2540
      %v2563 = vadd.f32 %v2525, %v2540
      %v2564 = vadd.f32 %v2526, %v2540
      %v2565 = vadd.f32 %v2527, %v2540
      %v2566 = vadd.f32 %v2528, %v2540
      %v2567 = vadd.f32 %v2529, %v2540
      %v2568 = vadd.f32 %v2530, %v2540
      %v2569 = vadd.f32 %v2531, %v2540
      %v2570 = vadd.f32 %v2532, %v2540
      %v2571 = vadd.f32 %v2533, %v2540
      %v2572 = vadd.f32 %v2534, %v2540
      %v2573 = vadd.f32 %v2535, %v2540
      %v2574 = vxor.u32 %v2542, 2147483648
      %v2575 = vxor.u32 %v2543, 2147483648
      %v2576 = vxor.u32 %v2544, 2147483648
      %v2577 = vxor.u32 %v2545, 2147483648
      %v2578 = vxor.u32 %v2546, 2147483648
      %v2579 = vxor.u32 %v2547, 2147483648
      %v2580 = vxor.u32 %v2548, 2147483648
      %v2581 = vxor.u32 %v2549, 2147483648
      %v2582 = vxor.u32 %v2550, 2147483648
      %v2583 = vxor.u32 %v2551, 2147483648
      %v2584 = vxor.u32 %v2552, 2147483648
      %v2585 = vxor.u32 %v2553, 2147483648
      %v2586 = vxor.u32 %v2554, 2147483648
      %v2587 = vxor.u32 %v2555, 2147483648
      %v2588 = vxor.u32 %v2556, 2147483648
      %v2589 = vxor.u32 %v2557, 2147483648
      %v2590 = vxor.u32 %v2558, 2147483648
      %v2591 = vxor.u32 %v2559, 2147483648
      %v2592 = vxor.u32 %v2560, 2147483648
      %v2593 = vxor.u32 %v2561, 2147483648
      %v2594 = vxor.u32 %v2562, 2147483648
      %v2595 = vxor.u32 %v2563, 2147483648
      %v2596 = vxor.u32 %v2564, 2147483648
      %v2597 = vxor.u32 %v2565, 2147483648
      %v2598 = vxor.u32 %v2566, 2147483648
      %v2599 = vxor.u32 %v2567, 2147483648
      %v2600 = vxor.u32 %v2568, 2147483648
      %v2601 = vxor.u32 %v2569, 2147483648
      %v2602 = vxor.u32 %v2570, 2147483648
      %v2603 = vxor.u32 %v2571, 2147483648
      %v2604 = vxor.u32 %v2572, 2147483648
      %v2605 = vxor.u32 %v2573, 2147483648
      %v2606 = vmul.f32 %v2574, 1.442695
      %v2607 = vpow.pop %v2606
      %v2608 = vmul.f32 %v2575, 1.442695
      %v2609 = vpow.pop %v2608
      %v2610 = vmul.f32 %v2576, 1.442695
      %v2611 = vpow.pop %v2610
      %v2612 = vmul.f32 %v2577, 1.442695
      %v2613 = vpow.pop %v2612
      %v2614 = vmul.f32 %v2578, 1.442695
      %v2615 = vpow.pop %v2614
      %v2616 = vmul.f32 %v2579, 1.442695
      %v2617 = vpow.pop %v2616
      %v2618 = vmul.f32 %v2580, 1.442695
      %v2619 = vpow.pop %v2618
      %v2620 = vmul.f32 %v2581, 1.442695
      %v2621 = vpow.pop %v2620
      %v2622 = vmul.f32 %v2582, 1.442695
      %v2623 = vpow.pop %v2622
      %v2624 = vmul.f32 %v2583, 1.442695
      %v2625 = vpow.pop %v2624
      %v2626 = vmul.f32 %v2584, 1.442695
      %v2627 = vpow.pop %v2626
      %v2628 = vmul.f32 %v2585, 1.442695
      %v2629 = vpow.pop %v2628
      %v2630 = vmul.f32 %v2586, 1.442695
      %v2631 = vpow.pop %v2630
      %v2632 = vmul.f32 %v2587, 1.442695
      %v2633 = vpow.pop %v2632
      %v2634 = vmul.f32 %v2588, 1.442695
      %v2635 = vpow.pop %v2634
      %v2636 = vmul.f32 %v2589, 1.442695
      %v2637 = vpow.pop %v2636
      %v2638 = vmul.f32 %v2590, 1.442695
      %v2639 = vpow.pop %v2638
      %v2640 = vmul.f32 %v2591, 1.442695
      %v2641 = vpow.pop %v2640
      %v2642 = vmul.f32 %v2592, 1.442695
      %v2643 = vpow.pop %v2642
      %v2644 = vmul.f32 %v2593, 1.442695
      %v2645 = vpow.pop %v2644
      %v2646 = vmul.f32 %v2594, 1.442695
      %v2647 = vpow.pop %v2646
      %v2648 = vmul.f32 %v2595, 1.442695
      %v2649 = vpow.pop %v2648
      %v2650 = vmul.f32 %v2596, 1.442695
      %v2651 = vpow.pop %v2650
      %v2652 = vmul.f32 %v2597, 1.442695
      %v2653 = vpow.pop %v2652
      %v2654 = vmul.f32 %v2598, 1.442695
      %v2655 = vpow.pop %v2654
      %v2656 = vmul.f32 %v2599, 1.442695
      %v2657 = vpow.pop %v2656
      %v2658 = vmul.f32 %v2600, 1.442695
      %v2659 = vpow.pop %v2658
      %v2660 = vmul.f32 %v2601, 1.442695
      %v2661 = vpow.pop %v2660
      %v2662 = vmul.f32 %v2602, 1.442695
      %v2663 = vpow.pop %v2662
      %v2664 = vmul.f32 %v2603, 1.442695
      %v2665 = vpow.pop %v2664
      %v2666 = vmul.f32 %v2604, 1.442695
      %v2667 = vpow.pop %v2666
      %v2668 = vmul.f32 %v2605, 1.442695
      %v2669 = vpow.pop %v2668
      %v2670 = vadd.f32 %v2607, 1.0
      %v2671 = vadd.f32 %v2609, 1.0
      %v2672 = vadd.f32 %v2611, 1.0
      %v2673 = vadd.f32 %v2613, 1.0
      %v2674 = vadd.f32 %v2615, 1.0
      %v2675 = vadd.f32 %v2617, 1.0
      %v2676 = vadd.f32 %v2619, 1.0
      %v2677 = vadd.f32 %v2621, 1.0
      %v2678 = vadd.f32 %v2623, 1.0
      %v2679 = vadd.f32 %v2625, 1.0
      %v2680 = vadd.f32 %v2627, 1.0
      %v2681 = vadd.f32 %v2629, 1.0
      %v2682 = vadd.f32 %v2631, 1.0
      %v2683 = vadd.f32 %v2633, 1.0
      %v2684 = vadd.f32 %v2635, 1.0
      %v2685 = vadd.f32 %v2637, 1.0
      %v2686 = vadd.f32 %v2639, 1.0
      %v2687 = vadd.f32 %v2641, 1.0
      %v2688 = vadd.f32 %v2643, 1.0
      %v2689 = vadd.f32 %v2645, 1.0
      %v2690 = vadd.f32 %v2647, 1.0
      %v2691 = vadd.f32 %v2649, 1.0
      %v2692 = vadd.f32 %v2651, 1.0
      %v2693 = vadd.f32 %v2653, 1.0
      %v2694 = vadd.f32 %v2655, 1.0
      %v2695 = vadd.f32 %v2657, 1.0
      %v2696 = vadd.f32 %v2659, 1.0
      %v2697 = vadd.f32 %v2661, 1.0
      %v2698 = vadd.f32 %v2663, 1.0
      %v2699 = vadd.f32 %v2665, 1.0
      %v2700 = vadd.f32 %v2667, 1.0
      %v2701 = vadd.f32 %v2669, 1.0
      %v2702 = vrcp.pop %v2670
      %v2703 = vmul.f32 1.0, %v2702
      %v2704 = vrcp.pop %v2671
      %v2705 = vmul.f32 1.0, %v2704
      %v2706 = vrcp.pop %v2672
      %v2707 = vmul.f32 1.0, %v2706
      %v2708 = vrcp.pop %v2673
      %v2709 = vmul.f32 1.0, %v2708
      %v2710 = vrcp.pop %v2674
      %v2711 = vmul.f32 1.0, %v2710
      %v2712 = vrcp.pop %v2675
      %v2713 = vmul.f32 1.0, %v2712
      %v2714 = vrcp.pop %v2676
      %v2715 = vmul.f32 1.0, %v2714
      %v2716 = vrcp.pop %v2677
      %v2717 = vmul.f32 1.0, %v2716
      %v2718 = vrcp.pop %v2678
      %v2719 = vmul.f32 1.0, %v2718
      %v2720 = vrcp.pop %v2679
      %v2721 = vmul.f32 1.0, %v2720
      %v2722 = vrcp.pop %v2680
      %v2723 = vmul.f32 1.0, %v2722
      %v2724 = vrcp.pop %v2681
      %v2725 = vmul.f32 1.0, %v2724
      %v2726 = vrcp.pop %v2682
      %v2727 = vmul.f32 1.0, %v2726
      %v2728 = vrcp.pop %v2683
      %v2729 = vmul.f32 1.0, %v2728
      %v2730 = vrcp.pop %v2684
      %v2731 = vmul.f32 1.0, %v2730
      %v2732 = vrcp.pop %v2685
      %v2733 = vmul.f32 1.0, %v2732
      %v2734 = vrcp.pop %v2686
      %v2735 = vmul.f32 1.0, %v2734
      %v2736 = vrcp.pop %v2687
      %v2737 = vmul.f32 1.0, %v2736
      %v2738 = vrcp.pop %v2688
      %v2739 = vmul.f32 1.0, %v2738
      %v2740 = vrcp.pop %v2689
      %v2741 = vmul.f32 1.0, %v2740
      %v2742 = vrcp.pop %v2690
      %v2743 = vmul.f32 1.0, %v2742
      %v2744 = vrcp.pop %v2691
      %v2745 = vmul.f32 1.0, %v2744
      %v2746 = vrcp.pop %v2692
      %v2747 = vmul.f32 1.0, %v2746
      %v2748 = vrcp.pop %v2693
      %v2749 = vmul.f32 1.0, %v2748
      %v2750 = vrcp.pop %v2694
      %v2751 = vmul.f32 1.0, %v2750
      %v2752 = vrcp.pop %v2695
      %v2753 = vmul.f32 1.0, %v2752
      %v2754 = vrcp.pop %v2696
      %v2755 = vmul.f32 1.0, %v2754
      %v2756 = vrcp.pop %v2697
      %v2757 = vmul.f32 1.0, %v2756
      %v2758 = vrcp.pop %v2698
      %v2759 = vmul.f32 1.0, %v2758
      %v2760 = vrcp.pop %v2699
      %v2761 = vmul.f32 1.0, %v2760
      %v2762 = vrcp.pop %v2700
      %v2763 = vmul.f32 1.0, %v2762
      %v2764 = vrcp.pop %v2701
      %v2765 = vmul.f32 1.0, %v2764
      %v2766 = vmul.f32 %v2542, %v2703
      %v2767 = vmul.f32 %v2543, %v2705
      %v2768 = vmul.f32 %v2544, %v2707
      %v2769 = vmul.f32 %v2545, %v2709
      %v2770 = vmul.f32 %v2546, %v2711
      %v2771 = vmul.f32 %v2547, %v2713
      %v2772 = vmul.f32 %v2548, %v2715
      %v2773 = vmul.f32 %v2549, %v2717
      %v2774 = vmul.f32 %v2550, %v2719
      %v2775 = vmul.f32 %v2551, %v2721
      %v2776 = vmul.f32 %v2552, %v2723
      %v2777 = vmul.f32 %v2553, %v2725
      %v2778 = vmul.f32 %v2554, %v2727
      %v2779 = vmul.f32 %v2555, %v2729
      %v2780 = vmul.f32 %v2556, %v2731
      %v2781 = vmul.f32 %v2557, %v2733
      %v2782 = vmul.f32 %v2558, %v2735
      %v2783 = vmul.f32 %v2559, %v2737
      %v2784 = vmul.f32 %v2560, %v2739
      %v2785 = vmul.f32 %v2561, %v2741
      %v2786 = vmul.f32 %v2562, %v2743
      %v2787 = vmul.f32 %v2563, %v2745
      %v2788 = vmul.f32 %v2564, %v2747
      %v2789 = vmul.f32 %v2565, %v2749
      %v2790 = vmul.f32 %v2566, %v2751
      %v2791 = vmul.f32 %v2567, %v2753
      %v2792 = vmul.f32 %v2568, %v2755
      %v2793 = vmul.f32 %v2569, %v2757
      %v2794 = vmul.f32 %v2570, %v2759
      %v2795 = vmul.f32 %v2571, %v2761
      %v2796 = vmul.f32 %v2572, %v2763
      %v2797 = vmul.f32 %v2573, %v2765
      %v2798 = vpack.c.bf16 %v2767, %v2766
      %v2799 = vpack.c.bf16 %v2769, %v2768
      %v2800 = vpack.c.bf16 %v2771, %v2770
      %v2801 = vpack.c.bf16 %v2773, %v2772
      %v2802 = vpack.c.bf16 %v2775, %v2774
      %v2803 = vpack.c.bf16 %v2777, %v2776
      %v2804 = vpack.c.bf16 %v2779, %v2778
      %v2805 = vpack.c.bf16 %v2781, %v2780
      %v2806 = vpack.c.bf16 %v2783, %v2782
      %v2807 = vpack.c.bf16 %v2785, %v2784
      %v2808 = vpack.c.bf16 %v2787, %v2786
      %v2809 = vpack.c.bf16 %v2789, %v2788
      %v2810 = vpack.c.bf16 %v2791, %v2790
      %v2811 = vpack.c.bf16 %v2793, %v2792
      %v2812 = vpack.c.bf16 %v2795, %v2794
      %v2813 = vpack.c.bf16 %v2797, %v2796
      %v2815 = vlaneseq
      %v2816 = vshrl.u32 %v2815, 7
      %v2817 = vsub.s32 0, %v2816
      %v2818 = vrot.slane %v1771, %v2817
      %v2828 = vunpack.c.l.b16 %v1763
      %v2829 = vunpack.c.l.b16 %v1764
      %v2830 = vunpack.c.l.b16 %v1765
      %v2831 = vunpack.c.l.b16 %v1766
      %v2832 = vunpack.c.l.b16 %v1767
      %v2833 = vunpack.c.l.b16 %v1768
      %v2834 = vunpack.c.l.b16 %v1769
      %v2835 = vunpack.c.l.b16 %v1770
      %v2836 = vpack.c.b16 %v2829, %v2828
      %v2837 = vpack.c.b16 %v2831, %v2830
      %v2838 = vpack.c.b16 %v2833, %v2832
      %v2839 = vpack.c.b16 %v2835, %v2834
      %vm2844 = vcmask 523264
      %v2846 = vsel %vm2844, %v2798, 0
      %v2849 = vsel %vm2844, %v2799, 0
      %v2852 = vsel %vm2844, %v2800, 0
      %v2855 = vsel %vm2844, %v2801, 0
      %v2858 = vsel %vm2844, %v2802, 0
      %v2861 = vsel %vm2844, %v2803, 0
      %v2864 = vsel %vm2844, %v2804, 0
      %v2867 = vsel %vm2844, %v2805, 0
      %v2870 = vsel %vm2844, %v2806, 0
      %v2873 = vsel %vm2844, %v2807, 0
      %v2876 = vsel %vm2844, %v2808, 0
      %v2879 = vsel %vm2844, %v2809, 0
      %v2882 = vsel %vm2844, %v2810, 0
      %v2885 = vsel %vm2844, %v2811, 0
      %v2888 = vsel %vm2844, %v2812, 0
      %v2891 = vsel %vm2844, %v2813, 0
      %2893 = vmatprep.subr.bf16.mxu0 0
      %2894 = vmatpush1.bf16.msra.mxu0 %v2836
      %2895 = vmatprep.subr.bf16.mxu0 0
      %2896 = vmatpush1.bf16.msra.mxu0 %v2837
      %2897 = vmatprep.subr.bf16.mxu0 0
      %2898 = vmatpush1.bf16.msra.mxu0 %v2838
      %2899 = vmatprep.subr.bf16.mxu0 0
      %2900 = vmatpush1.bf16.msra.mxu0 %v2839
      %2901 = vmatprep.subr.bf16.mxu0 0
      %2902 = vmatpush1.bf16.msra.mxu0 0
      %2903 = vmatprep.subr.bf16.mxu0 0
      %2904 = vmatpush1.bf16.msra.mxu0 0
      %2905 = vmatprep.subr.bf16.mxu0 0
      %2906 = vmatpush1.bf16.msra.mxu0 0
      %2907 = vmatprep.subr.bf16.mxu0 0
      %2908 = vmatpush1.bf16.msra.mxu0 0
      %2909 = vmatprep.subr.bf16.mxu0 0
      %2910 = vmatpush1.bf16.msra.mxu0 0
      %2911 = vmatprep.subr.bf16.mxu0 0
      %2912 = vmatpush1.bf16.msra.mxu0 0
      %2913 = vmatprep.subr.bf16.mxu0 0
      %2914 = vmatpush1.bf16.msra.mxu0 0
      %2915 = vmatprep.subr.bf16.mxu0 0
      %2916 = vmatpush1.bf16.msra.mxu0 0
      %2917 = vmatprep.subr.bf16.mxu0 0
      %2918 = vmatpush1.bf16.msra.mxu0 0
      %2919 = vmatprep.subr.bf16.mxu0 0
      %2920 = vmatpush1.bf16.msra.mxu0 0
      %2921 = vmatprep.subr.bf16.mxu0 0
      %2922 = vmatpush1.bf16.msra.mxu0 0
      %2923 = vmatprep.subr.bf16.mxu0 0
      %2924 = vmatpush1.bf16.msra.mxu0 0
      %2925 = vmatprep.mubr.bf16.mxu0 0
      %2926 = vmatmul.mubr.bf16.gmra.mrb[0].mxu0 %v2846
      %v2927 = vpop.f32.mrb[0].mxu0
      %v2928 = vadd.f32 %v2818, %v2927
      %v2929 = vpop.f32.mrb[0].mxu0
      %v2930 = vpop.f32.mrb[0].mxu0
      %v2931 = vadd.f32 %v2818, %v2930
      %v2932 = vpop.f32.mrb[0].mxu0
      %2933 = vmatprep.mubr.bf16.mxu0 0
      %2934 = vmatmul.mubr.bf16.gmra.mrb[0].mxu0 %v2849
      %v2935 = vpop.f32.mrb[0].mxu0
      %v2936 = vadd.f32 %v2818, %v2935
      %v2937 = vpop.f32.mrb[0].mxu0
      %v2938 = vpop.f32.mrb[0].mxu0
      %v2939 = vadd.f32 %v2818, %v2938
      %v2940 = vpop.f32.mrb[0].mxu0
      %2941 = vmatprep.mubr.bf16.mxu0 0
      %2942 = vmatmul.mubr.bf16.gmra.mrb[0].mxu0 %v2852
      %v2943 = vpop.f32.mrb[0].mxu0
      %v2944 = vadd.f32 %v2818, %v2943
      %v2945 = vpop.f32.mrb[0].mxu0
      %v2946 = vpop.f32.mrb[0].mxu0
      %v2947 = vadd.f32 %v2818, %v2946
      %v2948 = vpop.f32.mrb[0].mxu0
      %2949 = vmatprep.mubr.bf16.mxu0 0
      %2950 = vmatmul.mubr.bf16.gmra.mrb[0].mxu0 %v2855
      %v2951 = vpop.f32.mrb[0].mxu0
      %v2952 = vadd.f32 %v2818, %v2951
      %v2953 = vpop.f32.mrb[0].mxu0
      %v2954 = vpop.f32.mrb[0].mxu0
      %v2955 = vadd.f32 %v2818, %v2954
      %v2956 = vpop.f32.mrb[0].mxu0
      %2957 = vmatprep.mubr.bf16.mxu0 0
      %2958 = vmatmul.mubr.bf16.gmra.mrb[0].mxu0 %v2858
      %v2959 = vpop.f32.mrb[0].mxu0
      %v2960 = vadd.f32 %v2818, %v2959
      %v2961 = vpop.f32.mrb[0].mxu0
      %v2962 = vpop.f32.mrb[0].mxu0
      %v2963 = vadd.f32 %v2818, %v2962
      %v2964 = vpop.f32.mrb[0].mxu0
      %2965 = vmatprep.mubr.bf16.mxu0 0
      %2966 = vmatmul.mubr.bf16.gmra.mrb[0].mxu0 %v2861
      %v2967 = vpop.f32.mrb[0].mxu0
      %v2968 = vadd.f32 %v2818, %v2967
      %v2969 = vpop.f32.mrb[0].mxu0
      %v2970 = vpop.f32.mrb[0].mxu0
      %v2971 = vadd.f32 %v2818, %v2970
      %v2972 = vpop.f32.mrb[0].mxu0
      %2973 = vmatprep.mubr.bf16.mxu0 0
      %2974 = vmatmul.mubr.bf16.gmra.mrb[0].mxu0 %v2864
      %v2975 = vpop.f32.mrb[0].mxu0
      %v2976 = vadd.f32 %v2818, %v2975
      %v2977 = vpop.f32.mrb[0].mxu0
      %v2978 = vpop.f32.mrb[0].mxu0
      %v2979 = vadd.f32 %v2818, %v2978
      %v2980 = vpop.f32.mrb[0].mxu0
      %2981 = vmatprep.mubr.bf16.mxu0 0
      %2982 = vmatmul.mubr.bf16.gmra.mrb[0].mxu0 %v2867
      %v2983 = vpop.f32.mrb[0].mxu0
      %v2984 = vadd.f32 %v2818, %v2983
      %v2985 = vpop.f32.mrb[0].mxu0
      %v2986 = vpop.f32.mrb[0].mxu0
      %v2987 = vadd.f32 %v2818, %v2986
      %v2988 = vpop.f32.mrb[0].mxu0
      %2989 = vmatprep.mubr.bf16.mxu0 0
      %2990 = vmatmul.mubr.bf16.gmra.mrb[0].mxu0 %v2870
      %v2991 = vpop.f32.mrb[0].mxu0
      %v2992 = vadd.f32 %v2818, %v2991
      %v2993 = vpop.f32.mrb[0].mxu0
      %v2994 = vpop.f32.mrb[0].mxu0
      %v2995 = vadd.f32 %v2818, %v2994
      %v2996 = vpop.f32.mrb[0].mxu0
      %2997 = vmatprep.mubr.bf16.mxu0 0
      %2998 = vmatmul.mubr.bf16.gmra.mrb[0].mxu0 %v2873
      %v2999 = vpop.f32.mrb[0].mxu0
      %v3000 = vadd.f32 %v2818, %v2999
      %v3001 = vpop.f32.mrb[0].mxu0
      %v3002 = vpop.f32.mrb[0].mxu0
      %v3003 = vadd.f32 %v2818, %v3002
      %v3004 = vpop.f32.mrb[0].mxu0
      %3005 = vmatprep.mubr.bf16.mxu0 0
      %3006 = vmatmul.mubr.bf16.gmra.mrb[0].mxu0 %v2876
      %v3007 = vpop.f32.mrb[0].mxu0
      %v3008 = vadd.f32 %v2818, %v3007
      %v3009 = vpop.f32.mrb[0].mxu0
      %v3010 = vpop.f32.mrb[0].mxu0
      %v3011 = vadd.f32 %v2818, %v3010
      %v3012 = vpop.f32.mrb[0].mxu0
      %3013 = vmatprep.mubr.bf16.mxu0 0
      %3014 = vmatmul.mubr.bf16.gmra.mrb[0].mxu0 %v2879
      %v3015 = vpop.f32.mrb[0].mxu0
      %v3016 = vadd.f32 %v2818, %v3015
      %v3017 = vpop.f32.mrb[0].mxu0
      %v3018 = vpop.f32.mrb[0].mxu0
      %v3019 = vadd.f32 %v2818, %v3018
      %v3020 = vpop.f32.mrb[0].mxu0
      %3021 = vmatprep.mubr.bf16.mxu0 0
      %3022 = vmatmul.mubr.bf16.gmra.mrb[0].mxu0 %v2882
      %v3023 = vpop.f32.mrb[0].mxu0
      %v3024 = vadd.f32 %v2818, %v3023
      %v3025 = vpop.f32.mrb[0].mxu0
      %v3026 = vpop.f32.mrb[0].mxu0
      %v3027 = vadd.f32 %v2818, %v3026
      %v3028 = vpop.f32.mrb[0].mxu0
      %3029 = vmatprep.mubr.bf16.mxu0 0
      %3030 = vmatmul.mubr.bf16.gmra.mrb[0].mxu0 %v2885
      %v3031 = vpop.f32.mrb[0].mxu0
      %v3032 = vadd.f32 %v2818, %v3031
      %v3033 = vpop.f32.mrb[0].mxu0
      %v3034 = vpop.f32.mrb[0].mxu0
      %v3035 = vadd.f32 %v2818, %v3034
      %v3036 = vpop.f32.mrb[0].mxu0
      %3037 = vmatprep.mubr.bf16.mxu0 0
      %3038 = vmatmul.mubr.bf16.gmra.mrb[0].mxu0 %v2888
      %v3039 = vpop.f32.mrb[0].mxu0
      %v3040 = vadd.f32 %v2818, %v3039
      %v3041 = vpop.f32.mrb[0].mxu0
      %v3042 = vpop.f32.mrb[0].mxu0
      %v3043 = vadd.f32 %v2818, %v3042
      %v3044 = vpop.f32.mrb[0].mxu0
      %3045 = vmatprep.mubr.bf16.mxu0 0
      %3046 = vmatmul.mubr.bf16.gmra.mrb[0].mxu0 %v2891
      %v3047 = vpop.f32.mrb[0].mxu0
      %v3048 = vadd.f32 %v2818, %v3047
      %v3049 = vpop.f32.mrb[0].mxu0
      %v3050 = vpop.f32.mrb[0].mxu0
      %v3051 = vadd.f32 %v2818, %v3050
      %v3052 = vpop.f32.mrb[0].mxu0
      %3053 = vdwg.mxu0
      %3054 = vst.msk [vmem:[%s442] sm:$0xff] %vm1794, %v2928
      %3055 = vst.msk [vmem:[%s442 + $0x8] sm:$0xff] %vm1794, %v2931
      %3056 = vst.msk [vmem:[%s442 + $0x10] sm:$0xff] %vm1794, %v2936
      %3057 = vst.msk [vmem:[%s442 + $0x18] sm:$0xff] %vm1794, %v2939
      %3058 = vst.msk [vmem:[%s442 + $0x20] sm:$0xff] %vm1794, %v2944
      %3059 = vst.msk [vmem:[%s442 + $0x28] sm:$0xff] %vm1794, %v2947
      %3060 = vst.msk [vmem:[%s442 + $0x30] sm:$0xff] %vm1794, %v2952
      %3061 = vst.msk [vmem:[%s442 + $0x38] sm:$0xff] %vm1794, %v2955
      %3062 = vst.msk [vmem:[%s442 + $0x40] sm:$0xff] %vm1794, %v2960
      %3063 = vst.msk [vmem:[%s442 + $0x48] sm:$0xff] %vm1794, %v2963
      %3064 = vst.msk [vmem:[%s442 + $0x50] sm:$0xff] %vm1794, %v2968
      %3065 = vst.msk [vmem:[%s442 + $0x58] sm:$0xff] %vm1794, %v2971
      %3066 = vst.msk [vmem:[%s442 + $0x60] sm:$0xff] %vm1794, %v2976
      %3067 = vst.msk [vmem:[%s442 + $0x68] sm:$0xff] %vm1794, %v2979
      %3068 = vst.msk [vmem:[%s442 + $0x70] sm:$0xff] %vm1794, %v2984
      %3069 = vst.msk [vmem:[%s442 + $0x78] sm:$0xff] %vm1794, %v2987
      %3070 = vst.msk [vmem:[%s442 + $0x80] sm:$0xff] %vm1794, %v2992
      %3071 = vst.msk [vmem:[%s442 + $0x88] sm:$0xff] %vm1794, %v2995
      %3072 = vst.msk [vmem:[%s442 + $0x90] sm:$0xff] %vm1794, %v3000
      %3073 = vst.msk [vmem:[%s442 + $0x98] sm:$0xff] %vm1794, %v3003
      %3074 = vst.msk [vmem:[%s442 + $0xa0] sm:$0xff] %vm1794, %v3008
      %3075 = vst.msk [vmem:[%s442 + $0xa8] sm:$0xff] %vm1794, %v3011
      %3076 = vst.msk [vmem:[%s442 + $0xb0] sm:$0xff] %vm1794, %v3016
      %3077 = vst.msk [vmem:[%s442 + $0xb8] sm:$0xff] %vm1794, %v3019
      %3078 = vst.msk [vmem:[%s442 + $0xc0] sm:$0xff] %vm1794, %v3024
      %3079 = vst.msk [vmem:[%s442 + $0xc8] sm:$0xff] %vm1794, %v3027
      %3080 = vst.msk [vmem:[%s442 + $0xd0] sm:$0xff] %vm1794, %v3032
      %3081 = vst.msk [vmem:[%s442 + $0xd8] sm:$0xff] %vm1794, %v3035
      %3082 = vst.msk [vmem:[%s442 + $0xe0] sm:$0xff] %vm1794, %v3040
      %3083 = vst.msk [vmem:[%s442 + $0xe8] sm:$0xff] %vm1794, %v3043
      %3084 = vst.msk [vmem:[%s442 + $0xf0] sm:$0xff] %vm1794, %v3048
      %3085 = vst.msk [vmem:[%s442 + $0xf8] sm:$0xff] %vm1794, %v3051
      %s3086 = smul.u32 32, %s24
      %p3087 = scmp.lt.s32.totalorder %s3086, 63
      %s3088 = scalar_select %p3087, %s3086, 63
      %s3089 = smul.addr %s3088, 8
      %s3090 = scalar_lea.vmem %s13, %s3089
      // Predicated region
      $region73: #{multi_stream_vit.1} parent=71 // pred_check
        %p3091 = pneg %p320
      $region74: #{multi_stream_vit.1} parent=71 // pred_check_branch
        %3093 = sbr.rel (%p3091) target = $region76
      $region75: #{multi_stream_vit.1} parent=71 // pred_region
        %s3094 = smul.u32 32, %s24
      $region76: #{multi_stream_vit.1} parent=71 // pred_fallthru
        _
    $region72: #{multi_stream_vit.1} parent=5 // pred_fallthru
      _
    %p3095 = scmp.le.s32.totalorder 2, %s19
    // Predicated region
    $region77: #{multi_stream_vit.1} parent=5 // pred_check
      %p3096 = pneg %p3095
    $region78: #{multi_stream_vit.1} parent=5 // pred_check_branch
      %3098 = sbr.rel (%p3096) target = $region80
    $region79: #{multi_stream_vit.1} parent=5 // pred_region
      %s3099 = ssub.s32 %s19, 2
      // Predicated region
      $region81: #{multi_stream_vit.1} parent=79 // pred_check
        %p3100 = pneg %p326
      $region82: #{multi_stream_vit.1} parent=79 // pred_check_branch
        %3102 = sbr.rel (%p3100) target = $region84
      $region83: #{multi_stream_vit.1} parent=79 // pred_region
        %s3103 = smul.u32 32, %s25
        %p3104 = scmp.lt.s32.totalorder %s3103, 63
        %s3105 = scalar_select %p3104, %s3103, 63
        %s3106 = smul.addr %s3105, 8
        %s3107 = scalar_lea.vmem %s13, %s3106
      $region84: #{multi_stream_vit.1} parent=79 // pred_fallthru
        _
    $region80: #{multi_stream_vit.1} parent=5 // pred_fallthru
      _
  $region6: #{multi_stream_vit.1} parent=0 // loop_footer
    %s23 = sadd.s32 1, %s19
  $region7: #{multi_stream_vit.1} parent=0 // loop_footer_branch
    %18 = sbr.rel target = $region3
  $region8: #{multi_stream_vit.1} parent=0 // loop_exit
    _

</llo_original>
